<compile_context>
chip_gen: v7x
topology: tpu7x:2x2x1
jax: 0.10.0
libtpu: 0.0.40
codegen_flags: <defaults>
</compile_context>

<pallas_src>
import math
import functools

import numpy as np

import jax
import jax.numpy as jnp
from jax import lax
from jax.experimental import pallas as pl
from jax.experimental.pallas import tpu as pltpu

_BN_EPS = 1e-5


# ------------------------------ kernel helpers -------------------------------

def _mix(w, x):
    """1x1 conv / channel mix on the VPU: w (Co, Ci) @ x (Ci, N) -> (Co, N).

    Channel counts are 2-4, so this stays on the VPU as Ci broadcast-FMAs of
    full lane-width rows (exact f32) instead of wasting an MXU pass.
    """
    acc = x[0:1, :] * w[:, 0:1]
    for c in range(1, x.shape[0]):
        acc = acc + x[c:c + 1, :] * w[:, c:c + 1]
    return acc


# ---------------------------------- kernels -----------------------------------

def _ffc_spatial_kernel(xlp_ref, xgp_ref, taps_ref,
                        wll_ref, wgl_ref, wlg_ref, wst1_ref,
                        shl_ref, shst1_ref,
                        oxl_ref, oc_ref, oy1_ref, *, H, W, B):
    """Spatial (3x3 depthwise-separable) part of one FFC_BN_ACT1 block.

    Inputs are lane-dense (B*C, H*W) rows; xlp/xgp carry a flat zero extension
    of W+1 lanes on both sides so the nine 3x3 taps are plain shifted reads.

    Outputs:
      oxl : relu(bn_l(convl2l(x_l) + convg2l(x_g)))                (B*Cl, H*W)
      oc  : bn_g.scale * convl2g(x_l)  (pre-shift / pre-ReLU)      (B*Cg, H*W)
      oy1 : interior of SpectralTransform conv1 = relu(bn(pw(dw(x_g))))
    """
    HW = H * W
    P = W + 1                                   # wrapper-side flat zero pad
    R = xlp_ref.shape[0]
    Cl = R // B
    Cg = xgp_ref.shape[0] // B
    Co_l = wll_ref.shape[0]
    Co_g = wlg_ref.shape[0]
    Cst = wst1_ref.shape[0]

    xlp = xlp_ref[...]
    xgp = xgp_ref[...]
    xg = xgp[:, P:P + HW]                       # unpadded x_g

    # column index of every lane (W is a power of two)
    col = jnp.bitwise_and(lax.broadcasted_iota(jnp.int32, (R, HW), 1), W - 1)
    m_l = col >= 1                              # valid when dx == -1
    m_r = col <= W - 2                          # valid when dx == +1

    acc_ll = jnp.zeros((R, HW), jnp.float32)
    acc_gl = jnp.zeros((R, HW), jnp.float32)
    acc_lg = jnp.zeros((R, HW), jnp.float32)
    for ky in range(3):
        for kx in range(3):
            t = ky * 3 + kx
            dy, dx = ky - 1, kx - 1
            s = dy * W + dx
            sl = xlp[:, P + s:P + s + HW]
            sg = xgp[:, P + s:P + s + HW]
            if dx == -1:
                sl = jnp.where(m_l, sl, 0.0)
                sg = jnp.where(m_l, sg, 0.0)
            elif dx == 1:
                sl = jnp.where(m_r, sl, 0.0)
                sg = jnp.where(m_r, sg, 0.0)
            acc_ll = acc_ll + sl * taps_ref[t]        # convl2l depthwise
            acc_gl = acc_gl + sg * taps_ref[9 + t]    # convg2l depthwise
            acc_lg = acc_lg + sl * taps_ref[18 + t]   # convl2g depthwise

    wll = wll_ref[...]
    wgl = wgl_ref[...]
    wlg = wlg_ref[...]
    wst1 = wst1_ref[...]
    shl = shl_ref[...]
    shst1 = shst1_ref[...]

    for b in range(B):
        ll = acc_ll[b * Cl:(b + 1) * Cl, :]
        gl = acc_gl[b * Cg:(b + 1) * Cg, :]
        lg = acc_lg[b * Cl:(b + 1) * Cl, :]
        xgb = xg[b * Cg:(b + 1) * Cg, :]
        oxl_ref[b * Co_l:(b + 1) * Co_l, :] = jnp.maximum(
            _mix(wll, ll) + _mix(wgl, gl) + shl, 0.0)
        oc_ref[b * Co_g:(b + 1) * Co_g, :] = _mix(wlg, lg)
        oy1_ref[b * Cst:(b + 1) * Cst, :] = jnp.maximum(
            _mix(wst1, xgb) + shst1, 0.0)


def _freq_pointwise_kernel(x_ref, w_ref, sh_ref, o_ref, *, B):
    """FourierUnit1 conv_layer (1x1 DWSep) + folded BN + ReLU on stacked
    (real, imag) frequency channels."""
    co, ci = w_ref.shape
    x = x_ref[...]
    w = w_ref[...]
    sh = sh_ref[...]
    for b in range(B):
        o_ref[b * co:(b + 1) * co, :] = jnp.maximum(
            _mix(w, x[b * ci:(b + 1) * ci, :]) + sh, 0.0)


def _global_combine_kernel(s_ref, c_ref, w_ref, sh_ref, o_ref, *, B):
    """SpectralTransform conv2 (on the shifted/cropped map) + convl2g add +
    folded bn_g + ReLU -> the global-branch output of one FFC block."""
    co, ci = w_ref.shape
    s = s_ref[...]
    c = c_ref[...]
    w = w_ref[...]
    sh = sh_ref[...]
    for b in range(B):
        o_ref[b * co:(b + 1) * co, :] = jnp.maximum(
            _mix(w, s[b * ci:(b + 1) * ci, :]) + c[b * co:(b + 1) * co, :] + sh,
            0.0)


# ------------------------------ pallas_call glue ------------------------------

def _full_spec(shape):
    nd = len(shape)
    return pl.BlockSpec(shape, lambda i: (0,) * nd)


def _vmem_call(kernel, out_shapes, *inputs):
    """Single-grid-step pallas_call with whole (small) arrays resident in VMEM."""
    multi = isinstance(out_shapes, list)
    shapes = out_shapes if multi else [out_shapes]
    out = pl.pallas_call(
        kernel,
        out_shape=[jax.ShapeDtypeStruct(s, jnp.float32) for s in shapes],
        grid=(1,),
        in_specs=[_full_spec(a.shape) for a in inputs],
        out_specs=[_full_spec(s) for s in shapes],
        compiler_params=pltpu.CompilerParams(
            dimension_semantics=("arbitrary",)),
    )(*inputs)
    return out if multi else out[0]


# --------------------------- parameter folding --------------------------------

def _bn_fold(bn):
    gamma, beta, mean, var = bn
    scale = gamma / jnp.sqrt(var + _BN_EPS)
    return scale, beta - mean * scale


def _fold_block(bp, B):
    """Fold BatchNorms into the pointwise weights; tile depthwise taps per row."""
    sl, shl = _bn_fold(bp["bn_l"])
    sg, shg = _bn_fold(bp["bn_g"])
    s1, sh1 = _bn_fold(bp["bn_st1"])
    sfu, shfu = _bn_fold(bp["bn_fu"])

    def taprows(dw):                          # (C, 3, 3) -> (9, B*C, 1)
        t = dw.reshape(dw.shape[0], 9).T
        return jnp.tile(t, (1, B))[:, :, None]

    taps = jnp.concatenate(
        [taprows(bp["dw_l2l"]), taprows(bp["dw_g2l"]), taprows(bp["dw_l2g"])],
        axis=0)                               # (27, B*C, 1)

    return dict(
        taps=taps,
        w_ll=sl[:, None] * bp["pw_l2l"],
        w_gl=sl[:, None] * bp["pw_g2l"],
        w_lg=sg[:, None] * bp["pw_l2g"],                         # bn_g scale folded
        w_st1=s1[:, None] * (bp["pw_st1"] * bp["dw_st1"][None, :]),
        w_fu=sfu[:, None] * (bp["pw_fu"] * bp["dw_fu"][None, :]),
        w_st2=sg[:, None] * (bp["pw_st2"] * bp["dw_st2"][None, :]),
        sh_l=shl[:, None],
        sh_g=shg[:, None],
        sh_st1=sh1[:, None],
        sh_fu=shfu[:, None],
        border_st1=jax.nn.relu(sh1),
    )


# --------------------------- FFC_BN_ACT1 (one block) --------------------------

def _ffc_bn_act_block(xl, xg, fp, H, W):
    """One FFC_BN_ACT1 block: (x_l, x_g) -> (x_l', x_g')."""
    B, Cl = xl.shape[0], xl.shape[1]
    Cg = xg.shape[1]
    HW = H * W
    P = W + 1
    Co_l = fp["w_ll"].shape[0]
    Co_g = fp["w_lg"].shape[0]
    Cst = fp["w_st1"].shape[0]

    xl_pf = jnp.pad(xl.reshape(B * Cl, HW), ((0, 0), (P, P)))
    xg_pf = jnp.pad(xg.reshape(B * Cg, HW), ((0, 0), (P, P)))

    out_xl_f, c_f, y1_f = _vmem_call(
        functools.partial(_ffc_spatial_kernel, H=H, W=W, B=B),
        [(B * Co_l, HW), (B * Co_g, HW), (B * Cst, HW)],
        xl_pf, xg_pf, fp["taps"],
        fp["w_ll"], fp["w_gl"], fp["w_lg"], fp["w_st1"],
        fp["sh_l"], fp["sh_st1"])

    # ---------------- convg2g = SpectralTransform1 (global branch) ------------
    Hp, Wp = H + 2, W + 2                     # conv1 has kernel_size=1, padding=1
    Wf = Wp // 2 + 1
    y1_int = y1_f.reshape(B, Cst, H, W)
    # the zero-padded ring becomes relu(bn shift) after BN + ReLU
    y1 = jnp.broadcast_to(fp["border_st1"][None, :, None, None],
                          (B, Cst, Hp, Wp))
    y1 = y1.at[:, :, 1:H + 1, 1:W + 1].set(y1_int)

    # TODO(synk): rfft2 / irfft2 have no Pallas TPU primitive; they stay in XLA.
    fr = jnp.fft.rfft2(y1, norm="ortho")                           # (B,Cst,Hp,Wf)
    ff = jnp.stack((fr.real, fr.imag), axis=2).reshape(B * 2 * Cst, Hp * Wf)

    z_f = _vmem_call(functools.partial(_freq_pointwise_kernel, B=B),
                     (B * 2 * Cst, Hp * Wf),
                     ff, fp["w_fu"], fp["sh_fu"])

    z = z_f.reshape(B, Cst, 2, Hp, Wf)
    fu_out = jnp.fft.irfft2(z[:, :, 0] + 1j * z[:, :, 1], s=(Hp, Wp),
                            norm="ortho")
    s = y1 + fu_out                                                # (B,Cst,Hp,Wp)

    # conv2 (1x1, padding=1) followed by the hard-coded [:, :, :32, :32] crop
    # == a 1x1 conv of s shifted down/right by one pixel with a zero first
    # row / column.
    s_shift = jnp.pad(s[:, :, :H - 1, :W - 1],
                      ((0, 0), (0, 0), (1, 0), (1, 0)))
    s_shift_f = s_shift.reshape(B * Cst, HW)

    xg_out_f = _vmem_call(functools.partial(_global_combine_kernel, B=B),
                          (B * Co_g, HW),
                          s_shift_f, c_f, fp["w_st2"], fp["sh_g"])

    return (out_xl_f.reshape(B, Co_l, H, W),
            xg_out_f.reshape(B, Co_g, H, W))


# ------------------------------ public wrapper ---------------------------------

def ffc_resnet_block1(x, params):
    """FFCResnetBlock1 forward (inline=True split, outline=True concat), NCHW."""
    B, dim, H, W = x.shape
    assert H == 32 and W == 32, (
        "FFC1's hard-coded [:, :, :32, :32] crop requires 32x32 feature maps")
    cg = dim // 2                              # ratio_gin = ratio_gout = 0.5
    xl, xg = x[:, :dim - cg], x[:, dim - cg:]
    id_l, id_g = xl, xg
    for name in ("block1", "block2"):
        fp = _fold_block(params[name], B)
        xl, xg = _ffc_bn_act_block(xl, xg, fp, H, W)
    return jnp.concatenate([id_l + xl, id_g + xg], axis=1)


# ------------------------------ pure-JAX reference ------------------------------

def _bn_ref(x, bn):
    scale, shift = _bn_fold(bn)
    return x * scale[None, :, None, None] + shift[None, :, None, None]


def _dwsep3x3_ref(x, dw, pw):
    dn = ("NCHW", "OIHW", "NCHW")
    C = dw.shape[0]
    y = lax.conv_general_dilated(x, dw[:, None, :, :], (1, 1), ((1, 1), (1, 1)),
                                 dimension_numbers=dn, feature_group_count=C,
                                 precision=lax.Precision.HIGHEST)
    return lax.conv_general_dilated(y, pw[:, :, None, None], (1, 1),
                                    ((0, 0), (0, 0)), dimension_numbers=dn,
                                    precision=lax.Precision.HIGHEST)


def _dwsep1x1_ref(x, dw_scale, pw, pad):
    y = x * dw_scale[None, :, None, None]
    if pad:
        y = jnp.pad(y, ((0, 0), (0, 0), (pad, pad), (pad, pad)))
    return jnp.einsum("oc,bchw->bohw", pw, y, precision=lax.Precision.HIGHEST)


def _fourier_unit_ref(y, dw_fu, pw_fu, bn_fu):
    B, C, H, W = y.shape
    fr = jnp.fft.rfft2(y, norm="ortho")
    ff = jnp.stack((fr.real, fr.imag), axis=2).reshape(B, 2 * C, H, W // 2 + 1)
    z = jax.nn.relu(_bn_ref(_dwsep1x1_ref(ff, dw_fu, pw_fu, 0), bn_fu))
    z = z.reshape(B, C, 2, H, W // 2 + 1)
    return jnp.fft.irfft2(z[:, :, 0] + 1j * z[:, :, 1], s=(H, W), norm="ortho")


def _spectral_transform_ref(xg, bp):
    y = jax.nn.relu(_bn_ref(_dwsep1x1_ref(xg, bp["dw_st1"], bp["pw_st1"], 1),
                            bp["bn_st1"]))
    fu = _fourier_unit_ref(y, bp["dw_fu"], bp["pw_fu"], bp["bn_fu"])
    return _dwsep1x1_ref(y + fu, bp["dw_st2"], bp["pw_st2"], 1)


def _ffc_block_ref(xl, xg, bp):
    out_l = (_dwsep3x3_ref(xl, bp["dw_l2l"], bp["pw_l2l"]) +
             _dwsep3x3_ref(xg, bp["dw_g2l"], bp["pw_g2l"]))
    out_g = (_dwsep3x3_ref(xl, bp["dw_l2g"], bp["pw_l2g"]) +
             _spectral_transform_ref(xg, bp)[:, :, :32, :32])
    return (jax.nn.relu(_bn_ref(out_l, bp["bn_l"])),
            jax.nn.relu(_bn_ref(out_g, bp["bn_g"])))


def ref_forward(x, params):
    dim = x.shape[1]
    cg = dim // 2
    xl, xg = x[:, :dim - cg], x[:, dim - cg:]
    id_l, id_g = xl, xg
    for name in ("block1", "block2"):
        xl, xg = _ffc_block_ref(xl, xg, params[name])
    return jnp.concatenate([id_l + xl, id_g + xg], axis=1)


# ---------------------- deterministic parameter init ----------------------------

def init_block_params(key, cl=4, cg=4):
    ks = jax.random.split(key, 16)

    def u(k, shape, fan_in):
        b = 1.0 / math.sqrt(fan_in)
        return jax.random.uniform(k, shape, jnp.float32, -b, b)

    def bn(k, c):
        k1, k2, k3, k4 = jax.random.split(k, 4)
        return (jax.random.uniform(k1, (c,), jnp.float32, 0.5, 1.5),
                0.1 * jax.random.normal(k2, (c,), jnp.float32),
                0.1 * jax.random.normal(k3, (c,), jnp.float32),
                jax.random.uniform(k4, (c,), jnp.float32, 0.5, 1.5))

    co_l, co_g, cst = cl, cg, cg // 2
    return dict(
        dw_l2l=u(ks[0], (cl, 3, 3), 9), pw_l2l=u(ks[1], (co_l, cl), cl),
        dw_g2l=u(ks[2], (cg, 3, 3), 9), pw_g2l=u(ks[3], (co_l, cg), cg),
        dw_l2g=u(ks[4], (cl, 3, 3), 9), pw_l2g=u(ks[5], (co_g, cl), cl),
        bn_l=bn(ks[6], co_l), bn_g=bn(ks[7], co_g),
        dw_st1=u(ks[8], (cg,), 1), pw_st1=u(ks[9], (cst, cg), cg),
        bn_st1=bn(ks[10], cst),
        dw_fu=u(ks[11], (2 * cst,), 1),
        pw_fu=u(ks[12], (2 * cst, 2 * cst), 2 * cst),
        bn_fu=bn(ks[13], 2 * cst),
        dw_st2=u(ks[14], (cst,), 1), pw_st2=u(ks[15], (co_g, cst), cst),
    )


# -------------------------------------- main ------------------------------------

if __name__ == "__main__":
    key = jax.random.PRNGKey(0)
    kx, k1, k2 = jax.random.split(key, 3)

    B, dim, H, W = 2, 8, 32, 32
    x = jax.random.normal(kx, (B, dim, H, W), jnp.float32)
    params = {"block1": init_block_params(k1), "block2": init_block_params(k2)}

    out = jax.block_until_ready(jax.jit(ffc_resnet_block1)(x, params))
    ref = jax.block_until_ready(ref_forward(x, params))

    np.testing.assert_allclose(np.asarray(out), np.asarray(ref),
                               rtol=5e-4, atol=5e-4)
    print("KERNEL_OK")
</pallas_src>

<mosaic_0001>
module attributes {stable_mosaic.version = 11 : i64} {
  func.func @_ffc_spatial_kernel(%arg0: i32, %arg1: memref<8x1090xf32, #tpu.memory_space<vmem>>, %arg2: memref<8x1090xf32, #tpu.memory_space<vmem>>, %arg3: memref<27x8x1xf32, #tpu.memory_space<vmem>>, %arg4: memref<4x4xf32, #tpu.memory_space<vmem>>, %arg5: memref<4x4xf32, #tpu.memory_space<vmem>>, %arg6: memref<4x4xf32, #tpu.memory_space<vmem>>, %arg7: memref<2x4xf32, #tpu.memory_space<vmem>>, %arg8: memref<4x1xf32, #tpu.memory_space<vmem>>, %arg9: memref<2x1xf32, #tpu.memory_space<vmem>>, %arg10: memref<8x1024xf32, #tpu.memory_space<vmem>>, %arg11: memref<8x1024xf32, #tpu.memory_space<vmem>>, %arg12: memref<4x1024xf32, #tpu.memory_space<vmem>>) attributes {dimension_semantics = [#tpu.dimension_semantics<arbitrary>], iteration_bounds = array<i64: 1>, scalar_prefetch = 0 : i64, scratch_operands = 0 : i64, tpu.core_type = #tpu.core_type<tc>, window_params = [{pipeline_mode = #tpu.pipeline_mode<synchronous>, transform_indices = @transform_0, window_bounds = array<i64: 8, 1090>}, {pipeline_mode = #tpu.pipeline_mode<synchronous>, transform_indices = @transform_1, window_bounds = array<i64: 8, 1090>}, {pipeline_mode = #tpu.pipeline_mode<synchronous>, transform_indices = @transform_2, window_bounds = array<i64: 27, 8, 1>}, {pipeline_mode = #tpu.pipeline_mode<synchronous>, transform_indices = @transform_3, window_bounds = array<i64: 4, 4>}, {pipeline_mode = #tpu.pipeline_mode<synchronous>, transform_indices = @transform_4, window_bounds = array<i64: 4, 4>}, {pipeline_mode = #tpu.pipeline_mode<synchronous>, transform_indices = @transform_5, window_bounds = array<i64: 4, 4>}, {pipeline_mode = #tpu.pipeline_mode<synchronous>, transform_indices = @transform_6, window_bounds = array<i64: 2, 4>}, {pipeline_mode = #tpu.pipeline_mode<synchronous>, transform_indices = @transform_7, window_bounds = array<i64: 4, 1>}, {pipeline_mode = #tpu.pipeline_mode<synchronous>, transform_indices = @transform_8, window_bounds = array<i64: 2, 1>}, {pipeline_mode = #tpu.pipeline_mode<synchronous>, transform_indices = @transform_9, window_bounds = array<i64: 8, 1024>}, {pipeline_mode = #tpu.pipeline_mode<synchronous>, transform_indices = @transform_10, window_bounds = array<i64: 8, 1024>}, {pipeline_mode = #tpu.pipeline_mode<synchronous>, transform_indices = @transform_11, window_bounds = array<i64: 4, 1024>}]} {
    %c0 = arith.constant 0 : index
    %c0_0 = arith.constant 0 : index
    %0 = vector.load %arg1[%c0, %c0_0] : memref<8x1090xf32, #tpu.memory_space<vmem>>, vector<8x1090xf32>
    %c0_1 = arith.constant 0 : index
    %c0_2 = arith.constant 0 : index
    %1 = vector.load %arg2[%c0_1, %c0_2] : memref<8x1090xf32, #tpu.memory_space<vmem>>, vector<8x1090xf32>
    %2 = vector.extract_strided_slice %1 {offsets = [0, 33], sizes = [8, 1024], strides = [1, 1]} : vector<8x1090xf32> to vector<8x1024xf32>
    %3 = tpu.iota {dimensions = array<i32: 1>} : vector<8x1024xi32>
    %c31_i32 = arith.constant 31 : i32
    %4 = vector.broadcast %c31_i32 : i32 to vector<8x1024xi32>
    %5 = arith.andi %3, %4 : vector<8x1024xi32>
    %c1_i32 = arith.constant 1 : i32
    %6 = vector.broadcast %c1_i32 : i32 to vector<8x1024xi32>
    %7 = arith.cmpi sge, %5, %6 : vector<8x1024xi32>
    %c30_i32 = arith.constant 30 : i32
    %8 = vector.broadcast %c30_i32 : i32 to vector<8x1024xi32>
    %9 = arith.cmpi sle, %5, %8 : vector<8x1024xi32>
    %cst = arith.constant 0.000000e+00 : f32
    %10 = vector.broadcast %cst : f32 to vector<8x1024xf32>
    %cst_3 = arith.constant 0.000000e+00 : f32
    %11 = vector.broadcast %cst_3 : f32 to vector<8x1024xf32>
    %cst_4 = arith.constant 0.000000e+00 : f32
    %12 = vector.broadcast %cst_4 : f32 to vector<8x1024xf32>
    %13 = vector.extract_strided_slice %0 {offsets = [0, 0], sizes = [8, 1024], strides = [1, 1]} : vector<8x1090xf32> to vector<8x1024xf32>
    %14 = vector.extract_strided_slice %1 {offsets = [0, 0], sizes = [8, 1024], strides = [1, 1]} : vector<8x1090xf32> to vector<8x1024xf32>
    %cst_5 = arith.constant 0.000000e+00 : f32
    %15 = vector.broadcast %cst_5 : f32 to vector<8x1024xf32>
    %16 = arith.select %7, %13, %15 : vector<8x1024xi1>, vector<8x1024xf32>
    %cst_6 = arith.constant 0.000000e+00 : f32
    %17 = vector.broadcast %cst_6 : f32 to vector<8x1024xf32>
    %18 = arith.select %7, %14, %17 : vector<8x1024xi1>, vector<8x1024xf32>
    %c0_7 = arith.constant 0 : index
    %c0_8 = arith.constant 0 : index
    %c0_9 = arith.constant 0 : index
    %19 = vector.load %arg3[%c0_7, %c0_8, %c0_9] : memref<27x8x1xf32, #tpu.memory_space<vmem>>, vector<1x8x1xf32>
    %20 = vector.shape_cast %19 : vector<1x8x1xf32> to vector<8x1xf32>
    %21 = vector.broadcast %20 : vector<8x1xf32> to vector<8x1024xf32>
    %22 = arith.mulf %16, %21 : vector<8x1024xf32>
    %23 = arith.addf %10, %22 : vector<8x1024xf32>
    %c9 = arith.constant 9 : index
    %c0_10 = arith.constant 0 : index
    %c0_11 = arith.constant 0 : index
    %24 = vector.load %arg3[%c9, %c0_10, %c0_11] : memref<27x8x1xf32, #tpu.memory_space<vmem>>, vector<1x8x1xf32>
    %25 = vector.shape_cast %24 : vector<1x8x1xf32> to vector<8x1xf32>
    %26 = vector.broadcast %25 : vector<8x1xf32> to vector<8x1024xf32>
    %27 = arith.mulf %18, %26 : vector<8x1024xf32>
    %28 = arith.addf %11, %27 : vector<8x1024xf32>
    %c18 = arith.constant 18 : index
    %c0_12 = arith.constant 0 : index
    %c0_13 = arith.constant 0 : index
    %29 = vector.load %arg3[%c18, %c0_12, %c0_13] : memref<27x8x1xf32, #tpu.memory_space<vmem>>, vector<1x8x1xf32>
    %30 = vector.shape_cast %29 : vector<1x8x1xf32> to vector<8x1xf32>
    %31 = vector.broadcast %30 : vector<8x1xf32> to vector<8x1024xf32>
    %32 = arith.mulf %16, %31 : vector<8x1024xf32>
    %33 = arith.addf %12, %32 : vector<8x1024xf32>
    %34 = vector.extract_strided_slice %0 {offsets = [0, 1], sizes = [8, 1024], strides = [1, 1]} : vector<8x1090xf32> to vector<8x1024xf32>
    %35 = vector.extract_strided_slice %1 {offsets = [0, 1], sizes = [8, 1024], strides = [1, 1]} : vector<8x1090xf32> to vector<8x1024xf32>
    %c1 = arith.constant 1 : index
    %c0_14 = arith.constant 0 : index
    %c0_15 = arith.constant 0 : index
    %36 = vector.load %arg3[%c1, %c0_14, %c0_15] : memref<27x8x1xf32, #tpu.memory_space<vmem>>, vector<1x8x1xf32>
    %37 = vector.shape_cast %36 : vector<1x8x1xf32> to vector<8x1xf32>
    %38 = vector.broadcast %37 : vector<8x1xf32> to vector<8x1024xf32>
    %39 = arith.mulf %34, %38 : vector<8x1024xf32>
    %40 = arith.addf %23, %39 : vector<8x1024xf32>
    %c10 = arith.constant 10 : index
    %c0_16 = arith.constant 0 : index
    %c0_17 = arith.constant 0 : index
    %41 = vector.load %arg3[%c10, %c0_16, %c0_17] : memref<27x8x1xf32, #tpu.memory_space<vmem>>, vector<1x8x1xf32>
    %42 = vector.shape_cast %41 : vector<1x8x1xf32> to vector<8x1xf32>
    %43 = vector.broadcast %42 : vector<8x1xf32> to vector<8x1024xf32>
    %44 = arith.mulf %35, %43 : vector<8x1024xf32>
    %45 = arith.addf %28, %44 : vector<8x1024xf32>
    %c19 = arith.constant 19 : index
    %c0_18 = arith.constant 0 : index
    %c0_19 = arith.constant 0 : index
    %46 = vector.load %arg3[%c19, %c0_18, %c0_19] : memref<27x8x1xf32, #tpu.memory_space<vmem>>, vector<1x8x1xf32>
    %47 = vector.shape_cast %46 : vector<1x8x1xf32> to vector<8x1xf32>
    %48 = vector.broadcast %47 : vector<8x1xf32> to vector<8x1024xf32>
    %49 = arith.mulf %34, %48 : vector<8x1024xf32>
    %50 = arith.addf %33, %49 : vector<8x1024xf32>
    %51 = vector.extract_strided_slice %0 {offsets = [0, 2], sizes = [8, 1024], strides = [1, 1]} : vector<8x1090xf32> to vector<8x1024xf32>
    %52 = vector.extract_strided_slice %1 {offsets = [0, 2], sizes = [8, 1024], strides = [1, 1]} : vector<8x1090xf32> to vector<8x1024xf32>
    %cst_20 = arith.constant 0.000000e+00 : f32
    %53 = vector.broadcast %cst_20 : f32 to vector<8x1024xf32>
    %54 = arith.select %9, %51, %53 : vector<8x1024xi1>, vector<8x1024xf32>
    %cst_21 = arith.constant 0.000000e+00 : f32
    %55 = vector.broadcast %cst_21 : f32 to vector<8x1024xf32>
    %56 = arith.select %9, %52, %55 : vector<8x1024xi1>, vector<8x1024xf32>
    %c2 = arith.constant 2 : index
    %c0_22 = arith.constant 0 : index
    %c0_23 = arith.constant 0 : index
    %57 = vector.load %arg3[%c2, %c0_22, %c0_23] : memref<27x8x1xf32, #tpu.memory_space<vmem>>, vector<1x8x1xf32>
    %58 = vector.shape_cast %57 : vector<1x8x1xf32> to vector<8x1xf32>
    %59 = vector.broadcast %58 : vector<8x1xf32> to vector<8x1024xf32>
    %60 = arith.mulf %54, %59 : vector<8x1024xf32>
    %61 = arith.addf %40, %60 : vector<8x1024xf32>
    %c11 = arith.constant 11 : index
    %c0_24 = arith.constant 0 : index
    %c0_25 = arith.constant 0 : index
    %62 = vector.load %arg3[%c11, %c0_24, %c0_25] : memref<27x8x1xf32, #tpu.memory_space<vmem>>, vector<1x8x1xf32>
    %63 = vector.shape_cast %62 : vector<1x8x1xf32> to vector<8x1xf32>
    %64 = vector.broadcast %63 : vector<8x1xf32> to vector<8x1024xf32>
    %65 = arith.mulf %56, %64 : vector<8x1024xf32>
    %66 = arith.addf %45, %65 : vector<8x1024xf32>
    %c20 = arith.constant 20 : index
    %c0_26 = arith.constant 0 : index
    %c0_27 = arith.constant 0 : index
    %67 = vector.load %arg3[%c20, %c0_26, %c0_27] : memref<27x8x1xf32, #tpu.memory_space<vmem>>, vector<1x8x1xf32>
    %68 = vector.shape_cast %67 : vector<1x8x1xf32> to vector<8x1xf32>
    %69 = vector.broadcast %68 : vector<8x1xf32> to vector<8x1024xf32>
    %70 = arith.mulf %54, %69 : vector<8x1024xf32>
    %71 = arith.addf %50, %70 : vector<8x1024xf32>
    %72 = vector.extract_strided_slice %0 {offsets = [0, 32], sizes = [8, 1024], strides = [1, 1]} : vector<8x1090xf32> to vector<8x1024xf32>
    %73 = vector.extract_strided_slice %1 {offsets = [0, 32], sizes = [8, 1024], strides = [1, 1]} : vector<8x1090xf32> to vector<8x1024xf32>
    %cst_28 = arith.constant 0.000000e+00 : f32
    %74 = vector.broadcast %cst_28 : f32 to vector<8x1024xf32>
    %75 = arith.select %7, %72, %74 : vector<8x1024xi1>, vector<8x1024xf32>
    %cst_29 = arith.constant 0.000000e+00 : f32
    %76 = vector.broadcast %cst_29 : f32 to vector<8x1024xf32>
    %77 = arith.select %7, %73, %76 : vector<8x1024xi1>, vector<8x1024xf32>
    %c3 = arith.constant 3 : index
    %c0_30 = arith.constant 0 : index
    %c0_31 = arith.constant 0 : index
    %78 = vector.load %arg3[%c3, %c0_30, %c0_31] : memref<27x8x1xf32, #tpu.memory_space<vmem>>, vector<1x8x1xf32>
    %79 = vector.shape_cast %78 : vector<1x8x1xf32> to vector<8x1xf32>
    %80 = vector.broadcast %79 : vector<8x1xf32> to vector<8x1024xf32>
    %81 = arith.mulf %75, %80 : vector<8x1024xf32>
    %82 = arith.addf %61, %81 : vector<8x1024xf32>
    %c12 = arith.constant 12 : index
    %c0_32 = arith.constant 0 : index
    %c0_33 = arith.constant 0 : index
    %83 = vector.load %arg3[%c12, %c0_32, %c0_33] : memref<27x8x1xf32, #tpu.memory_space<vmem>>, vector<1x8x1xf32>
    %84 = vector.shape_cast %83 : vector<1x8x1xf32> to vector<8x1xf32>
    %85 = vector.broadcast %84 : vector<8x1xf32> to vector<8x1024xf32>
    %86 = arith.mulf %77, %85 : vector<8x1024xf32>
    %87 = arith.addf %66, %86 : vector<8x1024xf32>
    %c21 = arith.constant 21 : index
    %c0_34 = arith.constant 0 : index
    %c0_35 = arith.constant 0 : index
    %88 = vector.load %arg3[%c21, %c0_34, %c0_35] : memref<27x8x1xf32, #tpu.memory_space<vmem>>, vector<1x8x1xf32>
    %89 = vector.shape_cast %88 : vector<1x8x1xf32> to vector<8x1xf32>
    %90 = vector.broadcast %89 : vector<8x1xf32> to vector<8x1024xf32>
    %91 = arith.mulf %75, %90 : vector<8x1024xf32>
    %92 = arith.addf %71, %91 : vector<8x1024xf32>
    %93 = vector.extract_strided_slice %0 {offsets = [0, 33], sizes = [8, 1024], strides = [1, 1]} : vector<8x1090xf32> to vector<8x1024xf32>
    %94 = vector.extract_strided_slice %1 {offsets = [0, 33], sizes = [8, 1024], strides = [1, 1]} : vector<8x1090xf32> to vector<8x1024xf32>
    %c4 = arith.constant 4 : index
    %c0_36 = arith.constant 0 : index
    %c0_37 = arith.constant 0 : index
    %95 = vector.load %arg3[%c4, %c0_36, %c0_37] : memref<27x8x1xf32, #tpu.memory_space<vmem>>, vector<1x8x1xf32>
    %96 = vector.shape_cast %95 : vector<1x8x1xf32> to vector<8x1xf32>
    %97 = vector.broadcast %96 : vector<8x1xf32> to vector<8x1024xf32>
    %98 = arith.mulf %93, %97 : vector<8x1024xf32>
    %99 = arith.addf %82, %98 : vector<8x1024xf32>
    %c13 = arith.constant 13 : index
    %c0_38 = arith.constant 0 : index
    %c0_39 = arith.constant 0 : index
    %100 = vector.load %arg3[%c13, %c0_38, %c0_39] : memref<27x8x1xf32, #tpu.memory_space<vmem>>, vector<1x8x1xf32>
    %101 = vector.shape_cast %100 : vector<1x8x1xf32> to vector<8x1xf32>
    %102 = vector.broadcast %101 : vector<8x1xf32> to vector<8x1024xf32>
    %103 = arith.mulf %94, %102 : vector<8x1024xf32>
    %104 = arith.addf %87, %103 : vector<8x1024xf32>
    %c22 = arith.constant 22 : index
    %c0_40 = arith.constant 0 : index
    %c0_41 = arith.constant 0 : index
    %105 = vector.load %arg3[%c22, %c0_40, %c0_41] : memref<27x8x1xf32, #tpu.memory_space<vmem>>, vector<1x8x1xf32>
    %106 = vector.shape_cast %105 : vector<1x8x1xf32> to vector<8x1xf32>
    %107 = vector.broadcast %106 : vector<8x1xf32> to vector<8x1024xf32>
    %108 = arith.mulf %93, %107 : vector<8x1024xf32>
    %109 = arith.addf %92, %108 : vector<8x1024xf32>
    %110 = vector.extract_strided_slice %0 {offsets = [0, 34], sizes = [8, 1024], strides = [1, 1]} : vector<8x1090xf32> to vector<8x1024xf32>
    %111 = vector.extract_strided_slice %1 {offsets = [0, 34], sizes = [8, 1024], strides = [1, 1]} : vector<8x1090xf32> to vector<8x1024xf32>
    %cst_42 = arith.constant 0.000000e+00 : f32
    %112 = vector.broadcast %cst_42 : f32 to vector<8x1024xf32>
    %113 = arith.select %9, %110, %112 : vector<8x1024xi1>, vector<8x1024xf32>
    %cst_43 = arith.constant 0.000000e+00 : f32
    %114 = vector.broadcast %cst_43 : f32 to vector<8x1024xf32>
    %115 = arith.select %9, %111, %114 : vector<8x1024xi1>, vector<8x1024xf32>
    %c5 = arith.constant 5 : index
    %c0_44 = arith.constant 0 : index
    %c0_45 = arith.constant 0 : index
    %116 = vector.load %arg3[%c5, %c0_44, %c0_45] : memref<27x8x1xf32, #tpu.memory_space<vmem>>, vector<1x8x1xf32>
    %117 = vector.shape_cast %116 : vector<1x8x1xf32> to vector<8x1xf32>
    %118 = vector.broadcast %117 : vector<8x1xf32> to vector<8x1024xf32>
    %119 = arith.mulf %113, %118 : vector<8x1024xf32>
    %120 = arith.addf %99, %119 : vector<8x1024xf32>
    %c14 = arith.constant 14 : index
    %c0_46 = arith.constant 0 : index
    %c0_47 = arith.constant 0 : index
    %121 = vector.load %arg3[%c14, %c0_46, %c0_47] : memref<27x8x1xf32, #tpu.memory_space<vmem>>, vector<1x8x1xf32>
    %122 = vector.shape_cast %121 : vector<1x8x1xf32> to vector<8x1xf32>
    %123 = vector.broadcast %122 : vector<8x1xf32> to vector<8x1024xf32>
    %124 = arith.mulf %115, %123 : vector<8x1024xf32>
    %125 = arith.addf %104, %124 : vector<8x1024xf32>
    %c23 = arith.constant 23 : index
    %c0_48 = arith.constant 0 : index
    %c0_49 = arith.constant 0 : index
    %126 = vector.load %arg3[%c23, %c0_48, %c0_49] : memref<27x8x1xf32, #tpu.memory_space<vmem>>, vector<1x8x1xf32>
    %127 = vector.shape_cast %126 : vector<1x8x1xf32> to vector<8x1xf32>
    %128 = vector.broadcast %127 : vector<8x1xf32> to vector<8x1024xf32>
    %129 = arith.mulf %113, %128 : vector<8x1024xf32>
    %130 = arith.addf %109, %129 : vector<8x1024xf32>
    %131 = vector.extract_strided_slice %0 {offsets = [0, 64], sizes = [8, 1024], strides = [1, 1]} : vector<8x1090xf32> to vector<8x1024xf32>
    %132 = vector.extract_strided_slice %1 {offsets = [0, 64], sizes = [8, 1024], strides = [1, 1]} : vector<8x1090xf32> to vector<8x1024xf32>
    %cst_50 = arith.constant 0.000000e+00 : f32
    %133 = vector.broadcast %cst_50 : f32 to vector<8x1024xf32>
    %134 = arith.select %7, %131, %133 : vector<8x1024xi1>, vector<8x1024xf32>
    %cst_51 = arith.constant 0.000000e+00 : f32
    %135 = vector.broadcast %cst_51 : f32 to vector<8x1024xf32>
    %136 = arith.select %7, %132, %135 : vector<8x1024xi1>, vector<8x1024xf32>
    %c6 = arith.constant 6 : index
    %c0_52 = arith.constant 0 : index
    %c0_53 = arith.constant 0 : index
    %137 = vector.load %arg3[%c6, %c0_52, %c0_53] : memref<27x8x1xf32, #tpu.memory_space<vmem>>, vector<1x8x1xf32>
    %138 = vector.shape_cast %137 : vector<1x8x1xf32> to vector<8x1xf32>
    %139 = vector.broadcast %138 : vector<8x1xf32> to vector<8x1024xf32>
    %140 = arith.mulf %134, %139 : vector<8x1024xf32>
    %141 = arith.addf %120, %140 : vector<8x1024xf32>
    %c15 = arith.constant 15 : index
    %c0_54 = arith.constant 0 : index
    %c0_55 = arith.constant 0 : index
    %142 = vector.load %arg3[%c15, %c0_54, %c0_55] : memref<27x8x1xf32, #tpu.memory_space<vmem>>, vector<1x8x1xf32>
    %143 = vector.shape_cast %142 : vector<1x8x1xf32> to vector<8x1xf32>
    %144 = vector.broadcast %143 : vector<8x1xf32> to vector<8x1024xf32>
    %145 = arith.mulf %136, %144 : vector<8x1024xf32>
    %146 = arith.addf %125, %145 : vector<8x1024xf32>
    %c24 = arith.constant 24 : index
    %c0_56 = arith.constant 0 : index
    %c0_57 = arith.constant 0 : index
    %147 = vector.load %arg3[%c24, %c0_56, %c0_57] : memref<27x8x1xf32, #tpu.memory_space<vmem>>, vector<1x8x1xf32>
    %148 = vector.shape_cast %147 : vector<1x8x1xf32> to vector<8x1xf32>
    %149 = vector.broadcast %148 : vector<8x1xf32> to vector<8x1024xf32>
    %150 = arith.mulf %134, %149 : vector<8x1024xf32>
    %151 = arith.addf %130, %150 : vector<8x1024xf32>
    %152 = vector.extract_strided_slice %0 {offsets = [0, 65], sizes = [8, 1024], strides = [1, 1]} : vector<8x1090xf32> to vector<8x1024xf32>
    %153 = vector.extract_strided_slice %1 {offsets = [0, 65], sizes = [8, 1024], strides = [1, 1]} : vector<8x1090xf32> to vector<8x1024xf32>
    %c7 = arith.constant 7 : index
    %c0_58 = arith.constant 0 : index
    %c0_59 = arith.constant 0 : index
    %154 = vector.load %arg3[%c7, %c0_58, %c0_59] : memref<27x8x1xf32, #tpu.memory_space<vmem>>, vector<1x8x1xf32>
    %155 = vector.shape_cast %154 : vector<1x8x1xf32> to vector<8x1xf32>
    %156 = vector.broadcast %155 : vector<8x1xf32> to vector<8x1024xf32>
    %157 = arith.mulf %152, %156 : vector<8x1024xf32>
    %158 = arith.addf %141, %157 : vector<8x1024xf32>
    %c16 = arith.constant 16 : index
    %c0_60 = arith.constant 0 : index
    %c0_61 = arith.constant 0 : index
    %159 = vector.load %arg3[%c16, %c0_60, %c0_61] : memref<27x8x1xf32, #tpu.memory_space<vmem>>, vector<1x8x1xf32>
    %160 = vector.shape_cast %159 : vector<1x8x1xf32> to vector<8x1xf32>
    %161 = vector.broadcast %160 : vector<8x1xf32> to vector<8x1024xf32>
    %162 = arith.mulf %153, %161 : vector<8x1024xf32>
    %163 = arith.addf %146, %162 : vector<8x1024xf32>
    %c25 = arith.constant 25 : index
    %c0_62 = arith.constant 0 : index
    %c0_63 = arith.constant 0 : index
    %164 = vector.load %arg3[%c25, %c0_62, %c0_63] : memref<27x8x1xf32, #tpu.memory_space<vmem>>, vector<1x8x1xf32>
    %165 = vector.shape_cast %164 : vector<1x8x1xf32> to vector<8x1xf32>
    %166 = vector.broadcast %165 : vector<8x1xf32> to vector<8x1024xf32>
    %167 = arith.mulf %152, %166 : vector<8x1024xf32>
    %168 = arith.addf %151, %167 : vector<8x1024xf32>
    %169 = vector.extract_strided_slice %0 {offsets = [0, 66], sizes = [8, 1024], strides = [1, 1]} : vector<8x1090xf32> to vector<8x1024xf32>
    %170 = vector.extract_strided_slice %1 {offsets = [0, 66], sizes = [8, 1024], strides = [1, 1]} : vector<8x1090xf32> to vector<8x1024xf32>
    %cst_64 = arith.constant 0.000000e+00 : f32
    %171 = vector.broadcast %cst_64 : f32 to vector<8x1024xf32>
    %172 = arith.select %9, %169, %171 : vector<8x1024xi1>, vector<8x1024xf32>
    %cst_65 = arith.constant 0.000000e+00 : f32
    %173 = vector.broadcast %cst_65 : f32 to vector<8x1024xf32>
    %174 = arith.select %9, %170, %173 : vector<8x1024xi1>, vector<8x1024xf32>
    %c8 = arith.constant 8 : index
    %c0_66 = arith.constant 0 : index
    %c0_67 = arith.constant 0 : index
    %175 = vector.load %arg3[%c8, %c0_66, %c0_67] : memref<27x8x1xf32, #tpu.memory_space<vmem>>, vector<1x8x1xf32>
    %176 = vector.shape_cast %175 : vector<1x8x1xf32> to vector<8x1xf32>
    %177 = vector.broadcast %176 : vector<8x1xf32> to vector<8x1024xf32>
    %178 = arith.mulf %172, %177 : vector<8x1024xf32>
    %179 = arith.addf %158, %178 : vector<8x1024xf32>
    %c17 = arith.constant 17 : index
    %c0_68 = arith.constant 0 : index
    %c0_69 = arith.constant 0 : index
    %180 = vector.load %arg3[%c17, %c0_68, %c0_69] : memref<27x8x1xf32, #tpu.memory_space<vmem>>, vector<1x8x1xf32>
    %181 = vector.shape_cast %180 : vector<1x8x1xf32> to vector<8x1xf32>
    %182 = vector.broadcast %181 : vector<8x1xf32> to vector<8x1024xf32>
    %183 = arith.mulf %174, %182 : vector<8x1024xf32>
    %184 = arith.addf %163, %183 : vector<8x1024xf32>
    %c26 = arith.constant 26 : index
    %c0_70 = arith.constant 0 : index
    %c0_71 = arith.constant 0 : index
    %185 = vector.load %arg3[%c26, %c0_70, %c0_71] : memref<27x8x1xf32, #tpu.memory_space<vmem>>, vector<1x8x1xf32>
    %186 = vector.shape_cast %185 : vector<1x8x1xf32> to vector<8x1xf32>
    %187 = vector.broadcast %186 : vector<8x1xf32> to vector<8x1024xf32>
    %188 = arith.mulf %172, %187 : vector<8x1024xf32>
    %189 = arith.addf %168, %188 : vector<8x1024xf32>
    %c0_72 = arith.constant 0 : index
    %c0_73 = arith.constant 0 : index
    %190 = vector.load %arg4[%c0_72, %c0_73] : memref<4x4xf32, #tpu.memory_space<vmem>>, vector<4x4xf32>
    %c0_74 = arith.constant 0 : index
    %c0_75 = arith.constant 0 : index
    %191 = vector.load %arg5[%c0_74, %c0_75] : memref<4x4xf32, #tpu.memory_space<vmem>>, vector<4x4xf32>
    %c0_76 = arith.constant 0 : index
    %c0_77 = arith.constant 0 : index
    %192 = vector.load %arg6[%c0_76, %c0_77] : memref<4x4xf32, #tpu.memory_space<vmem>>, vector<4x4xf32>
    %c0_78 = arith.constant 0 : index
    %c0_79 = arith.constant 0 : index
    %193 = vector.load %arg7[%c0_78, %c0_79] : memref<2x4xf32, #tpu.memory_space<vmem>>, vector<2x4xf32>
    %c0_80 = arith.constant 0 : index
    %c0_81 = arith.constant 0 : index
    %194 = vector.load %arg8[%c0_80, %c0_81] : memref<4x1xf32, #tpu.memory_space<vmem>>, vector<4x1xf32>
    %c0_82 = arith.constant 0 : index
    %c0_83 = arith.constant 0 : index
    %195 = vector.load %arg9[%c0_82, %c0_83] : memref<2x1xf32, #tpu.memory_space<vmem>>, vector<2x1xf32>
    %196 = vector.extract_strided_slice %179 {offsets = [0, 0], sizes = [4, 1024], strides = [1, 1]} : vector<8x1024xf32> to vector<4x1024xf32>
    %197 = vector.extract_strided_slice %184 {offsets = [0, 0], sizes = [4, 1024], strides = [1, 1]} : vector<8x1024xf32> to vector<4x1024xf32>
    %198 = vector.extract_strided_slice %189 {offsets = [0, 0], sizes = [4, 1024], strides = [1, 1]} : vector<8x1024xf32> to vector<4x1024xf32>
    %199 = vector.extract_strided_slice %2 {offsets = [0, 0], sizes = [4, 1024], strides = [1, 1]} : vector<8x1024xf32> to vector<4x1024xf32>
    %200 = vector.extract_strided_slice %196 {offsets = [0, 0], sizes = [1, 1024], strides = [1, 1]} : vector<4x1024xf32> to vector<1x1024xf32>
    %201 = vector.extract_strided_slice %190 {offsets = [0, 0], sizes = [4, 1], strides = [1, 1]} : vector<4x4xf32> to vector<4x1xf32>
    %202 = vector.broadcast %200 : vector<1x1024xf32> to vector<4x1024xf32>
    %203 = vector.broadcast %201 : vector<4x1xf32> to vector<4x1024xf32>
    %204 = arith.mulf %202, %203 : vector<4x1024xf32>
    %205 = vector.extract_strided_slice %196 {offsets = [1, 0], sizes = [1, 1024], strides = [1, 1]} : vector<4x1024xf32> to vector<1x1024xf32>
    %206 = vector.extract_strided_slice %190 {offsets = [0, 1], sizes = [4, 1], strides = [1, 1]} : vector<4x4xf32> to vector<4x1xf32>
    %207 = vector.broadcast %205 : vector<1x1024xf32> to vector<4x1024xf32>
    %208 = vector.broadcast %206 : vector<4x1xf32> to vector<4x1024xf32>
    %209 = arith.mulf %207, %208 : vector<4x1024xf32>
    %210 = arith.addf %204, %209 : vector<4x1024xf32>
    %211 = vector.extract_strided_slice %196 {offsets = [2, 0], sizes = [1, 1024], strides = [1, 1]} : vector<4x1024xf32> to vector<1x1024xf32>
    %212 = vector.extract_strided_slice %190 {offsets = [0, 2], sizes = [4, 1], strides = [1, 1]} : vector<4x4xf32> to vector<4x1xf32>
    %213 = vector.broadcast %211 : vector<1x1024xf32> to vector<4x1024xf32>
    %214 = vector.broadcast %212 : vector<4x1xf32> to vector<4x1024xf32>
    %215 = arith.mulf %213, %214 : vector<4x1024xf32>
    %216 = arith.addf %210, %215 : vector<4x1024xf32>
    %217 = vector.extract_strided_slice %196 {offsets = [3, 0], sizes = [1, 1024], strides = [1, 1]} : vector<4x1024xf32> to vector<1x1024xf32>
    %218 = vector.extract_strided_slice %190 {offsets = [0, 3], sizes = [4, 1], strides = [1, 1]} : vector<4x4xf32> to vector<4x1xf32>
    %219 = vector.broadcast %217 : vector<1x1024xf32> to vector<4x1024xf32>
    %220 = vector.broadcast %218 : vector<4x1xf32> to vector<4x1024xf32>
    %221 = arith.mulf %219, %220 : vector<4x1024xf32>
    %222 = arith.addf %216, %221 : vector<4x1024xf32>
    %223 = vector.extract_strided_slice %197 {offsets = [0, 0], sizes = [1, 1024], strides = [1, 1]} : vector<4x1024xf32> to vector<1x1024xf32>
    %224 = vector.extract_strided_slice %191 {offsets = [0, 0], sizes = [4, 1], strides = [1, 1]} : vector<4x4xf32> to vector<4x1xf32>
    %225 = vector.broadcast %223 : vector<1x1024xf32> to vector<4x1024xf32>
    %226 = vector.broadcast %224 : vector<4x1xf32> to vector<4x1024xf32>
    %227 = arith.mulf %225, %226 : vector<4x1024xf32>
    %228 = vector.extract_strided_slice %197 {offsets = [1, 0], sizes = [1, 1024], strides = [1, 1]} : vector<4x1024xf32> to vector<1x1024xf32>
    %229 = vector.extract_strided_slice %191 {offsets = [0, 1], sizes = [4, 1], strides = [1, 1]} : vector<4x4xf32> to vector<4x1xf32>
    %230 = vector.broadcast %228 : vector<1x1024xf32> to vector<4x1024xf32>
    %231 = vector.broadcast %229 : vector<4x1xf32> to vector<4x1024xf32>
    %232 = arith.mulf %230, %231 : vector<4x1024xf32>
    %233 = arith.addf %227, %232 : vector<4x1024xf32>
    %234 = vector.extract_strided_slice %197 {offsets = [2, 0], sizes = [1, 1024], strides = [1, 1]} : vector<4x1024xf32> to vector<1x1024xf32>
    %235 = vector.extract_strided_slice %191 {offsets = [0, 2], sizes = [4, 1], strides = [1, 1]} : vector<4x4xf32> to vector<4x1xf32>
    %236 = vector.broadcast %234 : vector<1x1024xf32> to vector<4x1024xf32>
    %237 = vector.broadcast %235 : vector<4x1xf32> to vector<4x1024xf32>
    %238 = arith.mulf %236, %237 : vector<4x1024xf32>
    %239 = arith.addf %233, %238 : vector<4x1024xf32>
    %240 = vector.extract_strided_slice %197 {offsets = [3, 0], sizes = [1, 1024], strides = [1, 1]} : vector<4x1024xf32> to vector<1x1024xf32>
    %241 = vector.extract_strided_slice %191 {offsets = [0, 3], sizes = [4, 1], strides = [1, 1]} : vector<4x4xf32> to vector<4x1xf32>
    %242 = vector.broadcast %240 : vector<1x1024xf32> to vector<4x1024xf32>
    %243 = vector.broadcast %241 : vector<4x1xf32> to vector<4x1024xf32>
    %244 = arith.mulf %242, %243 : vector<4x1024xf32>
    %245 = arith.addf %239, %244 : vector<4x1024xf32>
    %246 = arith.addf %222, %245 : vector<4x1024xf32>
    %247 = vector.broadcast %194 : vector<4x1xf32> to vector<4x1024xf32>
    %248 = arith.addf %246, %247 : vector<4x1024xf32>
    %cst_84 = arith.constant 0.000000e+00 : f32
    %249 = vector.broadcast %cst_84 : f32 to vector<4x1024xf32>
    %250 = arith.maximumf %248, %249 : vector<4x1024xf32>
    %c0_85 = arith.constant 0 : index
    %c0_86 = arith.constant 0 : index
    %251 = vector.load %arg10[%c0_85, %c0_86] : memref<8x1024xf32, #tpu.memory_space<vmem>>, vector<4x1024xf32>
    tpu.vector_store %arg10[%c0_85, %c0_86], %250 {strides = array<i32>} : memref<8x1024xf32, #tpu.memory_space<vmem>>, vector<4x1024xf32>,
    %252 = vector.extract_strided_slice %198 {offsets = [0, 0], sizes = [1, 1024], strides = [1, 1]} : vector<4x1024xf32> to vector<1x1024xf32>
    %253 = vector.extract_strided_slice %192 {offsets = [0, 0], sizes = [4, 1], strides = [1, 1]} : vector<4x4xf32> to vector<4x1xf32>
    %254 = vector.broadcast %252 : vector<1x1024xf32> to vector<4x1024xf32>
    %255 = vector.broadcast %253 : vector<4x1xf32> to vector<4x1024xf32>
    %256 = arith.mulf %254, %255 : vector<4x1024xf32>
    %257 = vector.extract_strided_slice %198 {offsets = [1, 0], sizes = [1, 1024], strides = [1, 1]} : vector<4x1024xf32> to vector<1x1024xf32>
    %258 = vector.extract_strided_slice %192 {offsets = [0, 1], sizes = [4, 1], strides = [1, 1]} : vector<4x4xf32> to vector<4x1xf32>
    %259 = vector.broadcast %257 : vector<1x1024xf32> to vector<4x1024xf32>
    %260 = vector.broadcast %258 : vector<4x1xf32> to vector<4x1024xf32>
    %261 = arith.mulf %259, %260 : vector<4x1024xf32>
    %262 = arith.addf %256, %261 : vector<4x1024xf32>
    %263 = vector.extract_strided_slice %198 {offsets = [2, 0], sizes = [1, 1024], strides = [1, 1]} : vector<4x1024xf32> to vector<1x1024xf32>
    %264 = vector.extract_strided_slice %192 {offsets = [0, 2], sizes = [4, 1], strides = [1, 1]} : vector<4x4xf32> to vector<4x1xf32>
    %265 = vector.broadcast %263 : vector<1x1024xf32> to vector<4x1024xf32>
    %266 = vector.broadcast %264 : vector<4x1xf32> to vector<4x1024xf32>
    %267 = arith.mulf %265, %266 : vector<4x1024xf32>
    %268 = arith.addf %262, %267 : vector<4x1024xf32>
    %269 = vector.extract_strided_slice %198 {offsets = [3, 0], sizes = [1, 1024], strides = [1, 1]} : vector<4x1024xf32> to vector<1x1024xf32>
    %270 = vector.extract_strided_slice %192 {offsets = [0, 3], sizes = [4, 1], strides = [1, 1]} : vector<4x4xf32> to vector<4x1xf32>
    %271 = vector.broadcast %269 : vector<1x1024xf32> to vector<4x1024xf32>
    %272 = vector.broadcast %270 : vector<4x1xf32> to vector<4x1024xf32>
    %273 = arith.mulf %271, %272 : vector<4x1024xf32>
    %274 = arith.addf %268, %273 : vector<4x1024xf32>
    %c0_87 = arith.constant 0 : index
    %c0_88 = arith.constant 0 : index
    %275 = vector.load %arg11[%c0_87, %c0_88] : memref<8x1024xf32, #tpu.memory_space<vmem>>, vector<4x1024xf32>
    tpu.vector_store %arg11[%c0_87, %c0_88], %274 {strides = array<i32>} : memref<8x1024xf32, #tpu.memory_space<vmem>>, vector<4x1024xf32>,
    %276 = vector.extract_strided_slice %199 {offsets = [0, 0], sizes = [1, 1024], strides = [1, 1]} : vector<4x1024xf32> to vector<1x1024xf32>
    %277 = vector.extract_strided_slice %193 {offsets = [0, 0], sizes = [2, 1], strides = [1, 1]} : vector<2x4xf32> to vector<2x1xf32>
    %278 = vector.broadcast %276 : vector<1x1024xf32> to vector<2x1024xf32>
    %279 = vector.broadcast %277 : vector<2x1xf32> to vector<2x1024xf32>
    %280 = arith.mulf %278, %279 : vector<2x1024xf32>
    %281 = vector.extract_strided_slice %199 {offsets = [1, 0], sizes = [1, 1024], strides = [1, 1]} : vector<4x1024xf32> to vector<1x1024xf32>
    %282 = vector.extract_strided_slice %193 {offsets = [0, 1], sizes = [2, 1], strides = [1, 1]} : vector<2x4xf32> to vector<2x1xf32>
    %283 = vector.broadcast %281 : vector<1x1024xf32> to vector<2x1024xf32>
    %284 = vector.broadcast %282 : vector<2x1xf32> to vector<2x1024xf32>
    %285 = arith.mulf %283, %284 : vector<2x1024xf32>
    %286 = arith.addf %280, %285 : vector<2x1024xf32>
    %287 = vector.extract_strided_slice %199 {offsets = [2, 0], sizes = [1, 1024], strides = [1, 1]} : vector<4x1024xf32> to vector<1x1024xf32>
    %288 = vector.extract_strided_slice %193 {offsets = [0, 2], sizes = [2, 1], strides = [1, 1]} : vector<2x4xf32> to vector<2x1xf32>
    %289 = vector.broadcast %287 : vector<1x1024xf32> to vector<2x1024xf32>
    %290 = vector.broadcast %288 : vector<2x1xf32> to vector<2x1024xf32>
    %291 = arith.mulf %289, %290 : vector<2x1024xf32>
    %292 = arith.addf %286, %291 : vector<2x1024xf32>
    %293 = vector.extract_strided_slice %199 {offsets = [3, 0], sizes = [1, 1024], strides = [1, 1]} : vector<4x1024xf32> to vector<1x1024xf32>
    %294 = vector.extract_strided_slice %193 {offsets = [0, 3], sizes = [2, 1], strides = [1, 1]} : vector<2x4xf32> to vector<2x1xf32>
    %295 = vector.broadcast %293 : vector<1x1024xf32> to vector<2x1024xf32>
    %296 = vector.broadcast %294 : vector<2x1xf32> to vector<2x1024xf32>
    %297 = arith.mulf %295, %296 : vector<2x1024xf32>
    %298 = arith.addf %292, %297 : vector<2x1024xf32>
    %299 = vector.broadcast %195 : vector<2x1xf32> to vector<2x1024xf32>
    %300 = arith.addf %298, %299 : vector<2x1024xf32>
    %cst_89 = arith.constant 0.000000e+00 : f32
    %301 = vector.broadcast %cst_89 : f32 to vector<2x1024xf32>
    %302 = arith.maximumf %300, %301 : vector<2x1024xf32>
    %c0_90 = arith.constant 0 : index
    %c0_91 = arith.constant 0 : index
    %303 = vector.load %arg12[%c0_90, %c0_91] : memref<4x1024xf32, #tpu.memory_space<vmem>>, vector<2x1024xf32>
    tpu.vector_store %arg12[%c0_90, %c0_91], %302 {strides = array<i32>} : memref<4x1024xf32, #tpu.memory_space<vmem>>, vector<2x1024xf32>,
    %304 = vector.extract_strided_slice %179 {offsets = [4, 0], sizes = [4, 1024], strides = [1, 1]} : vector<8x1024xf32> to vector<4x1024xf32>
    %305 = vector.extract_strided_slice %184 {offsets = [4, 0], sizes = [4, 1024], strides = [1, 1]} : vector<8x1024xf32> to vector<4x1024xf32>
    %306 = vector.extract_strided_slice %189 {offsets = [4, 0], sizes = [4, 1024], strides = [1, 1]} : vector<8x1024xf32> to vector<4x1024xf32>
    %307 = vector.extract_strided_slice %2 {offsets = [4, 0], sizes = [4, 1024], strides = [1, 1]} : vector<8x1024xf32> to vector<4x1024xf32>
    %308 = vector.extract_strided_slice %304 {offsets = [0, 0], sizes = [1, 1024], strides = [1, 1]} : vector<4x1024xf32> to vector<1x1024xf32>
    %309 = vector.extract_strided_slice %190 {offsets = [0, 0], sizes = [4, 1], strides = [1, 1]} : vector<4x4xf32> to vector<4x1xf32>
    %310 = vector.broadcast %308 : vector<1x1024xf32> to vector<4x1024xf32>
    %311 = vector.broadcast %309 : vector<4x1xf32> to vector<4x1024xf32>
    %312 = arith.mulf %310, %311 : vector<4x1024xf32>
    %313 = vector.extract_strided_slice %304 {offsets = [1, 0], sizes = [1, 1024], strides = [1, 1]} : vector<4x1024xf32> to vector<1x1024xf32>
    %314 = vector.extract_strided_slice %190 {offsets = [0, 1], sizes = [4, 1], strides = [1, 1]} : vector<4x4xf32> to vector<4x1xf32>
    %315 = vector.broadcast %313 : vector<1x1024xf32> to vector<4x1024xf32>
    %316 = vector.broadcast %314 : vector<4x1xf32> to vector<4x1024xf32>
    %317 = arith.mulf %315, %316 : vector<4x1024xf32>
    %318 = arith.addf %312, %317 : vector<4x1024xf32>
    %319 = vector.extract_strided_slice %304 {offsets = [2, 0], sizes = [1, 1024], strides = [1, 1]} : vector<4x1024xf32> to vector<1x1024xf32>
    %320 = vector.extract_strided_slice %190 {offsets = [0, 2], sizes = [4, 1], strides = [1, 1]} : vector<4x4xf32> to vector<4x1xf32>
    %321 = vector.broadcast %319 : vector<1x1024xf32> to vector<4x1024xf32>
    %322 = vector.broadcast %320 : vector<4x1xf32> to vector<4x1024xf32>
    %323 = arith.mulf %321, %322 : vector<4x1024xf32>
    %324 = arith.addf %318, %323 : vector<4x1024xf32>
    %325 = vector.extract_strided_slice %304 {offsets = [3, 0], sizes = [1, 1024], strides = [1, 1]} : vector<4x1024xf32> to vector<1x1024xf32>
    %326 = vector.extract_strided_slice %190 {offsets = [0, 3], sizes = [4, 1], strides = [1, 1]} : vector<4x4xf32> to vector<4x1xf32>
    %327 = vector.broadcast %325 : vector<1x1024xf32> to vector<4x1024xf32>
    %328 = vector.broadcast %326 : vector<4x1xf32> to vector<4x1024xf32>
    %329 = arith.mulf %327, %328 : vector<4x1024xf32>
    %330 = arith.addf %324, %329 : vector<4x1024xf32>
    %331 = vector.extract_strided_slice %305 {offsets = [0, 0], sizes = [1, 1024], strides = [1, 1]} : vector<4x1024xf32> to vector<1x1024xf32>
    %332 = vector.extract_strided_slice %191 {offsets = [0, 0], sizes = [4, 1], strides = [1, 1]} : vector<4x4xf32> to vector<4x1xf32>
    %333 = vector.broadcast %331 : vector<1x1024xf32> to vector<4x1024xf32>
    %334 = vector.broadcast %332 : vector<4x1xf32> to vector<4x1024xf32>
    %335 = arith.mulf %333, %334 : vector<4x1024xf32>
    %336 = vector.extract_strided_slice %305 {offsets = [1, 0], sizes = [1, 1024], strides = [1, 1]} : vector<4x1024xf32> to vector<1x1024xf32>
    %337 = vector.extract_strided_slice %191 {offsets = [0, 1], sizes = [4, 1], strides = [1, 1]} : vector<4x4xf32> to vector<4x1xf32>
    %338 = vector.broadcast %336 : vector<1x1024xf32> to vector<4x1024xf32>
    %339 = vector.broadcast %337 : vector<4x1xf32> to vector<4x1024xf32>
    %340 = arith.mulf %338, %339 : vector<4x1024xf32>
    %341 = arith.addf %335, %340 : vector<4x1024xf32>
    %342 = vector.extract_strided_slice %305 {offsets = [2, 0], sizes = [1, 1024], strides = [1, 1]} : vector<4x1024xf32> to vector<1x1024xf32>
    %343 = vector.extract_strided_slice %191 {offsets = [0, 2], sizes = [4, 1], strides = [1, 1]} : vector<4x4xf32> to vector<4x1xf32>
    %344 = vector.broadcast %342 : vector<1x1024xf32> to vector<4x1024xf32>
    %345 = vector.broadcast %343 : vector<4x1xf32> to vector<4x1024xf32>
    %346 = arith.mulf %344, %345 : vector<4x1024xf32>
    %347 = arith.addf %341, %346 : vector<4x1024xf32>
    %348 = vector.extract_strided_slice %305 {offsets = [3, 0], sizes = [1, 1024], strides = [1, 1]} : vector<4x1024xf32> to vector<1x1024xf32>
    %349 = vector.extract_strided_slice %191 {offsets = [0, 3], sizes = [4, 1], strides = [1, 1]} : vector<4x4xf32> to vector<4x1xf32>
    %350 = vector.broadcast %348 : vector<1x1024xf32> to vector<4x1024xf32>
    %351 = vector.broadcast %349 : vector<4x1xf32> to vector<4x1024xf32>
    %352 = arith.mulf %350, %351 : vector<4x1024xf32>
    %353 = arith.addf %347, %352 : vector<4x1024xf32>
    %354 = arith.addf %330, %353 : vector<4x1024xf32>
    %355 = vector.broadcast %194 : vector<4x1xf32> to vector<4x1024xf32>
    %356 = arith.addf %354, %355 : vector<4x1024xf32>
    %cst_92 = arith.constant 0.000000e+00 : f32
    %357 = vector.broadcast %cst_92 : f32 to vector<4x1024xf32>
    %358 = arith.maximumf %356, %357 : vector<4x1024xf32>
    %c4_93 = arith.constant 4 : index
    %c0_94 = arith.constant 0 : index
    %359 = vector.load %arg10[%c4_93, %c0_94] : memref<8x1024xf32, #tpu.memory_space<vmem>>, vector<4x1024xf32>
    tpu.vector_store %arg10[%c4_93, %c0_94], %358 {strides = array<i32>} : memref<8x1024xf32, #tpu.memory_space<vmem>>, vector<4x1024xf32>,
    %360 = vector.extract_strided_slice %306 {offsets = [0, 0], sizes = [1, 1024], strides = [1, 1]} : vector<4x1024xf32> to vector<1x1024xf32>
    %361 = vector.extract_strided_slice %192 {offsets = [0, 0], sizes = [4, 1], strides = [1, 1]} : vector<4x4xf32> to vector<4x1xf32>
    %362 = vector.broadcast %360 : vector<1x1024xf32> to vector<4x1024xf32>
    %363 = vector.broadcast %361 : vector<4x1xf32> to vector<4x1024xf32>
    %364 = arith.mulf %362, %363 : vector<4x1024xf32>
    %365 = vector.extract_strided_slice %306 {offsets = [1, 0], sizes = [1, 1024], strides = [1, 1]} : vector<4x1024xf32> to vector<1x1024xf32>
    %366 = vector.extract_strided_slice %192 {offsets = [0, 1], sizes = [4, 1], strides = [1, 1]} : vector<4x4xf32> to vector<4x1xf32>
    %367 = vector.broadcast %365 : vector<1x1024xf32> to vector<4x1024xf32>
    %368 = vector.broadcast %366 : vector<4x1xf32> to vector<4x1024xf32>
    %369 = arith.mulf %367, %368 : vector<4x1024xf32>
    %370 = arith.addf %364, %369 : vector<4x1024xf32>
    %371 = vector.extract_strided_slice %306 {offsets = [2, 0], sizes = [1, 1024], strides = [1, 1]} : vector<4x1024xf32> to vector<1x1024xf32>
    %372 = vector.extract_strided_slice %192 {offsets = [0, 2], sizes = [4, 1], strides = [1, 1]} : vector<4x4xf32> to vector<4x1xf32>
    %373 = vector.broadcast %371 : vector<1x1024xf32> to vector<4x1024xf32>
    %374 = vector.broadcast %372 : vector<4x1xf32> to vector<4x1024xf32>
    %375 = arith.mulf %373, %374 : vector<4x1024xf32>
    %376 = arith.addf %370, %375 : vector<4x1024xf32>
    %377 = vector.extract_strided_slice %306 {offsets = [3, 0], sizes = [1, 1024], strides = [1, 1]} : vector<4x1024xf32> to vector<1x1024xf32>
    %378 = vector.extract_strided_slice %192 {offsets = [0, 3], sizes = [4, 1], strides = [1, 1]} : vector<4x4xf32> to vector<4x1xf32>
    %379 = vector.broadcast %377 : vector<1x1024xf32> to vector<4x1024xf32>
    %380 = vector.broadcast %378 : vector<4x1xf32> to vector<4x1024xf32>
    %381 = arith.mulf %379, %380 : vector<4x1024xf32>
    %382 = arith.addf %376, %381 : vector<4x1024xf32>
    %c4_95 = arith.constant 4 : index
    %c0_96 = arith.constant 0 : index
    %383 = vector.load %arg11[%c4_95, %c0_96] : memref<8x1024xf32, #tpu.memory_space<vmem>>, vector<4x1024xf32>
    tpu.vector_store %arg11[%c4_95, %c0_96], %382 {strides = array<i32>} : memref<8x1024xf32, #tpu.memory_space<vmem>>, vector<4x1024xf32>,
    %384 = vector.extract_strided_slice %307 {offsets = [0, 0], sizes = [1, 1024], strides = [1, 1]} : vector<4x1024xf32> to vector<1x1024xf32>
    %385 = vector.extract_strided_slice %193 {offsets = [0, 0], sizes = [2, 1], strides = [1, 1]} : vector<2x4xf32> to vector<2x1xf32>
    %386 = vector.broadcast %384 : vector<1x1024xf32> to vector<2x1024xf32>
    %387 = vector.broadcast %385 : vector<2x1xf32> to vector<2x1024xf32>
    %388 = arith.mulf %386, %387 : vector<2x1024xf32>
    %389 = vector.extract_strided_slice %307 {offsets = [1, 0], sizes = [1, 1024], strides = [1, 1]} : vector<4x1024xf32> to vector<1x1024xf32>
    %390 = vector.extract_strided_slice %193 {offsets = [0, 1], sizes = [2, 1], strides = [1, 1]} : vector<2x4xf32> to vector<2x1xf32>
    %391 = vector.broadcast %389 : vector<1x1024xf32> to vector<2x1024xf32>
    %392 = vector.broadcast %390 : vector<2x1xf32> to vector<2x1024xf32>
    %393 = arith.mulf %391, %392 : vector<2x1024xf32>
    %394 = arith.addf %388, %393 : vector<2x1024xf32>
    %395 = vector.extract_strided_slice %307 {offsets = [2, 0], sizes = [1, 1024], strides = [1, 1]} : vector<4x1024xf32> to vector<1x1024xf32>
    %396 = vector.extract_strided_slice %193 {offsets = [0, 2], sizes = [2, 1], strides = [1, 1]} : vector<2x4xf32> to vector<2x1xf32>
    %397 = vector.broadcast %395 : vector<1x1024xf32> to vector<2x1024xf32>
    %398 = vector.broadcast %396 : vector<2x1xf32> to vector<2x1024xf32>
    %399 = arith.mulf %397, %398 : vector<2x1024xf32>
    %400 = arith.addf %394, %399 : vector<2x1024xf32>
    %401 = vector.extract_strided_slice %307 {offsets = [3, 0], sizes = [1, 1024], strides = [1, 1]} : vector<4x1024xf32> to vector<1x1024xf32>
    %402 = vector.extract_strided_slice %193 {offsets = [0, 3], sizes = [2, 1], strides = [1, 1]} : vector<2x4xf32> to vector<2x1xf32>
    %403 = vector.broadcast %401 : vector<1x1024xf32> to vector<2x1024xf32>
    %404 = vector.broadcast %402 : vector<2x1xf32> to vector<2x1024xf32>
    %405 = arith.mulf %403, %404 : vector<2x1024xf32>
    %406 = arith.addf %400, %405 : vector<2x1024xf32>
    %407 = vector.broadcast %195 : vector<2x1xf32> to vector<2x1024xf32>
    %408 = arith.addf %406, %407 : vector<2x1024xf32>
    %cst_97 = arith.constant 0.000000e+00 : f32
    %409 = vector.broadcast %cst_97 : f32 to vector<2x1024xf32>
    %410 = arith.maximumf %408, %409 : vector<2x1024xf32>
    %c2_98 = arith.constant 2 : index
    %c0_99 = arith.constant 0 : index
    %411 = vector.load %arg12[%c2_98, %c0_99] : memref<4x1024xf32, #tpu.memory_space<vmem>>, vector<2x1024xf32>
    tpu.vector_store %arg12[%c2_98, %c0_99], %410 {strides = array<i32>} : memref<4x1024xf32, #tpu.memory_space<vmem>>, vector<2x1024xf32>,
    return
  }
  func.func @transform_0(%arg0: i32) -> (i32, i32) {
    %c0_i32 = arith.constant 0 : i32
    %c0_i32_0 = arith.constant 0 : i32
    %c0_i32_1 = arith.constant 0 : i32
    return %c0_i32, %c0_i32_0 : i32, i32
  }
  func.func @transform_1(%arg0: i32) -> (i32, i32) {
    %c0_i32 = arith.constant 0 : i32
    %c0_i32_0 = arith.constant 0 : i32
    %c0_i32_1 = arith.constant 0 : i32
    return %c0_i32, %c0_i32_0 : i32, i32
  }
  func.func @transform_2(%arg0: i32) -> (i32, i32, i32) {
    %c0_i32 = arith.constant 0 : i32
    %c0_i32_0 = arith.constant 0 : i32
    %c0_i32_1 = arith.constant 0 : i32
    %c0_i32_2 = arith.constant 0 : i32
    return %c0_i32, %c0_i32_0, %c0_i32_1 : i32, i32, i32
  }
  func.func @transform_3(%arg0: i32) -> (i32, i32) {
    %c0_i32 = arith.constant 0 : i32
    %c0_i32_0 = arith.constant 0 : i32
    %c0_i32_1 = arith.constant 0 : i32
    return %c0_i32, %c0_i32_0 : i32, i32
  }
  func.func @transform_4(%arg0: i32) -> (i32, i32) {
    %c0_i32 = arith.constant 0 : i32
    %c0_i32_0 = arith.constant 0 : i32
    %c0_i32_1 = arith.constant 0 : i32
    return %c0_i32, %c0_i32_0 : i32, i32
  }
  func.func @transform_5(%arg0: i32) -> (i32, i32) {
    %c0_i32 = arith.constant 0 : i32
    %c0_i32_0 = arith.constant 0 : i32
    %c0_i32_1 = arith.constant 0 : i32
    return %c0_i32, %c0_i32_0 : i32, i32
  }
  func.func @transform_6(%arg0: i32) -> (i32, i32) {
    %c0_i32 = arith.constant 0 : i32
    %c0_i32_0 = arith.constant 0 : i32
    %c0_i32_1 = arith.constant 0 : i32
    return %c0_i32, %c0_i32_0 : i32, i32
  }
  func.func @transform_7(%arg0: i32) -> (i32, i32) {
    %c0_i32 = arith.constant 0 : i32
    %c0_i32_0 = arith.constant 0 : i32
    %c0_i32_1 = arith.constant 0 : i32
    return %c0_i32, %c0_i32_0 : i32, i32
  }
  func.func @transform_8(%arg0: i32) -> (i32, i32) {
    %c0_i32 = arith.constant 0 : i32
    %c0_i32_0 = arith.constant 0 : i32
    %c0_i32_1 = arith.constant 0 : i32
    return %c0_i32, %c0_i32_0 : i32, i32
  }
  func.func @transform_9(%arg0: i32) -> (i32, i32) {
    %c0_i32 = arith.constant 0 : i32
    %c0_i32_0 = arith.constant 0 : i32
    %c0_i32_1 = arith.constant 0 : i32
    return %c0_i32, %c0_i32_0 : i32, i32
  }
  func.func @transform_10(%arg0: i32) -> (i32, i32) {
    %c0_i32 = arith.constant 0 : i32
    %c0_i32_0 = arith.constant 0 : i32
    %c0_i32_1 = arith.constant 0 : i32
    return %c0_i32, %c0_i32_0 : i32, i32
  }
  func.func @transform_11(%arg0: i32) -> (i32, i32) {
    %c0_i32 = arith.constant 0 : i32
    %c0_i32_0 = arith.constant 0 : i32
    %c0_i32_1 = arith.constant 0 : i32
    return %c0_i32, %c0_i32_0 : i32, i32
  }
}

module attributes {stable_mosaic.version = 11 : i64} {
  func.func @_freq_pointwise_kernel(%arg0: i32, %arg1: memref<8x612xf32, #tpu.memory_space<vmem>>, %arg2: memref<4x4xf32, #tpu.memory_space<vmem>>, %arg3: memref<4x1xf32, #tpu.memory_space<vmem>>, %arg4: memref<8x612xf32, #tpu.memory_space<vmem>>) attributes {dimension_semantics = [#tpu.dimension_semantics<arbitrary>], iteration_bounds = array<i64: 1>, scalar_prefetch = 0 : i64, scratch_operands = 0 : i64, tpu.core_type = #tpu.core_type<tc>, window_params = [{pipeline_mode = #tpu.pipeline_mode<synchronous>, transform_indices = @transform_0, window_bounds = array<i64: 8, 612>}, {pipeline_mode = #tpu.pipeline_mode<synchronous>, transform_indices = @transform_1, window_bounds = array<i64: 4, 4>}, {pipeline_mode = #tpu.pipeline_mode<synchronous>, transform_indices = @transform_2, window_bounds = array<i64: 4, 1>}, {pipeline_mode = #tpu.pipeline_mode<synchronous>, transform_indices = @transform_3, window_bounds = array<i64: 8, 612>}]} {
    %c0 = arith.constant 0 : index
    %c0_0 = arith.constant 0 : index
    %0 = vector.load %arg1[%c0, %c0_0] : memref<8x612xf32, #tpu.memory_space<vmem>>, vector<8x612xf32>
    %c0_1 = arith.constant 0 : index
    %c0_2 = arith.constant 0 : index
    %1 = vector.load %arg2[%c0_1, %c0_2] : memref<4x4xf32, #tpu.memory_space<vmem>>, vector<4x4xf32>
    %c0_3 = arith.constant 0 : index
    %c0_4 = arith.constant 0 : index
    %2 = vector.load %arg3[%c0_3, %c0_4] : memref<4x1xf32, #tpu.memory_space<vmem>>, vector<4x1xf32>
    %3 = vector.extract_strided_slice %0 {offsets = [0, 0], sizes = [4, 612], strides = [1, 1]} : vector<8x612xf32> to vector<4x612xf32>
    %4 = vector.extract_strided_slice %3 {offsets = [0, 0], sizes = [1, 612], strides = [1, 1]} : vector<4x612xf32> to vector<1x612xf32>
    %5 = vector.extract_strided_slice %1 {offsets = [0, 0], sizes = [4, 1], strides = [1, 1]} : vector<4x4xf32> to vector<4x1xf32>
    %6 = vector.broadcast %4 : vector<1x612xf32> to vector<4x612xf32>
    %7 = vector.broadcast %5 : vector<4x1xf32> to vector<4x612xf32>
    %8 = arith.mulf %6, %7 : vector<4x612xf32>
    %9 = vector.extract_strided_slice %3 {offsets = [1, 0], sizes = [1, 612], strides = [1, 1]} : vector<4x612xf32> to vector<1x612xf32>
    %10 = vector.extract_strided_slice %1 {offsets = [0, 1], sizes = [4, 1], strides = [1, 1]} : vector<4x4xf32> to vector<4x1xf32>
    %11 = vector.broadcast %9 : vector<1x612xf32> to vector<4x612xf32>
    %12 = vector.broadcast %10 : vector<4x1xf32> to vector<4x612xf32>
    %13 = arith.mulf %11, %12 : vector<4x612xf32>
    %14 = arith.addf %8, %13 : vector<4x612xf32>
    %15 = vector.extract_strided_slice %3 {offsets = [2, 0], sizes = [1, 612], strides = [1, 1]} : vector<4x612xf32> to vector<1x612xf32>
    %16 = vector.extract_strided_slice %1 {offsets = [0, 2], sizes = [4, 1], strides = [1, 1]} : vector<4x4xf32> to vector<4x1xf32>
    %17 = vector.broadcast %15 : vector<1x612xf32> to vector<4x612xf32>
    %18 = vector.broadcast %16 : vector<4x1xf32> to vector<4x612xf32>
    %19 = arith.mulf %17, %18 : vector<4x612xf32>
    %20 = arith.addf %14, %19 : vector<4x612xf32>
    %21 = vector.extract_strided_slice %3 {offsets = [3, 0], sizes = [1, 612], strides = [1, 1]} : vector<4x612xf32> to vector<1x612xf32>
    %22 = vector.extract_strided_slice %1 {offsets = [0, 3], sizes = [4, 1], strides = [1, 1]} : vector<4x4xf32> to vector<4x1xf32>
    %23 = vector.broadcast %21 : vector<1x612xf32> to vector<4x612xf32>
    %24 = vector.broadcast %22 : vector<4x1xf32> to vector<4x612xf32>
    %25 = arith.mulf %23, %24 : vector<4x612xf32>
    %26 = arith.addf %20, %25 : vector<4x612xf32>
    %27 = vector.broadcast %2 : vector<4x1xf32> to vector<4x612xf32>
    %28 = arith.addf %26, %27 : vector<4x612xf32>
    %cst = arith.constant 0.000000e+00 : f32
    %29 = vector.broadcast %cst : f32 to vector<4x612xf32>
    %30 = arith.maximumf %28, %29 : vector<4x612xf32>
    %c0_5 = arith.constant 0 : index
    %c0_6 = arith.constant 0 : index
    %31 = vector.load %arg4[%c0_5, %c0_6] : memref<8x612xf32, #tpu.memory_space<vmem>>, vector<4x612xf32>
    tpu.vector_store %arg4[%c0_5, %c0_6], %30 {strides = array<i32>} : memref<8x612xf32, #tpu.memory_space<vmem>>, vector<4x612xf32>,
    %32 = vector.extract_strided_slice %0 {offsets = [4, 0], sizes = [4, 612], strides = [1, 1]} : vector<8x612xf32> to vector<4x612xf32>
    %33 = vector.extract_strided_slice %32 {offsets = [0, 0], sizes = [1, 612], strides = [1, 1]} : vector<4x612xf32> to vector<1x612xf32>
    %34 = vector.extract_strided_slice %1 {offsets = [0, 0], sizes = [4, 1], strides = [1, 1]} : vector<4x4xf32> to vector<4x1xf32>
    %35 = vector.broadcast %33 : vector<1x612xf32> to vector<4x612xf32>
    %36 = vector.broadcast %34 : vector<4x1xf32> to vector<4x612xf32>
    %37 = arith.mulf %35, %36 : vector<4x612xf32>
    %38 = vector.extract_strided_slice %32 {offsets = [1, 0], sizes = [1, 612], strides = [1, 1]} : vector<4x612xf32> to vector<1x612xf32>
    %39 = vector.extract_strided_slice %1 {offsets = [0, 1], sizes = [4, 1], strides = [1, 1]} : vector<4x4xf32> to vector<4x1xf32>
    %40 = vector.broadcast %38 : vector<1x612xf32> to vector<4x612xf32>
    %41 = vector.broadcast %39 : vector<4x1xf32> to vector<4x612xf32>
    %42 = arith.mulf %40, %41 : vector<4x612xf32>
    %43 = arith.addf %37, %42 : vector<4x612xf32>
    %44 = vector.extract_strided_slice %32 {offsets = [2, 0], sizes = [1, 612], strides = [1, 1]} : vector<4x612xf32> to vector<1x612xf32>
    %45 = vector.extract_strided_slice %1 {offsets = [0, 2], sizes = [4, 1], strides = [1, 1]} : vector<4x4xf32> to vector<4x1xf32>
    %46 = vector.broadcast %44 : vector<1x612xf32> to vector<4x612xf32>
    %47 = vector.broadcast %45 : vector<4x1xf32> to vector<4x612xf32>
    %48 = arith.mulf %46, %47 : vector<4x612xf32>
    %49 = arith.addf %43, %48 : vector<4x612xf32>
    %50 = vector.extract_strided_slice %32 {offsets = [3, 0], sizes = [1, 612], strides = [1, 1]} : vector<4x612xf32> to vector<1x612xf32>
    %51 = vector.extract_strided_slice %1 {offsets = [0, 3], sizes = [4, 1], strides = [1, 1]} : vector<4x4xf32> to vector<4x1xf32>
    %52 = vector.broadcast %50 : vector<1x612xf32> to vector<4x612xf32>
    %53 = vector.broadcast %51 : vector<4x1xf32> to vector<4x612xf32>
    %54 = arith.mulf %52, %53 : vector<4x612xf32>
    %55 = arith.addf %49, %54 : vector<4x612xf32>
    %56 = vector.broadcast %2 : vector<4x1xf32> to vector<4x612xf32>
    %57 = arith.addf %55, %56 : vector<4x612xf32>
    %cst_7 = arith.constant 0.000000e+00 : f32
    %58 = vector.broadcast %cst_7 : f32 to vector<4x612xf32>
    %59 = arith.maximumf %57, %58 : vector<4x612xf32>
    %c4 = arith.constant 4 : index
    %c0_8 = arith.constant 0 : index
    %60 = vector.load %arg4[%c4, %c0_8] : memref<8x612xf32, #tpu.memory_space<vmem>>, vector<4x612xf32>
    tpu.vector_store %arg4[%c4, %c0_8], %59 {strides = array<i32>} : memref<8x612xf32, #tpu.memory_space<vmem>>, vector<4x612xf32>,
    return
  }
  func.func @transform_0(%arg0: i32) -> (i32, i32) {
    %c0_i32 = arith.constant 0 : i32
    %c0_i32_0 = arith.constant 0 : i32
    %c0_i32_1 = arith.constant 0 : i32
    return %c0_i32, %c0_i32_0 : i32, i32
  }
  func.func @transform_1(%arg0: i32) -> (i32, i32) {
    %c0_i32 = arith.constant 0 : i32
    %c0_i32_0 = arith.constant 0 : i32
    %c0_i32_1 = arith.constant 0 : i32
    return %c0_i32, %c0_i32_0 : i32, i32
  }
  func.func @transform_2(%arg0: i32) -> (i32, i32) {
    %c0_i32 = arith.constant 0 : i32
    %c0_i32_0 = arith.constant 0 : i32
    %c0_i32_1 = arith.constant 0 : i32
    return %c0_i32, %c0_i32_0 : i32, i32
  }
  func.func @transform_3(%arg0: i32) -> (i32, i32) {
    %c0_i32 = arith.constant 0 : i32
    %c0_i32_0 = arith.constant 0 : i32
    %c0_i32_1 = arith.constant 0 : i32
    return %c0_i32, %c0_i32_0 : i32, i32
  }
}

module attributes {stable_mosaic.version = 11 : i64} {
  func.func @_global_combine_kernel(%arg0: i32, %arg1: memref<4x1024xf32, #tpu.memory_space<vmem>>, %arg2: memref<8x1024xf32, #tpu.memory_space<vmem>>, %arg3: memref<4x2xf32, #tpu.memory_space<vmem>>, %arg4: memref<4x1xf32, #tpu.memory_space<vmem>>, %arg5: memref<8x1024xf32, #tpu.memory_space<vmem>>) attributes {dimension_semantics = [#tpu.dimension_semantics<arbitrary>], iteration_bounds = array<i64: 1>, scalar_prefetch = 0 : i64, scratch_operands = 0 : i64, tpu.core_type = #tpu.core_type<tc>, window_params = [{pipeline_mode = #tpu.pipeline_mode<synchronous>, transform_indices = @transform_0, window_bounds = array<i64: 4, 1024>}, {pipeline_mode = #tpu.pipeline_mode<synchronous>, transform_indices = @transform_1, window_bounds = array<i64: 8, 1024>}, {pipeline_mode = #tpu.pipeline_mode<synchronous>, transform_indices = @transform_2, window_bounds = array<i64: 4, 2>}, {pipeline_mode = #tpu.pipeline_mode<synchronous>, transform_indices = @transform_3, window_bounds = array<i64: 4, 1>}, {pipeline_mode = #tpu.pipeline_mode<synchronous>, transform_indices = @transform_4, window_bounds = array<i64: 8, 1024>}]} {
    %c0 = arith.constant 0 : index
    %c0_0 = arith.constant 0 : index
    %0 = vector.load %arg1[%c0, %c0_0] : memref<4x1024xf32, #tpu.memory_space<vmem>>, vector<4x1024xf32>
    %c0_1 = arith.constant 0 : index
    %c0_2 = arith.constant 0 : index
    %1 = vector.load %arg2[%c0_1, %c0_2] : memref<8x1024xf32, #tpu.memory_space<vmem>>, vector<8x1024xf32>
    %c0_3 = arith.constant 0 : index
    %c0_4 = arith.constant 0 : index
    %2 = vector.load %arg3[%c0_3, %c0_4] : memref<4x2xf32, #tpu.memory_space<vmem>>, vector<4x2xf32>
    %c0_5 = arith.constant 0 : index
    %c0_6 = arith.constant 0 : index
    %3 = vector.load %arg4[%c0_5, %c0_6] : memref<4x1xf32, #tpu.memory_space<vmem>>, vector<4x1xf32>
    %4 = vector.extract_strided_slice %0 {offsets = [0, 0], sizes = [2, 1024], strides = [1, 1]} : vector<4x1024xf32> to vector<2x1024xf32>
    %5 = vector.extract_strided_slice %4 {offsets = [0, 0], sizes = [1, 1024], strides = [1, 1]} : vector<2x1024xf32> to vector<1x1024xf32>
    %6 = vector.extract_strided_slice %2 {offsets = [0, 0], sizes = [4, 1], strides = [1, 1]} : vector<4x2xf32> to vector<4x1xf32>
    %7 = vector.broadcast %5 : vector<1x1024xf32> to vector<4x1024xf32>
    %8 = vector.broadcast %6 : vector<4x1xf32> to vector<4x1024xf32>
    %9 = arith.mulf %7, %8 : vector<4x1024xf32>
    %10 = vector.extract_strided_slice %4 {offsets = [1, 0], sizes = [1, 1024], strides = [1, 1]} : vector<2x1024xf32> to vector<1x1024xf32>
    %11 = vector.extract_strided_slice %2 {offsets = [0, 1], sizes = [4, 1], strides = [1, 1]} : vector<4x2xf32> to vector<4x1xf32>
    %12 = vector.broadcast %10 : vector<1x1024xf32> to vector<4x1024xf32>
    %13 = vector.broadcast %11 : vector<4x1xf32> to vector<4x1024xf32>
    %14 = arith.mulf %12, %13 : vector<4x1024xf32>
    %15 = arith.addf %9, %14 : vector<4x1024xf32>
    %16 = vector.extract_strided_slice %1 {offsets = [0, 0], sizes = [4, 1024], strides = [1, 1]} : vector<8x1024xf32> to vector<4x1024xf32>
    %17 = arith.addf %15, %16 : vector<4x1024xf32>
    %18 = vector.broadcast %3 : vector<4x1xf32> to vector<4x1024xf32>
    %19 = arith.addf %17, %18 : vector<4x1024xf32>
    %cst = arith.constant 0.000000e+00 : f32
    %20 = vector.broadcast %cst : f32 to vector<4x1024xf32>
    %21 = arith.maximumf %19, %20 : vector<4x1024xf32>
    %c0_7 = arith.constant 0 : index
    %c0_8 = arith.constant 0 : index
    %22 = vector.load %arg5[%c0_7, %c0_8] : memref<8x1024xf32, #tpu.memory_space<vmem>>, vector<4x1024xf32>
    tpu.vector_store %arg5[%c0_7, %c0_8], %21 {strides = array<i32>} : memref<8x1024xf32, #tpu.memory_space<vmem>>, vector<4x1024xf32>,
    %23 = vector.extract_strided_slice %0 {offsets = [2, 0], sizes = [2, 1024], strides = [1, 1]} : vector<4x1024xf32> to vector<2x1024xf32>
    %24 = vector.extract_strided_slice %23 {offsets = [0, 0], sizes = [1, 1024], strides = [1, 1]} : vector<2x1024xf32> to vector<1x1024xf32>
    %25 = vector.extract_strided_slice %2 {offsets = [0, 0], sizes = [4, 1], strides = [1, 1]} : vector<4x2xf32> to vector<4x1xf32>
    %26 = vector.broadcast %24 : vector<1x1024xf32> to vector<4x1024xf32>
    %27 = vector.broadcast %25 : vector<4x1xf32> to vector<4x1024xf32>
    %28 = arith.mulf %26, %27 : vector<4x1024xf32>
    %29 = vector.extract_strided_slice %23 {offsets = [1, 0], sizes = [1, 1024], strides = [1, 1]} : vector<2x1024xf32> to vector<1x1024xf32>
    %30 = vector.extract_strided_slice %2 {offsets = [0, 1], sizes = [4, 1], strides = [1, 1]} : vector<4x2xf32> to vector<4x1xf32>
    %31 = vector.broadcast %29 : vector<1x1024xf32> to vector<4x1024xf32>
    %32 = vector.broadcast %30 : vector<4x1xf32> to vector<4x1024xf32>
    %33 = arith.mulf %31, %32 : vector<4x1024xf32>
    %34 = arith.addf %28, %33 : vector<4x1024xf32>
    %35 = vector.extract_strided_slice %1 {offsets = [4, 0], sizes = [4, 1024], strides = [1, 1]} : vector<8x1024xf32> to vector<4x1024xf32>
    %36 = arith.addf %34, %35 : vector<4x1024xf32>
    %37 = vector.broadcast %3 : vector<4x1xf32> to vector<4x1024xf32>
    %38 = arith.addf %36, %37 : vector<4x1024xf32>
    %cst_9 = arith.constant 0.000000e+00 : f32
    %39 = vector.broadcast %cst_9 : f32 to vector<4x1024xf32>
    %40 = arith.maximumf %38, %39 : vector<4x1024xf32>
    %c4 = arith.constant 4 : index
    %c0_10 = arith.constant 0 : index
    %41 = vector.load %arg5[%c4, %c0_10] : memref<8x1024xf32, #tpu.memory_space<vmem>>, vector<4x1024xf32>
    tpu.vector_store %arg5[%c4, %c0_10], %40 {strides = array<i32>} : memref<8x1024xf32, #tpu.memory_space<vmem>>, vector<4x1024xf32>,
    return
  }
  func.func @transform_0(%arg0: i32) -> (i32, i32) {
    %c0_i32 = arith.constant 0 : i32
    %c0_i32_0 = arith.constant 0 : i32
    %c0_i32_1 = arith.constant 0 : i32
    return %c0_i32, %c0_i32_0 : i32, i32
  }
  func.func @transform_1(%arg0: i32) -> (i32, i32) {
    %c0_i32 = arith.constant 0 : i32
    %c0_i32_0 = arith.constant 0 : i32
    %c0_i32_1 = arith.constant 0 : i32
    return %c0_i32, %c0_i32_0 : i32, i32
  }
  func.func @transform_2(%arg0: i32) -> (i32, i32) {
    %c0_i32 = arith.constant 0 : i32
    %c0_i32_0 = arith.constant 0 : i32
    %c0_i32_1 = arith.constant 0 : i32
    return %c0_i32, %c0_i32_0 : i32, i32
  }
  func.func @transform_3(%arg0: i32) -> (i32, i32) {
    %c0_i32 = arith.constant 0 : i32
    %c0_i32_0 = arith.constant 0 : i32
    %c0_i32_1 = arith.constant 0 : i32
    return %c0_i32, %c0_i32_0 : i32, i32
  }
  func.func @transform_4(%arg0: i32) -> (i32, i32) {
    %c0_i32 = arith.constant 0 : i32
    %c0_i32_0 = arith.constant 0 : i32
    %c0_i32_1 = arith.constant 0 : i32
    return %c0_i32, %c0_i32_0 : i32, i32
  }
}

</mosaic_0001>

<llo_original>
// kernel: ffc_resnet_block1.6
$region0: #{ffc_resnet_block1.6}
  #allocation0 [shape = 'u32[]', space=smem, size = 0x4, offset = 0x4, fixed_abs, tag = 'smem constant byte address 0x4 - core index']
  #allocation1 [shape = 'u32[144,128]{1,0:T(1,128)}', space=vmem, size = 0x12000, scoped, tag = 'internal scratch']
  %s0 = inlined_call_operand.vmem [shape: f32[8,1090], index: 0, kind: input, shape index: {}]
  %s1 = inlined_call_operand.vmem [shape: f32[8,1090], index: 1, kind: input, shape index: {}]
  %s2 = inlined_call_operand.vmem [shape: f32[27,8,1], index: 2, kind: input, shape index: {}]
  %s3 = inlined_call_operand.vmem [shape: f32[4,4], index: 3, kind: input, shape index: {}]
  %s4 = inlined_call_operand.vmem [shape: f32[4,4], index: 4, kind: input, shape index: {}]
  %s5 = inlined_call_operand.vmem [shape: f32[4,4], index: 5, kind: input, shape index: {}]
  %s6 = inlined_call_operand.vmem [shape: f32[2,4], index: 6, kind: input, shape index: {}]
  %s7 = inlined_call_operand.vmem [shape: f32[4,1], index: 7, kind: input, shape index: {}]
  %s8 = inlined_call_operand.vmem [shape: f32[2,1], index: 8, kind: input, shape index: {}]
  %s9 = inlined_call_operand.vmem [shape: f32[8,1024], index: 9, kind: output, shape index: {0}]
  %s10 = inlined_call_operand.vmem [shape: f32[8,1024], index: 10, kind: output, shape index: {1}]
  %s11 = inlined_call_operand.vmem [shape: f32[4,1024], index: 11, kind: output, shape index: {2}]
  %12 = xla_tuple %s9, %s10, %s11
  %s13 = sld [smem:[#allocation0]]
  $region62: #{ffc_resnet_block1.6} parent=0
    _
  %s15 = ssub.s32 1, %s13
  %s16 = scalar_select 0, %s15, %s13
  // Predicated region
  $region2: #{ffc_resnet_block1.6} parent=0 // pred_check
    _
  $region3: #{ffc_resnet_block1.6} parent=0 // pred_check_branch
    %18 = sbr.rel (0) target = $region5
  $region4: #{ffc_resnet_block1.6} parent=0 // pred_region
    _
  $region5: #{ffc_resnet_block1.6} parent=0 // pred_fallthru
    _
  // Predicated region
  $region6: #{ffc_resnet_block1.6} parent=0 // pred_check
    _
  $region7: #{ffc_resnet_block1.6} parent=0 // pred_check_branch
    %20 = sbr.rel (0) target = $region9
  $region8: #{ffc_resnet_block1.6} parent=0 // pred_region
    _
  $region9: #{ffc_resnet_block1.6} parent=0 // pred_fallthru
    _
  // Predicated region
  $region10: #{ffc_resnet_block1.6} parent=0 // pred_check
    _
  $region11: #{ffc_resnet_block1.6} parent=0 // pred_check_branch
    %22 = sbr.rel (0) target = $region13
  $region12: #{ffc_resnet_block1.6} parent=0 // pred_region
    _
  $region13: #{ffc_resnet_block1.6} parent=0 // pred_fallthru
    _
  // Predicated region
  $region14: #{ffc_resnet_block1.6} parent=0 // pred_check
    _
  $region15: #{ffc_resnet_block1.6} parent=0 // pred_check_branch
    %24 = sbr.rel (0) target = $region17
  $region16: #{ffc_resnet_block1.6} parent=0 // pred_region
    _
  $region17: #{ffc_resnet_block1.6} parent=0 // pred_fallthru
    _
  // Predicated region
  $region18: #{ffc_resnet_block1.6} parent=0 // pred_check
    _
  $region19: #{ffc_resnet_block1.6} parent=0 // pred_check_branch
    %26 = sbr.rel (0) target = $region21
  $region20: #{ffc_resnet_block1.6} parent=0 // pred_region
    _
  $region21: #{ffc_resnet_block1.6} parent=0 // pred_fallthru
    _
  // Predicated region
  $region22: #{ffc_resnet_block1.6} parent=0 // pred_check
    _
  $region23: #{ffc_resnet_block1.6} parent=0 // pred_check_branch
    %28 = sbr.rel (0) target = $region25
  $region24: #{ffc_resnet_block1.6} parent=0 // pred_region
    _
  $region25: #{ffc_resnet_block1.6} parent=0 // pred_fallthru
    _
  // Predicated region
  $region26: #{ffc_resnet_block1.6} parent=0 // pred_check
    _
  $region27: #{ffc_resnet_block1.6} parent=0 // pred_check_branch
    %30 = sbr.rel (0) target = $region29
  $region28: #{ffc_resnet_block1.6} parent=0 // pred_region
    _
  $region29: #{ffc_resnet_block1.6} parent=0 // pred_fallthru
    _
  // Predicated region
  $region30: #{ffc_resnet_block1.6} parent=0 // pred_check
    _
  $region31: #{ffc_resnet_block1.6} parent=0 // pred_check_branch
    %32 = sbr.rel (0) target = $region33
  $region32: #{ffc_resnet_block1.6} parent=0 // pred_region
    _
  $region33: #{ffc_resnet_block1.6} parent=0 // pred_fallthru
    _
  // Predicated region
  $region34: #{ffc_resnet_block1.6} parent=0 // pred_check
    _
  $region35: #{ffc_resnet_block1.6} parent=0 // pred_check_branch
    %34 = sbr.rel (0) target = $region37
  $region36: #{ffc_resnet_block1.6} parent=0 // pred_region
    _
  $region37: #{ffc_resnet_block1.6} parent=0 // pred_fallthru
    _
  %v35 = vld [vmem:[%s0] sm:$0xff]
  %v36 = vld [vmem:[%s0 + $0x8] sm:$0xff]
  %v37 = vld [vmem:[%s0 + $0x10] sm:$0xff]
  %v38 = vld [vmem:[%s0 + $0x18] sm:$0xff]
  %v39 = vld [vmem:[%s0 + $0x20] sm:$0xff]
  %v40 = vld [vmem:[%s0 + $0x28] sm:$0xff]
  %v41 = vld [vmem:[%s0 + $0x30] sm:$0xff]
  %v42 = vld [vmem:[%s0 + $0x38] sm:$0xff]
  %v43 = vld [vmem:[%s0 + $0x40] sm:$0xff]
  %v44 = vld [vmem:[%s1] sm:$0xff]
  %v45 = vld [vmem:[%s1 + $0x8] sm:$0xff]
  %v46 = vld [vmem:[%s1 + $0x10] sm:$0xff]
  %v47 = vld [vmem:[%s1 + $0x18] sm:$0xff]
  %v48 = vld [vmem:[%s1 + $0x20] sm:$0xff]
  %v49 = vld [vmem:[%s1 + $0x28] sm:$0xff]
  %v50 = vld [vmem:[%s1 + $0x30] sm:$0xff]
  %v51 = vld [vmem:[%s1 + $0x38] sm:$0xff]
  %v52 = vld [vmem:[%s1 + $0x40] sm:$0xff]
  %v53 = vlaneseq
  %v54 = vand.u32 %v53, 127
  %v55 = vadd.s32 %v54, 128
  %v56 = vadd.s32 %v54, 256
  %v57 = vadd.s32 %v54, 384
  %v58 = vadd.s32 %v54, 512
  %v59 = vadd.s32 %v54, 640
  %v60 = vadd.s32 %v54, 768
  %v61 = vadd.s32 %v54, 896
  %v62 = vand.u32 %v54, 31
  %v63 = vand.u32 %v55, 31
  %v64 = vand.u32 %v56, 31
  %v65 = vand.u32 %v57, 31
  %v66 = vand.u32 %v58, 31
  %v67 = vand.u32 %v59, 31
  %v68 = vand.u32 %v60, 31
  %v69 = vand.u32 %v61, 31
  %vm70 = vcmp.ge.s32.totalorder %v62, 1
  %vm71 = vcmp.ge.s32.totalorder %v63, 1
  %vm72 = vcmp.ge.s32.totalorder %v64, 1
  %vm73 = vcmp.ge.s32.totalorder %v65, 1
  %vm74 = vcmp.ge.s32.totalorder %v66, 1
  %vm75 = vcmp.ge.s32.totalorder %v67, 1
  %vm76 = vcmp.ge.s32.totalorder %v68, 1
  %vm77 = vcmp.ge.s32.totalorder %v69, 1
  %vm78 = vcmp.le.s32.totalorder %v62, 30
  %vm79 = vcmp.le.s32.totalorder %v63, 30
  %vm80 = vcmp.le.s32.totalorder %v64, 30
  %vm81 = vcmp.le.s32.totalorder %v65, 30
  %vm82 = vcmp.le.s32.totalorder %v66, 30
  %vm83 = vcmp.le.s32.totalorder %v67, 30
  %vm84 = vcmp.le.s32.totalorder %v68, 30
  %vm85 = vcmp.le.s32.totalorder %v69, 30
  %v86 = vsel %vm70, %v35, 0.0
  %v87 = vsel %vm71, %v36, 0.0
  %v88 = vsel %vm72, %v37, 0.0
  %v89 = vsel %vm73, %v38, 0.0
  %v90 = vsel %vm74, %v39, 0.0
  %v91 = vsel %vm75, %v40, 0.0
  %v92 = vsel %vm76, %v41, 0.0
  %v93 = vsel %vm77, %v42, 0.0
  %v94 = vsel %vm70, %v44, 0.0
  %v95 = vsel %vm71, %v45, 0.0
  %v96 = vsel %vm72, %v46, 0.0
  %v97 = vsel %vm73, %v47, 0.0
  %v98 = vsel %vm74, %v48, 0.0
  %v99 = vsel %vm75, %v49, 0.0
  %v100 = vsel %vm76, %v50, 0.0
  %v101 = vsel %vm77, %v51, 0.0
  %v102 = vld [vmem:[%s2] sm:$0xff]
  %104 = vset.pattern.permute.xlu0 0
  %105 = vperm.xlu0 %104, %v102
  %v106 = vpop.permute.xlu0 %105
  %v108 = vmul.f32 %v86, %v106
  %v109 = vmul.f32 %v87, %v106
  %v110 = vmul.f32 %v88, %v106
  %v111 = vmul.f32 %v89, %v106
  %v112 = vmul.f32 %v90, %v106
  %v113 = vmul.f32 %v91, %v106
  %v114 = vmul.f32 %v92, %v106
  %v115 = vmul.f32 %v93, %v106
  %v116 = vadd.f32 %v108, 0.0
  %v117 = vadd.f32 %v109, 0.0
  %v118 = vadd.f32 %v110, 0.0
  %v119 = vadd.f32 %v111, 0.0
  %v120 = vadd.f32 %v112, 0.0
  %v121 = vadd.f32 %v113, 0.0
  %v122 = vadd.f32 %v114, 0.0
  %v123 = vadd.f32 %v115, 0.0
  %s124 = scalar_lea.vmem %s2, 72
  %v125 = vld [vmem:[%s124] sm:$0xff]
  %127 = vset.pattern.permute.xlu0 0
  %128 = vperm.xlu0 %127, %v125
  %v129 = vpop.permute.xlu0 %128
  %v131 = vmul.f32 %v94, %v129
  %v132 = vmul.f32 %v95, %v129
  %v133 = vmul.f32 %v96, %v129
  %v134 = vmul.f32 %v97, %v129
  %v135 = vmul.f32 %v98, %v129
  %v136 = vmul.f32 %v99, %v129
  %v137 = vmul.f32 %v100, %v129
  %v138 = vmul.f32 %v101, %v129
  %v139 = vadd.f32 %v131, 0.0
  %v140 = vadd.f32 %v132, 0.0
  %v141 = vadd.f32 %v133, 0.0
  %v142 = vadd.f32 %v134, 0.0
  %v143 = vadd.f32 %v135, 0.0
  %v144 = vadd.f32 %v136, 0.0
  %v145 = vadd.f32 %v137, 0.0
  %v146 = vadd.f32 %v138, 0.0
  %s147 = scalar_lea.vmem %s2, 144
  %v148 = vld [vmem:[%s147] sm:$0xff]
  %150 = vset.pattern.permute.xlu0 0
  %151 = vperm.xlu0 %150, %v148
  %v152 = vpop.permute.xlu0 %151
  %v154 = vmul.f32 %v86, %v152
  %v155 = vmul.f32 %v87, %v152
  %v156 = vmul.f32 %v88, %v152
  %v157 = vmul.f32 %v89, %v152
  %v158 = vmul.f32 %v90, %v152
  %v159 = vmul.f32 %v91, %v152
  %v160 = vmul.f32 %v92, %v152
  %v161 = vmul.f32 %v93, %v152
  %v162 = vadd.f32 %v154, 0.0
  %v163 = vadd.f32 %v155, 0.0
  %v164 = vadd.f32 %v156, 0.0
  %v165 = vadd.f32 %v157, 0.0
  %v166 = vadd.f32 %v158, 0.0
  %v167 = vadd.f32 %v159, 0.0
  %v168 = vadd.f32 %v160, 0.0
  %v169 = vadd.f32 %v161, 0.0
  %s170 = scalar_lea.vmem %s2, 8
  %v171 = vld [vmem:[%s170] sm:$0xff]
  %173 = vset.pattern.permute.xlu0 0
  %174 = vperm.xlu0 %173, %v171
  %v175 = vpop.permute.xlu0 %174
  %v177 = vmul.f32 %v35, %v175
  %v178 = vmul.f32 %v36, %v175
  %v179 = vmul.f32 %v37, %v175
  %v180 = vmul.f32 %v38, %v175
  %v181 = vmul.f32 %v39, %v175
  %v182 = vmul.f32 %v40, %v175
  %v183 = vmul.f32 %v41, %v175
  %v184 = vmul.f32 %v42, %v175
  %v185 = vmul.f32 %v43, %v175
  %195 = vrot.lane.b32.xlu0 %v177, 127
  %v196 = vpop.permute.xlu0 %195
  %197 = vrot.lane.b32.xlu0 %v178, 127
  %v198 = vpop.permute.xlu0 %197
  %199 = vrot.lane.b32.xlu0 %v179, 127
  %v200 = vpop.permute.xlu0 %199
  %201 = vrot.lane.b32.xlu0 %v180, 127
  %v202 = vpop.permute.xlu0 %201
  %203 = vrot.lane.b32.xlu0 %v181, 127
  %v204 = vpop.permute.xlu0 %203
  %205 = vrot.lane.b32.xlu0 %v182, 127
  %v206 = vpop.permute.xlu0 %205
  %207 = vrot.lane.b32.xlu0 %v183, 127
  %v208 = vpop.permute.xlu0 %207
  %209 = vrot.lane.b32.xlu0 %v184, 127
  %v210 = vpop.permute.xlu0 %209
  %211 = vrot.lane.b32.xlu0 %v185, 127
  %v212 = vpop.permute.xlu0 %211
  %vm213 = vcmask 1039360
  %v214 = vsel %vm213, %v196, %v198
  %v215 = vsel %vm213, %v198, %v200
  %v216 = vsel %vm213, %v200, %v202
  %v217 = vsel %vm213, %v202, %v204
  %v218 = vsel %vm213, %v204, %v206
  %v219 = vsel %vm213, %v206, %v208
  %v220 = vsel %vm213, %v208, %v210
  %v221 = vsel %vm213, %v210, %v212
  %v230 = vadd.f32 %v116, %v214
  %v231 = vadd.f32 %v117, %v215
  %v232 = vadd.f32 %v118, %v216
  %v233 = vadd.f32 %v119, %v217
  %v234 = vadd.f32 %v120, %v218
  %v235 = vadd.f32 %v121, %v219
  %v236 = vadd.f32 %v122, %v220
  %v237 = vadd.f32 %v123, %v221
  %s238 = scalar_lea.vmem %s2, 80
  %v239 = vld [vmem:[%s238] sm:$0xff]
  %241 = vset.pattern.permute.xlu0 0
  %242 = vperm.xlu0 %241, %v239
  %v243 = vpop.permute.xlu0 %242
  %v245 = vmul.f32 %v44, %v243
  %v246 = vmul.f32 %v45, %v243
  %v247 = vmul.f32 %v46, %v243
  %v248 = vmul.f32 %v47, %v243
  %v249 = vmul.f32 %v48, %v243
  %v250 = vmul.f32 %v49, %v243
  %v251 = vmul.f32 %v50, %v243
  %v252 = vmul.f32 %v51, %v243
  %v253 = vmul.f32 %v52, %v243
  %263 = vrot.lane.b32.xlu0 %v245, 127
  %v264 = vpop.permute.xlu0 %263
  %265 = vrot.lane.b32.xlu0 %v246, 127
  %v266 = vpop.permute.xlu0 %265
  %267 = vrot.lane.b32.xlu0 %v247, 127
  %v268 = vpop.permute.xlu0 %267
  %269 = vrot.lane.b32.xlu0 %v248, 127
  %v270 = vpop.permute.xlu0 %269
  %271 = vrot.lane.b32.xlu0 %v249, 127
  %v272 = vpop.permute.xlu0 %271
  %273 = vrot.lane.b32.xlu0 %v250, 127
  %v274 = vpop.permute.xlu0 %273
  %275 = vrot.lane.b32.xlu0 %v251, 127
  %v276 = vpop.permute.xlu0 %275
  %277 = vrot.lane.b32.xlu0 %v252, 127
  %v278 = vpop.permute.xlu0 %277
  %279 = vrot.lane.b32.xlu0 %v253, 127
  %v280 = vpop.permute.xlu0 %279
  %v281 = vsel %vm213, %v264, %v266
  %v282 = vsel %vm213, %v266, %v268
  %v283 = vsel %vm213, %v268, %v270
  %v284 = vsel %vm213, %v270, %v272
  %v285 = vsel %vm213, %v272, %v274
  %v286 = vsel %vm213, %v274, %v276
  %v287 = vsel %vm213, %v276, %v278
  %v288 = vsel %vm213, %v278, %v280
  %v297 = vadd.f32 %v139, %v281
  %v298 = vadd.f32 %v140, %v282
  %v299 = vadd.f32 %v141, %v283
  %v300 = vadd.f32 %v142, %v284
  %v301 = vadd.f32 %v143, %v285
  %v302 = vadd.f32 %v144, %v286
  %v303 = vadd.f32 %v145, %v287
  %v304 = vadd.f32 %v146, %v288
  %s305 = scalar_lea.vmem %s2, 152
  %v306 = vld [vmem:[%s305] sm:$0xff]
  %308 = vset.pattern.permute.xlu0 0
  %309 = vperm.xlu0 %308, %v306
  %v310 = vpop.permute.xlu0 %309
  %v312 = vmul.f32 %v35, %v310
  %v313 = vmul.f32 %v36, %v310
  %v314 = vmul.f32 %v37, %v310
  %v315 = vmul.f32 %v38, %v310
  %v316 = vmul.f32 %v39, %v310
  %v317 = vmul.f32 %v40, %v310
  %v318 = vmul.f32 %v41, %v310
  %v319 = vmul.f32 %v42, %v310
  %v320 = vmul.f32 %v43, %v310
  %330 = vrot.lane.b32.xlu0 %v312, 127
  %v331 = vpop.permute.xlu0 %330
  %332 = vrot.lane.b32.xlu0 %v313, 127
  %v333 = vpop.permute.xlu0 %332
  %334 = vrot.lane.b32.xlu0 %v314, 127
  %v335 = vpop.permute.xlu0 %334
  %336 = vrot.lane.b32.xlu0 %v315, 127
  %v337 = vpop.permute.xlu0 %336
  %338 = vrot.lane.b32.xlu0 %v316, 127
  %v339 = vpop.permute.xlu0 %338
  %340 = vrot.lane.b32.xlu0 %v317, 127
  %v341 = vpop.permute.xlu0 %340
  %342 = vrot.lane.b32.xlu0 %v318, 127
  %v343 = vpop.permute.xlu0 %342
  %344 = vrot.lane.b32.xlu0 %v319, 127
  %v345 = vpop.permute.xlu0 %344
  %346 = vrot.lane.b32.xlu0 %v320, 127
  %v347 = vpop.permute.xlu0 %346
  %v348 = vsel %vm213, %v331, %v333
  %v349 = vsel %vm213, %v333, %v335
  %v350 = vsel %vm213, %v335, %v337
  %v351 = vsel %vm213, %v337, %v339
  %v352 = vsel %vm213, %v339, %v341
  %v353 = vsel %vm213, %v341, %v343
  %v354 = vsel %vm213, %v343, %v345
  %v355 = vsel %vm213, %v345, %v347
  %v364 = vadd.f32 %v162, %v348
  %v365 = vadd.f32 %v163, %v349
  %v366 = vadd.f32 %v164, %v350
  %v367 = vadd.f32 %v165, %v351
  %v368 = vadd.f32 %v166, %v352
  %v369 = vadd.f32 %v167, %v353
  %v370 = vadd.f32 %v168, %v354
  %v371 = vadd.f32 %v169, %v355
  %381 = vrot.lane.b32.xlu0 %v35, 126
  %v382 = vpop.permute.xlu0 %381
  %383 = vrot.lane.b32.xlu0 %v36, 126
  %v384 = vpop.permute.xlu0 %383
  %385 = vrot.lane.b32.xlu0 %v37, 126
  %v386 = vpop.permute.xlu0 %385
  %387 = vrot.lane.b32.xlu0 %v38, 126
  %v388 = vpop.permute.xlu0 %387
  %389 = vrot.lane.b32.xlu0 %v39, 126
  %v390 = vpop.permute.xlu0 %389
  %391 = vrot.lane.b32.xlu0 %v40, 126
  %v392 = vpop.permute.xlu0 %391
  %393 = vrot.lane.b32.xlu0 %v41, 126
  %v394 = vpop.permute.xlu0 %393
  %395 = vrot.lane.b32.xlu0 %v42, 126
  %v396 = vpop.permute.xlu0 %395
  %397 = vrot.lane.b32.xlu0 %v43, 126
  %v398 = vpop.permute.xlu0 %397
  %vm399 = vcmask 1031168
  %v400 = vsel %vm399, %v382, %v384
  %v401 = vsel %vm399, %v384, %v386
  %v402 = vsel %vm399, %v386, %v388
  %v403 = vsel %vm399, %v388, %v390
  %v404 = vsel %vm399, %v390, %v392
  %v405 = vsel %vm399, %v392, %v394
  %v406 = vsel %vm399, %v394, %v396
  %v407 = vsel %vm399, %v396, %v398
  %v416 = vsel %vm78, %v400, 0.0
  %v417 = vsel %vm79, %v401, 0.0
  %v418 = vsel %vm80, %v402, 0.0
  %v419 = vsel %vm81, %v403, 0.0
  %v420 = vsel %vm82, %v404, 0.0
  %v421 = vsel %vm83, %v405, 0.0
  %v422 = vsel %vm84, %v406, 0.0
  %v423 = vsel %vm85, %v407, 0.0
  %433 = vrot.lane.b32.xlu0 %v44, 126
  %v434 = vpop.permute.xlu0 %433
  %435 = vrot.lane.b32.xlu0 %v45, 126
  %v436 = vpop.permute.xlu0 %435
  %437 = vrot.lane.b32.xlu0 %v46, 126
  %v438 = vpop.permute.xlu0 %437
  %439 = vrot.lane.b32.xlu0 %v47, 126
  %v440 = vpop.permute.xlu0 %439
  %441 = vrot.lane.b32.xlu0 %v48, 126
  %v442 = vpop.permute.xlu0 %441
  %443 = vrot.lane.b32.xlu0 %v49, 126
  %v444 = vpop.permute.xlu0 %443
  %445 = vrot.lane.b32.xlu0 %v50, 126
  %v446 = vpop.permute.xlu0 %445
  %447 = vrot.lane.b32.xlu0 %v51, 126
  %v448 = vpop.permute.xlu0 %447
  %449 = vrot.lane.b32.xlu0 %v52, 126
  %v450 = vpop.permute.xlu0 %449
  %v451 = vsel %vm399, %v434, %v436
  %v452 = vsel %vm399, %v436, %v438
  %v453 = vsel %vm399, %v438, %v440
  %v454 = vsel %vm399, %v440, %v442
  %v455 = vsel %vm399, %v442, %v444
  %v456 = vsel %vm399, %v444, %v446
  %v457 = vsel %vm399, %v446, %v448
  %v458 = vsel %vm399, %v448, %v450
  %v467 = vsel %vm78, %v451, 0.0
  %v468 = vsel %vm79, %v452, 0.0
  %v469 = vsel %vm80, %v453, 0.0
  %v470 = vsel %vm81, %v454, 0.0
  %v471 = vsel %vm82, %v455, 0.0
  %v472 = vsel %vm83, %v456, 0.0
  %v473 = vsel %vm84, %v457, 0.0
  %v474 = vsel %vm85, %v458, 0.0
  %s475 = scalar_lea.vmem %s2, 16
  %v476 = vld [vmem:[%s475] sm:$0xff]
  %478 = vset.pattern.permute.xlu0 0
  %479 = vperm.xlu0 %478, %v476
  %v480 = vpop.permute.xlu0 %479
  %v482 = vmul.f32 %v416, %v480
  %v483 = vmul.f32 %v417, %v480
  %v484 = vmul.f32 %v418, %v480
  %v485 = vmul.f32 %v419, %v480
  %v486 = vmul.f32 %v420, %v480
  %v487 = vmul.f32 %v421, %v480
  %v488 = vmul.f32 %v422, %v480
  %v489 = vmul.f32 %v423, %v480
  %v490 = vadd.f32 %v230, %v482
  %v491 = vadd.f32 %v231, %v483
  %v492 = vadd.f32 %v232, %v484
  %v493 = vadd.f32 %v233, %v485
  %v494 = vadd.f32 %v234, %v486
  %v495 = vadd.f32 %v235, %v487
  %v496 = vadd.f32 %v236, %v488
  %v497 = vadd.f32 %v237, %v489
  %s498 = scalar_lea.vmem %s2, 88
  %v499 = vld [vmem:[%s498] sm:$0xff]
  %501 = vset.pattern.permute.xlu0 0
  %502 = vperm.xlu0 %501, %v499
  %v503 = vpop.permute.xlu0 %502
  %v505 = vmul.f32 %v467, %v503
  %v506 = vmul.f32 %v468, %v503
  %v507 = vmul.f32 %v469, %v503
  %v508 = vmul.f32 %v470, %v503
  %v509 = vmul.f32 %v471, %v503
  %v510 = vmul.f32 %v472, %v503
  %v511 = vmul.f32 %v473, %v503
  %v512 = vmul.f32 %v474, %v503
  %v513 = vadd.f32 %v297, %v505
  %v514 = vadd.f32 %v298, %v506
  %v515 = vadd.f32 %v299, %v507
  %v516 = vadd.f32 %v300, %v508
  %v517 = vadd.f32 %v301, %v509
  %v518 = vadd.f32 %v302, %v510
  %v519 = vadd.f32 %v303, %v511
  %v520 = vadd.f32 %v304, %v512
  %s521 = scalar_lea.vmem %s2, 160
  %v522 = vld [vmem:[%s521] sm:$0xff]
  %524 = vset.pattern.permute.xlu0 0
  %525 = vperm.xlu0 %524, %v522
  %v526 = vpop.permute.xlu0 %525
  %v528 = vmul.f32 %v416, %v526
  %v529 = vmul.f32 %v417, %v526
  %v530 = vmul.f32 %v418, %v526
  %v531 = vmul.f32 %v419, %v526
  %v532 = vmul.f32 %v420, %v526
  %v533 = vmul.f32 %v421, %v526
  %v534 = vmul.f32 %v422, %v526
  %v535 = vmul.f32 %v423, %v526
  %v536 = vadd.f32 %v364, %v528
  %v537 = vadd.f32 %v365, %v529
  %v538 = vadd.f32 %v366, %v530
  %v539 = vadd.f32 %v367, %v531
  %v540 = vadd.f32 %v368, %v532
  %v541 = vadd.f32 %v369, %v533
  %v542 = vadd.f32 %v370, %v534
  %v543 = vadd.f32 %v371, %v535
  %544 = vrot.lane.b32.xlu0 %v35, 96
  %v545 = vpop.permute.xlu0 %544
  %546 = vrot.lane.b32.xlu0 %v36, 96
  %v547 = vpop.permute.xlu0 %546
  %548 = vrot.lane.b32.xlu0 %v37, 96
  %v549 = vpop.permute.xlu0 %548
  %550 = vrot.lane.b32.xlu0 %v38, 96
  %v551 = vpop.permute.xlu0 %550
  %552 = vrot.lane.b32.xlu0 %v39, 96
  %v553 = vpop.permute.xlu0 %552
  %554 = vrot.lane.b32.xlu0 %v40, 96
  %v555 = vpop.permute.xlu0 %554
  %556 = vrot.lane.b32.xlu0 %v41, 96
  %v557 = vpop.permute.xlu0 %556
  %558 = vrot.lane.b32.xlu0 %v42, 96
  %v559 = vpop.permute.xlu0 %558
  %560 = vrot.lane.b32.xlu0 %v43, 96
  %v561 = vpop.permute.xlu0 %560
  %vm562 = vcmask 785408
  %v563 = vsel %vm562, %v545, %v547
  %v564 = vsel %vm562, %v547, %v549
  %v565 = vsel %vm562, %v549, %v551
  %v566 = vsel %vm562, %v551, %v553
  %v567 = vsel %vm562, %v553, %v555
  %v568 = vsel %vm562, %v555, %v557
  %v569 = vsel %vm562, %v557, %v559
  %v570 = vsel %vm562, %v559, %v561
  %v579 = vsel %vm70, %v563, 0.0
  %v580 = vsel %vm71, %v564, 0.0
  %v581 = vsel %vm72, %v565, 0.0
  %v582 = vsel %vm73, %v566, 0.0
  %v583 = vsel %vm74, %v567, 0.0
  %v584 = vsel %vm75, %v568, 0.0
  %v585 = vsel %vm76, %v569, 0.0
  %v586 = vsel %vm77, %v570, 0.0
  %587 = vrot.lane.b32.xlu0 %v44, 96
  %v588 = vpop.permute.xlu0 %587
  %589 = vrot.lane.b32.xlu0 %v45, 96
  %v590 = vpop.permute.xlu0 %589
  %591 = vrot.lane.b32.xlu0 %v46, 96
  %v592 = vpop.permute.xlu0 %591
  %593 = vrot.lane.b32.xlu0 %v47, 96
  %v594 = vpop.permute.xlu0 %593
  %595 = vrot.lane.b32.xlu0 %v48, 96
  %v596 = vpop.permute.xlu0 %595
  %597 = vrot.lane.b32.xlu0 %v49, 96
  %v598 = vpop.permute.xlu0 %597
  %599 = vrot.lane.b32.xlu0 %v50, 96
  %v600 = vpop.permute.xlu0 %599
  %601 = vrot.lane.b32.xlu0 %v51, 96
  %v602 = vpop.permute.xlu0 %601
  %603 = vrot.lane.b32.xlu0 %v52, 96
  %v604 = vpop.permute.xlu0 %603
  %v605 = vsel %vm562, %v588, %v590
  %v606 = vsel %vm562, %v590, %v592
  %v607 = vsel %vm562, %v592, %v594
  %v608 = vsel %vm562, %v594, %v596
  %v609 = vsel %vm562, %v596, %v598
  %v610 = vsel %vm562, %v598, %v600
  %v611 = vsel %vm562, %v600, %v602
  %v612 = vsel %vm562, %v602, %v604
  %v621 = vsel %vm70, %v605, 0.0
  %v622 = vsel %vm71, %v606, 0.0
  %v623 = vsel %vm72, %v607, 0.0
  %v624 = vsel %vm73, %v608, 0.0
  %v625 = vsel %vm74, %v609, 0.0
  %v626 = vsel %vm75, %v610, 0.0
  %v627 = vsel %vm76, %v611, 0.0
  %v628 = vsel %vm77, %v612, 0.0
  %s629 = scalar_lea.vmem %s2, 24
  %v630 = vld [vmem:[%s629] sm:$0xff]
  %632 = vset.pattern.permute.xlu0 0
  %633 = vperm.xlu0 %632, %v630
  %v634 = vpop.permute.xlu0 %633
  %v636 = vmul.f32 %v579, %v634
  %v637 = vmul.f32 %v580, %v634
  %v638 = vmul.f32 %v581, %v634
  %v639 = vmul.f32 %v582, %v634
  %v640 = vmul.f32 %v583, %v634
  %v641 = vmul.f32 %v584, %v634
  %v642 = vmul.f32 %v585, %v634
  %v643 = vmul.f32 %v586, %v634
  %v644 = vadd.f32 %v490, %v636
  %v645 = vadd.f32 %v491, %v637
  %v646 = vadd.f32 %v492, %v638
  %v647 = vadd.f32 %v493, %v639
  %v648 = vadd.f32 %v494, %v640
  %v649 = vadd.f32 %v495, %v641
  %v650 = vadd.f32 %v496, %v642
  %v651 = vadd.f32 %v497, %v643
  %s652 = scalar_lea.vmem %s2, 96
  %v653 = vld [vmem:[%s652] sm:$0xff]
  %655 = vset.pattern.permute.xlu0 0
  %656 = vperm.xlu0 %655, %v653
  %v657 = vpop.permute.xlu0 %656
  %v659 = vmul.f32 %v621, %v657
  %v660 = vmul.f32 %v622, %v657
  %v661 = vmul.f32 %v623, %v657
  %v662 = vmul.f32 %v624, %v657
  %v663 = vmul.f32 %v625, %v657
  %v664 = vmul.f32 %v626, %v657
  %v665 = vmul.f32 %v627, %v657
  %v666 = vmul.f32 %v628, %v657
  %v667 = vadd.f32 %v513, %v659
  %v668 = vadd.f32 %v514, %v660
  %v669 = vadd.f32 %v515, %v661
  %v670 = vadd.f32 %v516, %v662
  %v671 = vadd.f32 %v517, %v663
  %v672 = vadd.f32 %v518, %v664
  %v673 = vadd.f32 %v519, %v665
  %v674 = vadd.f32 %v520, %v666
  %s675 = scalar_lea.vmem %s2, 168
  %v676 = vld [vmem:[%s675] sm:$0xff]
  %678 = vset.pattern.permute.xlu0 0
  %679 = vperm.xlu0 %678, %v676
  %v680 = vpop.permute.xlu0 %679
  %v682 = vmul.f32 %v579, %v680
  %v683 = vmul.f32 %v580, %v680
  %v684 = vmul.f32 %v581, %v680
  %v685 = vmul.f32 %v582, %v680
  %v686 = vmul.f32 %v583, %v680
  %v687 = vmul.f32 %v584, %v680
  %v688 = vmul.f32 %v585, %v680
  %v689 = vmul.f32 %v586, %v680
  %v690 = vadd.f32 %v536, %v682
  %v691 = vadd.f32 %v537, %v683
  %v692 = vadd.f32 %v538, %v684
  %v693 = vadd.f32 %v539, %v685
  %v694 = vadd.f32 %v540, %v686
  %v695 = vadd.f32 %v541, %v687
  %v696 = vadd.f32 %v542, %v688
  %v697 = vadd.f32 %v543, %v689
  %s698 = scalar_lea.vmem %s2, 32
  %v699 = vld [vmem:[%s698] sm:$0xff]
  %701 = vset.pattern.permute.xlu0 0
  %702 = vperm.xlu0 %701, %v699
  %v703 = vpop.permute.xlu0 %702
  %v705 = vmul.f32 %v35, %v703
  %v706 = vmul.f32 %v36, %v703
  %v707 = vmul.f32 %v37, %v703
  %v708 = vmul.f32 %v38, %v703
  %v709 = vmul.f32 %v39, %v703
  %v710 = vmul.f32 %v40, %v703
  %v711 = vmul.f32 %v41, %v703
  %v712 = vmul.f32 %v42, %v703
  %v713 = vmul.f32 %v43, %v703
  %723 = vrot.lane.b32.xlu0 %v705, 95
  %v724 = vpop.permute.xlu0 %723
  %725 = vrot.lane.b32.xlu0 %v706, 95
  %v726 = vpop.permute.xlu0 %725
  %727 = vrot.lane.b32.xlu0 %v707, 95
  %v728 = vpop.permute.xlu0 %727
  %729 = vrot.lane.b32.xlu0 %v708, 95
  %v730 = vpop.permute.xlu0 %729
  %731 = vrot.lane.b32.xlu0 %v709, 95
  %v732 = vpop.permute.xlu0 %731
  %733 = vrot.lane.b32.xlu0 %v710, 95
  %v734 = vpop.permute.xlu0 %733
  %735 = vrot.lane.b32.xlu0 %v711, 95
  %v736 = vpop.permute.xlu0 %735
  %737 = vrot.lane.b32.xlu0 %v712, 95
  %v738 = vpop.permute.xlu0 %737
  %739 = vrot.lane.b32.xlu0 %v713, 95
  %v740 = vpop.permute.xlu0 %739
  %vm741 = vcmask 777216
  %v742 = vsel %vm741, %v724, %v726
  %v743 = vsel %vm741, %v726, %v728
  %v744 = vsel %vm741, %v728, %v730
  %v745 = vsel %vm741, %v730, %v732
  %v746 = vsel %vm741, %v732, %v734
  %v747 = vsel %vm741, %v734, %v736
  %v748 = vsel %vm741, %v736, %v738
  %v749 = vsel %vm741, %v738, %v740
  %v758 = vadd.f32 %v644, %v742
  %v759 = vadd.f32 %v645, %v743
  %v760 = vadd.f32 %v646, %v744
  %v761 = vadd.f32 %v647, %v745
  %v762 = vadd.f32 %v648, %v746
  %v763 = vadd.f32 %v649, %v747
  %v764 = vadd.f32 %v650, %v748
  %v765 = vadd.f32 %v651, %v749
  %s766 = scalar_lea.vmem %s2, 104
  %v767 = vld [vmem:[%s766] sm:$0xff]
  %769 = vset.pattern.permute.xlu0 0
  %770 = vperm.xlu0 %769, %v767
  %v771 = vpop.permute.xlu0 %770
  %v773 = vmul.f32 %v44, %v771
  %v774 = vmul.f32 %v45, %v771
  %v775 = vmul.f32 %v46, %v771
  %v776 = vmul.f32 %v47, %v771
  %v777 = vmul.f32 %v48, %v771
  %v778 = vmul.f32 %v49, %v771
  %v779 = vmul.f32 %v50, %v771
  %v780 = vmul.f32 %v51, %v771
  %v781 = vmul.f32 %v52, %v771
  %791 = vrot.lane.b32.xlu0 %v773, 95
  %v792 = vpop.permute.xlu0 %791
  %793 = vrot.lane.b32.xlu0 %v774, 95
  %v794 = vpop.permute.xlu0 %793
  %795 = vrot.lane.b32.xlu0 %v775, 95
  %v796 = vpop.permute.xlu0 %795
  %797 = vrot.lane.b32.xlu0 %v776, 95
  %v798 = vpop.permute.xlu0 %797
  %799 = vrot.lane.b32.xlu0 %v777, 95
  %v800 = vpop.permute.xlu0 %799
  %801 = vrot.lane.b32.xlu0 %v778, 95
  %v802 = vpop.permute.xlu0 %801
  %803 = vrot.lane.b32.xlu0 %v779, 95
  %v804 = vpop.permute.xlu0 %803
  %805 = vrot.lane.b32.xlu0 %v780, 95
  %v806 = vpop.permute.xlu0 %805
  %807 = vrot.lane.b32.xlu0 %v781, 95
  %v808 = vpop.permute.xlu0 %807
  %v809 = vsel %vm741, %v792, %v794
  %v810 = vsel %vm741, %v794, %v796
  %v811 = vsel %vm741, %v796, %v798
  %v812 = vsel %vm741, %v798, %v800
  %v813 = vsel %vm741, %v800, %v802
  %v814 = vsel %vm741, %v802, %v804
  %v815 = vsel %vm741, %v804, %v806
  %v816 = vsel %vm741, %v806, %v808
  %v825 = vadd.f32 %v667, %v809
  %v826 = vadd.f32 %v668, %v810
  %v827 = vadd.f32 %v669, %v811
  %v828 = vadd.f32 %v670, %v812
  %v829 = vadd.f32 %v671, %v813
  %v830 = vadd.f32 %v672, %v814
  %v831 = vadd.f32 %v673, %v815
  %v832 = vadd.f32 %v674, %v816
  %s833 = scalar_lea.vmem %s2, 176
  %v834 = vld [vmem:[%s833] sm:$0xff]
  %836 = vset.pattern.permute.xlu0 0
  %837 = vperm.xlu0 %836, %v834
  %v838 = vpop.permute.xlu0 %837
  %v840 = vmul.f32 %v35, %v838
  %v841 = vmul.f32 %v36, %v838
  %v842 = vmul.f32 %v37, %v838
  %v843 = vmul.f32 %v38, %v838
  %v844 = vmul.f32 %v39, %v838
  %v845 = vmul.f32 %v40, %v838
  %v846 = vmul.f32 %v41, %v838
  %v847 = vmul.f32 %v42, %v838
  %v848 = vmul.f32 %v43, %v838
  %858 = vrot.lane.b32.xlu0 %v840, 95
  %v859 = vpop.permute.xlu0 %858
  %860 = vrot.lane.b32.xlu0 %v841, 95
  %v861 = vpop.permute.xlu0 %860
  %862 = vrot.lane.b32.xlu0 %v842, 95
  %v863 = vpop.permute.xlu0 %862
  %864 = vrot.lane.b32.xlu0 %v843, 95
  %v865 = vpop.permute.xlu0 %864
  %866 = vrot.lane.b32.xlu0 %v844, 95
  %v867 = vpop.permute.xlu0 %866
  %868 = vrot.lane.b32.xlu0 %v845, 95
  %v869 = vpop.permute.xlu0 %868
  %870 = vrot.lane.b32.xlu0 %v846, 95
  %v871 = vpop.permute.xlu0 %870
  %872 = vrot.lane.b32.xlu0 %v847, 95
  %v873 = vpop.permute.xlu0 %872
  %874 = vrot.lane.b32.xlu0 %v848, 95
  %v875 = vpop.permute.xlu0 %874
  %v876 = vsel %vm741, %v859, %v861
  %v877 = vsel %vm741, %v861, %v863
  %v878 = vsel %vm741, %v863, %v865
  %v879 = vsel %vm741, %v865, %v867
  %v880 = vsel %vm741, %v867, %v869
  %v881 = vsel %vm741, %v869, %v871
  %v882 = vsel %vm741, %v871, %v873
  %v883 = vsel %vm741, %v873, %v875
  %v892 = vadd.f32 %v690, %v876
  %v893 = vadd.f32 %v691, %v877
  %v894 = vadd.f32 %v692, %v878
  %v895 = vadd.f32 %v693, %v879
  %v896 = vadd.f32 %v694, %v880
  %v897 = vadd.f32 %v695, %v881
  %v898 = vadd.f32 %v696, %v882
  %v899 = vadd.f32 %v697, %v883
  %900 = vrot.lane.b32.xlu0 %v35, 94
  %v901 = vpop.permute.xlu0 %900
  %902 = vrot.lane.b32.xlu0 %v36, 94
  %v903 = vpop.permute.xlu0 %902
  %904 = vrot.lane.b32.xlu0 %v37, 94
  %v905 = vpop.permute.xlu0 %904
  %906 = vrot.lane.b32.xlu0 %v38, 94
  %v907 = vpop.permute.xlu0 %906
  %908 = vrot.lane.b32.xlu0 %v39, 94
  %v909 = vpop.permute.xlu0 %908
  %910 = vrot.lane.b32.xlu0 %v40, 94
  %v911 = vpop.permute.xlu0 %910
  %912 = vrot.lane.b32.xlu0 %v41, 94
  %v913 = vpop.permute.xlu0 %912
  %914 = vrot.lane.b32.xlu0 %v42, 94
  %v915 = vpop.permute.xlu0 %914
  %916 = vrot.lane.b32.xlu0 %v43, 94
  %v917 = vpop.permute.xlu0 %916
  %vm918 = vcmask 769024
  %v919 = vsel %vm918, %v901, %v903
  %v920 = vsel %vm918, %v903, %v905
  %v921 = vsel %vm918, %v905, %v907
  %v922 = vsel %vm918, %v907, %v909
  %v923 = vsel %vm918, %v909, %v911
  %v924 = vsel %vm918, %v911, %v913
  %v925 = vsel %vm918, %v913, %v915
  %v926 = vsel %vm918, %v915, %v917
  %v935 = vsel %vm78, %v919, 0.0
  %v936 = vsel %vm79, %v920, 0.0
  %v937 = vsel %vm80, %v921, 0.0
  %v938 = vsel %vm81, %v922, 0.0
  %v939 = vsel %vm82, %v923, 0.0
  %v940 = vsel %vm83, %v924, 0.0
  %v941 = vsel %vm84, %v925, 0.0
  %v942 = vsel %vm85, %v926, 0.0
  %943 = vrot.lane.b32.xlu0 %v44, 94
  %v944 = vpop.permute.xlu0 %943
  %945 = vrot.lane.b32.xlu0 %v45, 94
  %v946 = vpop.permute.xlu0 %945
  %947 = vrot.lane.b32.xlu0 %v46, 94
  %v948 = vpop.permute.xlu0 %947
  %949 = vrot.lane.b32.xlu0 %v47, 94
  %v950 = vpop.permute.xlu0 %949
  %951 = vrot.lane.b32.xlu0 %v48, 94
  %v952 = vpop.permute.xlu0 %951
  %953 = vrot.lane.b32.xlu0 %v49, 94
  %v954 = vpop.permute.xlu0 %953
  %955 = vrot.lane.b32.xlu0 %v50, 94
  %v956 = vpop.permute.xlu0 %955
  %957 = vrot.lane.b32.xlu0 %v51, 94
  %v958 = vpop.permute.xlu0 %957
  %959 = vrot.lane.b32.xlu0 %v52, 94
  %v960 = vpop.permute.xlu0 %959
  %v961 = vsel %vm918, %v944, %v946
  %v962 = vsel %vm918, %v946, %v948
  %v963 = vsel %vm918, %v948, %v950
  %v964 = vsel %vm918, %v950, %v952
  %v965 = vsel %vm918, %v952, %v954
  %v966 = vsel %vm918, %v954, %v956
  %v967 = vsel %vm918, %v956, %v958
  %v968 = vsel %vm918, %v958, %v960
  %v977 = vsel %vm78, %v961, 0.0
  %v978 = vsel %vm79, %v962, 0.0
  %v979 = vsel %vm80, %v963, 0.0
  %v980 = vsel %vm81, %v964, 0.0
  %v981 = vsel %vm82, %v965, 0.0
  %v982 = vsel %vm83, %v966, 0.0
  %v983 = vsel %vm84, %v967, 0.0
  %v984 = vsel %vm85, %v968, 0.0
  %s985 = scalar_lea.vmem %s2, 40
  %v986 = vld [vmem:[%s985] sm:$0xff]
  %988 = vset.pattern.permute.xlu0 0
  %989 = vperm.xlu0 %988, %v986
  %v990 = vpop.permute.xlu0 %989
  %v992 = vmul.f32 %v935, %v990
  %v993 = vmul.f32 %v936, %v990
  %v994 = vmul.f32 %v937, %v990
  %v995 = vmul.f32 %v938, %v990
  %v996 = vmul.f32 %v939, %v990
  %v997 = vmul.f32 %v940, %v990
  %v998 = vmul.f32 %v941, %v990
  %v999 = vmul.f32 %v942, %v990
  %v1000 = vadd.f32 %v758, %v992
  %v1001 = vadd.f32 %v759, %v993
  %v1002 = vadd.f32 %v760, %v994
  %v1003 = vadd.f32 %v761, %v995
  %v1004 = vadd.f32 %v762, %v996
  %v1005 = vadd.f32 %v763, %v997
  %v1006 = vadd.f32 %v764, %v998
  %v1007 = vadd.f32 %v765, %v999
  %s1008 = scalar_lea.vmem %s2, 112
  %v1009 = vld [vmem:[%s1008] sm:$0xff]
  %1011 = vset.pattern.permute.xlu0 0
  %1012 = vperm.xlu0 %1011, %v1009
  %v1013 = vpop.permute.xlu0 %1012
  %v1015 = vmul.f32 %v977, %v1013
  %v1016 = vmul.f32 %v978, %v1013
  %v1017 = vmul.f32 %v979, %v1013
  %v1018 = vmul.f32 %v980, %v1013
  %v1019 = vmul.f32 %v981, %v1013
  %v1020 = vmul.f32 %v982, %v1013
  %v1021 = vmul.f32 %v983, %v1013
  %v1022 = vmul.f32 %v984, %v1013
  %v1023 = vadd.f32 %v825, %v1015
  %v1024 = vadd.f32 %v826, %v1016
  %v1025 = vadd.f32 %v827, %v1017
  %v1026 = vadd.f32 %v828, %v1018
  %v1027 = vadd.f32 %v829, %v1019
  %v1028 = vadd.f32 %v830, %v1020
  %v1029 = vadd.f32 %v831, %v1021
  %v1030 = vadd.f32 %v832, %v1022
  %s1031 = scalar_lea.vmem %s2, 184
  %v1032 = vld [vmem:[%s1031] sm:$0xff]
  %1034 = vset.pattern.permute.xlu0 0
  %1035 = vperm.xlu0 %1034, %v1032
  %v1036 = vpop.permute.xlu0 %1035
  %v1038 = vmul.f32 %v935, %v1036
  %v1039 = vmul.f32 %v936, %v1036
  %v1040 = vmul.f32 %v937, %v1036
  %v1041 = vmul.f32 %v938, %v1036
  %v1042 = vmul.f32 %v939, %v1036
  %v1043 = vmul.f32 %v940, %v1036
  %v1044 = vmul.f32 %v941, %v1036
  %v1045 = vmul.f32 %v942, %v1036
  %v1046 = vadd.f32 %v892, %v1038
  %v1047 = vadd.f32 %v893, %v1039
  %v1048 = vadd.f32 %v894, %v1040
  %v1049 = vadd.f32 %v895, %v1041
  %v1050 = vadd.f32 %v896, %v1042
  %v1051 = vadd.f32 %v897, %v1043
  %v1052 = vadd.f32 %v898, %v1044
  %v1053 = vadd.f32 %v899, %v1045
  %1054 = vrot.lane.b32.xlu0 %v35, 64
  %v1055 = vpop.permute.xlu0 %1054
  %1056 = vrot.lane.b32.xlu0 %v36, 64
  %v1057 = vpop.permute.xlu0 %1056
  %1058 = vrot.lane.b32.xlu0 %v37, 64
  %v1059 = vpop.permute.xlu0 %1058
  %1060 = vrot.lane.b32.xlu0 %v38, 64
  %v1061 = vpop.permute.xlu0 %1060
  %1062 = vrot.lane.b32.xlu0 %v39, 64
  %v1063 = vpop.permute.xlu0 %1062
  %1064 = vrot.lane.b32.xlu0 %v40, 64
  %v1065 = vpop.permute.xlu0 %1064
  %1066 = vrot.lane.b32.xlu0 %v41, 64
  %v1067 = vpop.permute.xlu0 %1066
  %1068 = vrot.lane.b32.xlu0 %v42, 64
  %v1069 = vpop.permute.xlu0 %1068
  %1070 = vrot.lane.b32.xlu0 %v43, 64
  %v1071 = vpop.permute.xlu0 %1070
  %vm1072 = vcmask 523264
  %v1073 = vsel %vm1072, %v1055, %v1057
  %v1074 = vsel %vm1072, %v1057, %v1059
  %v1075 = vsel %vm1072, %v1059, %v1061
  %v1076 = vsel %vm1072, %v1061, %v1063
  %v1077 = vsel %vm1072, %v1063, %v1065
  %v1078 = vsel %vm1072, %v1065, %v1067
  %v1079 = vsel %vm1072, %v1067, %v1069
  %v1080 = vsel %vm1072, %v1069, %v1071
  %v1089 = vsel %vm70, %v1073, 0.0
  %v1090 = vsel %vm71, %v1074, 0.0
  %v1091 = vsel %vm72, %v1075, 0.0
  %v1092 = vsel %vm73, %v1076, 0.0
  %v1093 = vsel %vm74, %v1077, 0.0
  %v1094 = vsel %vm75, %v1078, 0.0
  %v1095 = vsel %vm76, %v1079, 0.0
  %v1096 = vsel %vm77, %v1080, 0.0
  %1097 = vrot.lane.b32.xlu0 %v44, 64
  %v1098 = vpop.permute.xlu0 %1097
  %1099 = vrot.lane.b32.xlu0 %v45, 64
  %v1100 = vpop.permute.xlu0 %1099
  %1101 = vrot.lane.b32.xlu0 %v46, 64
  %v1102 = vpop.permute.xlu0 %1101
  %1103 = vrot.lane.b32.xlu0 %v47, 64
  %v1104 = vpop.permute.xlu0 %1103
  %1105 = vrot.lane.b32.xlu0 %v48, 64
  %v1106 = vpop.permute.xlu0 %1105
  %1107 = vrot.lane.b32.xlu0 %v49, 64
  %v1108 = vpop.permute.xlu0 %1107
  %1109 = vrot.lane.b32.xlu0 %v50, 64
  %v1110 = vpop.permute.xlu0 %1109
  %1111 = vrot.lane.b32.xlu0 %v51, 64
  %v1112 = vpop.permute.xlu0 %1111
  %1113 = vrot.lane.b32.xlu0 %v52, 64
  %v1114 = vpop.permute.xlu0 %1113
  %v1115 = vsel %vm1072, %v1098, %v1100
  %v1116 = vsel %vm1072, %v1100, %v1102
  %v1117 = vsel %vm1072, %v1102, %v1104
  %v1118 = vsel %vm1072, %v1104, %v1106
  %v1119 = vsel %vm1072, %v1106, %v1108
  %v1120 = vsel %vm1072, %v1108, %v1110
  %v1121 = vsel %vm1072, %v1110, %v1112
  %v1122 = vsel %vm1072, %v1112, %v1114
  %v1131 = vsel %vm70, %v1115, 0.0
  %v1132 = vsel %vm71, %v1116, 0.0
  %v1133 = vsel %vm72, %v1117, 0.0
  %v1134 = vsel %vm73, %v1118, 0.0
  %v1135 = vsel %vm74, %v1119, 0.0
  %v1136 = vsel %vm75, %v1120, 0.0
  %v1137 = vsel %vm76, %v1121, 0.0
  %v1138 = vsel %vm77, %v1122, 0.0
  %s1139 = scalar_lea.vmem %s2, 48
  %v1140 = vld [vmem:[%s1139] sm:$0xff]
  %1142 = vset.pattern.permute.xlu0 0
  %1143 = vperm.xlu0 %1142, %v1140
  %v1144 = vpop.permute.xlu0 %1143
  %v1146 = vmul.f32 %v1089, %v1144
  %v1147 = vmul.f32 %v1090, %v1144
  %v1148 = vmul.f32 %v1091, %v1144
  %v1149 = vmul.f32 %v1092, %v1144
  %v1150 = vmul.f32 %v1093, %v1144
  %v1151 = vmul.f32 %v1094, %v1144
  %v1152 = vmul.f32 %v1095, %v1144
  %v1153 = vmul.f32 %v1096, %v1144
  %v1154 = vadd.f32 %v1000, %v1146
  %v1155 = vadd.f32 %v1001, %v1147
  %v1156 = vadd.f32 %v1002, %v1148
  %v1157 = vadd.f32 %v1003, %v1149
  %v1158 = vadd.f32 %v1004, %v1150
  %v1159 = vadd.f32 %v1005, %v1151
  %v1160 = vadd.f32 %v1006, %v1152
  %v1161 = vadd.f32 %v1007, %v1153
  %s1162 = scalar_lea.vmem %s2, 120
  %v1163 = vld [vmem:[%s1162] sm:$0xff]
  %1165 = vset.pattern.permute.xlu0 0
  %1166 = vperm.xlu0 %1165, %v1163
  %v1167 = vpop.permute.xlu0 %1166
  %v1169 = vmul.f32 %v1131, %v1167
  %v1170 = vmul.f32 %v1132, %v1167
  %v1171 = vmul.f32 %v1133, %v1167
  %v1172 = vmul.f32 %v1134, %v1167
  %v1173 = vmul.f32 %v1135, %v1167
  %v1174 = vmul.f32 %v1136, %v1167
  %v1175 = vmul.f32 %v1137, %v1167
  %v1176 = vmul.f32 %v1138, %v1167
  %v1177 = vadd.f32 %v1023, %v1169
  %v1178 = vadd.f32 %v1024, %v1170
  %v1179 = vadd.f32 %v1025, %v1171
  %v1180 = vadd.f32 %v1026, %v1172
  %v1181 = vadd.f32 %v1027, %v1173
  %v1182 = vadd.f32 %v1028, %v1174
  %v1183 = vadd.f32 %v1029, %v1175
  %v1184 = vadd.f32 %v1030, %v1176
  %s1185 = scalar_lea.vmem %s2, 192
  %v1186 = vld [vmem:[%s1185] sm:$0xff]
  %1188 = vset.pattern.permute.xlu0 0
  %1189 = vperm.xlu0 %1188, %v1186
  %v1190 = vpop.permute.xlu0 %1189
  %v1192 = vmul.f32 %v1089, %v1190
  %v1193 = vmul.f32 %v1090, %v1190
  %v1194 = vmul.f32 %v1091, %v1190
  %v1195 = vmul.f32 %v1092, %v1190
  %v1196 = vmul.f32 %v1093, %v1190
  %v1197 = vmul.f32 %v1094, %v1190
  %v1198 = vmul.f32 %v1095, %v1190
  %v1199 = vmul.f32 %v1096, %v1190
  %v1200 = vadd.f32 %v1046, %v1192
  %v1201 = vadd.f32 %v1047, %v1193
  %v1202 = vadd.f32 %v1048, %v1194
  %v1203 = vadd.f32 %v1049, %v1195
  %v1204 = vadd.f32 %v1050, %v1196
  %v1205 = vadd.f32 %v1051, %v1197
  %v1206 = vadd.f32 %v1052, %v1198
  %v1207 = vadd.f32 %v1053, %v1199
  %s1208 = scalar_lea.vmem %s2, 56
  %v1209 = vld [vmem:[%s1208] sm:$0xff]
  %1211 = vset.pattern.permute.xlu0 0
  %1212 = vperm.xlu0 %1211, %v1209
  %v1213 = vpop.permute.xlu0 %1212
  %v1215 = vmul.f32 %v35, %v1213
  %v1216 = vmul.f32 %v36, %v1213
  %v1217 = vmul.f32 %v37, %v1213
  %v1218 = vmul.f32 %v38, %v1213
  %v1219 = vmul.f32 %v39, %v1213
  %v1220 = vmul.f32 %v40, %v1213
  %v1221 = vmul.f32 %v41, %v1213
  %v1222 = vmul.f32 %v42, %v1213
  %v1223 = vmul.f32 %v43, %v1213
  %1233 = vrot.lane.b32.xlu0 %v1215, 63
  %v1234 = vpop.permute.xlu0 %1233
  %1235 = vrot.lane.b32.xlu0 %v1216, 63
  %v1236 = vpop.permute.xlu0 %1235
  %1237 = vrot.lane.b32.xlu0 %v1217, 63
  %v1238 = vpop.permute.xlu0 %1237
  %1239 = vrot.lane.b32.xlu0 %v1218, 63
  %v1240 = vpop.permute.xlu0 %1239
  %1241 = vrot.lane.b32.xlu0 %v1219, 63
  %v1242 = vpop.permute.xlu0 %1241
  %1243 = vrot.lane.b32.xlu0 %v1220, 63
  %v1244 = vpop.permute.xlu0 %1243
  %1245 = vrot.lane.b32.xlu0 %v1221, 63
  %v1246 = vpop.permute.xlu0 %1245
  %1247 = vrot.lane.b32.xlu0 %v1222, 63
  %v1248 = vpop.permute.xlu0 %1247
  %1249 = vrot.lane.b32.xlu0 %v1223, 63
  %v1250 = vpop.permute.xlu0 %1249
  %vm1251 = vcmask 515072
  %v1252 = vsel %vm1251, %v1234, %v1236
  %v1253 = vsel %vm1251, %v1236, %v1238
  %v1254 = vsel %vm1251, %v1238, %v1240
  %v1255 = vsel %vm1251, %v1240, %v1242
  %v1256 = vsel %vm1251, %v1242, %v1244
  %v1257 = vsel %vm1251, %v1244, %v1246
  %v1258 = vsel %vm1251, %v1246, %v1248
  %v1259 = vsel %vm1251, %v1248, %v1250
  %v1268 = vadd.f32 %v1154, %v1252
  %v1269 = vadd.f32 %v1155, %v1253
  %v1270 = vadd.f32 %v1156, %v1254
  %v1271 = vadd.f32 %v1157, %v1255
  %v1272 = vadd.f32 %v1158, %v1256
  %v1273 = vadd.f32 %v1159, %v1257
  %v1274 = vadd.f32 %v1160, %v1258
  %v1275 = vadd.f32 %v1161, %v1259
  %s1276 = scalar_lea.vmem %s2, 128
  %v1277 = vld [vmem:[%s1276] sm:$0xff]
  %1279 = vset.pattern.permute.xlu0 0
  %1280 = vperm.xlu0 %1279, %v1277
  %v1281 = vpop.permute.xlu0 %1280
  %v1283 = vmul.f32 %v44, %v1281
  %v1284 = vmul.f32 %v45, %v1281
  %v1285 = vmul.f32 %v46, %v1281
  %v1286 = vmul.f32 %v47, %v1281
  %v1287 = vmul.f32 %v48, %v1281
  %v1288 = vmul.f32 %v49, %v1281
  %v1289 = vmul.f32 %v50, %v1281
  %v1290 = vmul.f32 %v51, %v1281
  %v1291 = vmul.f32 %v52, %v1281
  %1301 = vrot.lane.b32.xlu0 %v1283, 63
  %v1302 = vpop.permute.xlu0 %1301
  %1303 = vrot.lane.b32.xlu0 %v1284, 63
  %v1304 = vpop.permute.xlu0 %1303
  %1305 = vrot.lane.b32.xlu0 %v1285, 63
  %v1306 = vpop.permute.xlu0 %1305
  %1307 = vrot.lane.b32.xlu0 %v1286, 63
  %v1308 = vpop.permute.xlu0 %1307
  %1309 = vrot.lane.b32.xlu0 %v1287, 63
  %v1310 = vpop.permute.xlu0 %1309
  %1311 = vrot.lane.b32.xlu0 %v1288, 63
  %v1312 = vpop.permute.xlu0 %1311
  %1313 = vrot.lane.b32.xlu0 %v1289, 63
  %v1314 = vpop.permute.xlu0 %1313
  %1315 = vrot.lane.b32.xlu0 %v1290, 63
  %v1316 = vpop.permute.xlu0 %1315
  %1317 = vrot.lane.b32.xlu0 %v1291, 63
  %v1318 = vpop.permute.xlu0 %1317
  %v1319 = vsel %vm1251, %v1302, %v1304
  %v1320 = vsel %vm1251, %v1304, %v1306
  %v1321 = vsel %vm1251, %v1306, %v1308
  %v1322 = vsel %vm1251, %v1308, %v1310
  %v1323 = vsel %vm1251, %v1310, %v1312
  %v1324 = vsel %vm1251, %v1312, %v1314
  %v1325 = vsel %vm1251, %v1314, %v1316
  %v1326 = vsel %vm1251, %v1316, %v1318
  %v1335 = vadd.f32 %v1177, %v1319
  %v1336 = vadd.f32 %v1178, %v1320
  %v1337 = vadd.f32 %v1179, %v1321
  %v1338 = vadd.f32 %v1180, %v1322
  %v1339 = vadd.f32 %v1181, %v1323
  %v1340 = vadd.f32 %v1182, %v1324
  %v1341 = vadd.f32 %v1183, %v1325
  %v1342 = vadd.f32 %v1184, %v1326
  %s1343 = scalar_lea.vmem %s2, 200
  %v1344 = vld [vmem:[%s1343] sm:$0xff]
  %1346 = vset.pattern.permute.xlu0 0
  %1347 = vperm.xlu0 %1346, %v1344
  %v1348 = vpop.permute.xlu0 %1347
  %v1350 = vmul.f32 %v35, %v1348
  %v1351 = vmul.f32 %v36, %v1348
  %v1352 = vmul.f32 %v37, %v1348
  %v1353 = vmul.f32 %v38, %v1348
  %v1354 = vmul.f32 %v39, %v1348
  %v1355 = vmul.f32 %v40, %v1348
  %v1356 = vmul.f32 %v41, %v1348
  %v1357 = vmul.f32 %v42, %v1348
  %v1358 = vmul.f32 %v43, %v1348
  %1368 = vrot.lane.b32.xlu0 %v1350, 63
  %v1369 = vpop.permute.xlu0 %1368
  %1370 = vrot.lane.b32.xlu0 %v1351, 63
  %v1371 = vpop.permute.xlu0 %1370
  %1372 = vrot.lane.b32.xlu0 %v1352, 63
  %v1373 = vpop.permute.xlu0 %1372
  %1374 = vrot.lane.b32.xlu0 %v1353, 63
  %v1375 = vpop.permute.xlu0 %1374
  %1376 = vrot.lane.b32.xlu0 %v1354, 63
  %v1377 = vpop.permute.xlu0 %1376
  %1378 = vrot.lane.b32.xlu0 %v1355, 63
  %v1379 = vpop.permute.xlu0 %1378
  %1380 = vrot.lane.b32.xlu0 %v1356, 63
  %v1381 = vpop.permute.xlu0 %1380
  %1382 = vrot.lane.b32.xlu0 %v1357, 63
  %v1383 = vpop.permute.xlu0 %1382
  %1384 = vrot.lane.b32.xlu0 %v1358, 63
  %v1385 = vpop.permute.xlu0 %1384
  %v1386 = vsel %vm1251, %v1369, %v1371
  %v1387 = vsel %vm1251, %v1371, %v1373
  %v1388 = vsel %vm1251, %v1373, %v1375
  %v1389 = vsel %vm1251, %v1375, %v1377
  %v1390 = vsel %vm1251, %v1377, %v1379
  %v1391 = vsel %vm1251, %v1379, %v1381
  %v1392 = vsel %vm1251, %v1381, %v1383
  %v1393 = vsel %vm1251, %v1383, %v1385
  %v1402 = vadd.f32 %v1200, %v1386
  %v1403 = vadd.f32 %v1201, %v1387
  %v1404 = vadd.f32 %v1202, %v1388
  %v1405 = vadd.f32 %v1203, %v1389
  %v1406 = vadd.f32 %v1204, %v1390
  %v1407 = vadd.f32 %v1205, %v1391
  %v1408 = vadd.f32 %v1206, %v1392
  %v1409 = vadd.f32 %v1207, %v1393
  %1410 = vrot.lane.b32.xlu0 %v35, 62
  %v1411 = vpop.permute.xlu0 %1410
  %1412 = vrot.lane.b32.xlu0 %v36, 62
  %v1413 = vpop.permute.xlu0 %1412
  %1414 = vrot.lane.b32.xlu0 %v37, 62
  %v1415 = vpop.permute.xlu0 %1414
  %1416 = vrot.lane.b32.xlu0 %v38, 62
  %v1417 = vpop.permute.xlu0 %1416
  %1418 = vrot.lane.b32.xlu0 %v39, 62
  %v1419 = vpop.permute.xlu0 %1418
  %1420 = vrot.lane.b32.xlu0 %v40, 62
  %v1421 = vpop.permute.xlu0 %1420
  %1422 = vrot.lane.b32.xlu0 %v41, 62
  %v1423 = vpop.permute.xlu0 %1422
  %1424 = vrot.lane.b32.xlu0 %v42, 62
  %v1425 = vpop.permute.xlu0 %1424
  %1426 = vrot.lane.b32.xlu0 %v43, 62
  %v1427 = vpop.permute.xlu0 %1426
  %vm1428 = vcmask 506880
  %v1429 = vsel %vm1428, %v1411, %v1413
  %v1430 = vsel %vm1428, %v1413, %v1415
  %v1431 = vsel %vm1428, %v1415, %v1417
  %v1432 = vsel %vm1428, %v1417, %v1419
  %v1433 = vsel %vm1428, %v1419, %v1421
  %v1434 = vsel %vm1428, %v1421, %v1423
  %v1435 = vsel %vm1428, %v1423, %v1425
  %v1436 = vsel %vm1428, %v1425, %v1427
  %v1445 = vsel %vm78, %v1429, 0.0
  %v1446 = vsel %vm79, %v1430, 0.0
  %v1447 = vsel %vm80, %v1431, 0.0
  %v1448 = vsel %vm81, %v1432, 0.0
  %v1449 = vsel %vm82, %v1433, 0.0
  %v1450 = vsel %vm83, %v1434, 0.0
  %v1451 = vsel %vm84, %v1435, 0.0
  %v1452 = vsel %vm85, %v1436, 0.0
  %1453 = vrot.lane.b32.xlu0 %v44, 62
  %v1454 = vpop.permute.xlu0 %1453
  %1455 = vrot.lane.b32.xlu0 %v45, 62
  %v1456 = vpop.permute.xlu0 %1455
  %1457 = vrot.lane.b32.xlu0 %v46, 62
  %v1458 = vpop.permute.xlu0 %1457
  %1459 = vrot.lane.b32.xlu0 %v47, 62
  %v1460 = vpop.permute.xlu0 %1459
  %1461 = vrot.lane.b32.xlu0 %v48, 62
  %v1462 = vpop.permute.xlu0 %1461
  %1463 = vrot.lane.b32.xlu0 %v49, 62
  %v1464 = vpop.permute.xlu0 %1463
  %1465 = vrot.lane.b32.xlu0 %v50, 62
  %v1466 = vpop.permute.xlu0 %1465
  %1467 = vrot.lane.b32.xlu0 %v51, 62
  %v1468 = vpop.permute.xlu0 %1467
  %1469 = vrot.lane.b32.xlu0 %v52, 62
  %v1470 = vpop.permute.xlu0 %1469
  %v1471 = vsel %vm1428, %v1454, %v1456
  %v1472 = vsel %vm1428, %v1456, %v1458
  %v1473 = vsel %vm1428, %v1458, %v1460
  %v1474 = vsel %vm1428, %v1460, %v1462
  %v1475 = vsel %vm1428, %v1462, %v1464
  %v1476 = vsel %vm1428, %v1464, %v1466
  %v1477 = vsel %vm1428, %v1466, %v1468
  %v1478 = vsel %vm1428, %v1468, %v1470
  %v1487 = vsel %vm78, %v1471, 0.0
  %v1488 = vsel %vm79, %v1472, 0.0
  %v1489 = vsel %vm80, %v1473, 0.0
  %v1490 = vsel %vm81, %v1474, 0.0
  %v1491 = vsel %vm82, %v1475, 0.0
  %v1492 = vsel %vm83, %v1476, 0.0
  %v1493 = vsel %vm84, %v1477, 0.0
  %v1494 = vsel %vm85, %v1478, 0.0
  %s1495 = scalar_lea.vmem %s2, 64
  %v1496 = vld [vmem:[%s1495] sm:$0xff]
  %1498 = vset.pattern.permute.xlu0 0
  %1499 = vperm.xlu0 %1498, %v1496
  %v1500 = vpop.permute.xlu0 %1499
  %v1502 = vmul.f32 %v1445, %v1500
  %v1503 = vmul.f32 %v1446, %v1500
  %v1504 = vmul.f32 %v1447, %v1500
  %v1505 = vmul.f32 %v1448, %v1500
  %v1506 = vmul.f32 %v1449, %v1500
  %v1507 = vmul.f32 %v1450, %v1500
  %v1508 = vmul.f32 %v1451, %v1500
  %v1509 = vmul.f32 %v1452, %v1500
  %v1510 = vadd.f32 %v1268, %v1502
  %v1511 = vadd.f32 %v1269, %v1503
  %v1512 = vadd.f32 %v1270, %v1504
  %v1513 = vadd.f32 %v1271, %v1505
  %v1514 = vadd.f32 %v1272, %v1506
  %v1515 = vadd.f32 %v1273, %v1507
  %v1516 = vadd.f32 %v1274, %v1508
  %v1517 = vadd.f32 %v1275, %v1509
  %s1518 = scalar_lea.vmem %s2, 136
  %v1519 = vld [vmem:[%s1518] sm:$0xff]
  %1521 = vset.pattern.permute.xlu0 0
  %1522 = vperm.xlu0 %1521, %v1519
  %v1523 = vpop.permute.xlu0 %1522
  %v1525 = vmul.f32 %v1487, %v1523
  %v1526 = vmul.f32 %v1488, %v1523
  %v1527 = vmul.f32 %v1489, %v1523
  %v1528 = vmul.f32 %v1490, %v1523
  %v1529 = vmul.f32 %v1491, %v1523
  %v1530 = vmul.f32 %v1492, %v1523
  %v1531 = vmul.f32 %v1493, %v1523
  %v1532 = vmul.f32 %v1494, %v1523
  %v1533 = vadd.f32 %v1335, %v1525
  %v1534 = vadd.f32 %v1336, %v1526
  %v1535 = vadd.f32 %v1337, %v1527
  %v1536 = vadd.f32 %v1338, %v1528
  %v1537 = vadd.f32 %v1339, %v1529
  %v1538 = vadd.f32 %v1340, %v1530
  %v1539 = vadd.f32 %v1341, %v1531
  %v1540 = vadd.f32 %v1342, %v1532
  %s1541 = scalar_lea.vmem %s2, 208
  %v1542 = vld [vmem:[%s1541] sm:$0xff]
  %1544 = vset.pattern.permute.xlu0 0
  %1545 = vperm.xlu0 %1544, %v1542
  %v1546 = vpop.permute.xlu0 %1545
  %v1548 = vmul.f32 %v1445, %v1546
  %v1549 = vmul.f32 %v1446, %v1546
  %v1550 = vmul.f32 %v1447, %v1546
  %v1551 = vmul.f32 %v1448, %v1546
  %v1552 = vmul.f32 %v1449, %v1546
  %v1553 = vmul.f32 %v1450, %v1546
  %v1554 = vmul.f32 %v1451, %v1546
  %v1555 = vmul.f32 %v1452, %v1546
  %v1556 = vadd.f32 %v1402, %v1548
  %v1557 = vadd.f32 %v1403, %v1549
  %v1558 = vadd.f32 %v1404, %v1550
  %v1559 = vadd.f32 %v1405, %v1551
  %v1560 = vadd.f32 %v1406, %v1552
  %v1561 = vadd.f32 %v1407, %v1553
  %v1562 = vadd.f32 %v1408, %v1554
  %v1563 = vadd.f32 %v1409, %v1555
  %v1564 = vld [vmem:[%s3] sm:$0xf]
  %v1565 = vld [vmem:[%s4] sm:$0xf]
  %v1566 = vld [vmem:[%s5] sm:$0xf]
  %v1567 = vld [vmem:[%s6] sm:$0x3]
  %v1568 = vld [vmem:[%s7] sm:$0xf]
  %v1569 = vld [vmem:[%s8] sm:$0x3]
  %v1570 = vlaneseq
  %v1571 = vshrl.u32 %v1570, 7
  %v1572 = vsub.s32 0, %v1571
  %v1573 = vrot.slane %v1510, %v1572
  %v1574 = vlaneseq
  %v1575 = vshrl.u32 %v1574, 7
  %v1576 = vsub.s32 0, %v1575
  %v1577 = vrot.slane %v1511, %v1576
  %v1578 = vlaneseq
  %v1579 = vshrl.u32 %v1578, 7
  %v1580 = vsub.s32 0, %v1579
  %v1581 = vrot.slane %v1512, %v1580
  %v1582 = vlaneseq
  %v1583 = vshrl.u32 %v1582, 7
  %v1584 = vsub.s32 0, %v1583
  %v1585 = vrot.slane %v1513, %v1584
  %v1586 = vlaneseq
  %v1587 = vshrl.u32 %v1586, 7
  %v1588 = vsub.s32 0, %v1587
  %v1589 = vrot.slane %v1514, %v1588
  %v1590 = vlaneseq
  %v1591 = vshrl.u32 %v1590, 7
  %v1592 = vsub.s32 0, %v1591
  %v1593 = vrot.slane %v1515, %v1592
  %v1594 = vlaneseq
  %v1595 = vshrl.u32 %v1594, 7
  %v1596 = vsub.s32 0, %v1595
  %v1597 = vrot.slane %v1516, %v1596
  %v1598 = vlaneseq
  %v1599 = vshrl.u32 %v1598, 7
  %v1600 = vsub.s32 0, %v1599
  %v1601 = vrot.slane %v1517, %v1600
  %1603 = vset.pattern.permute.xlu0 0
  %1604 = vperm.xlu0 %1603, %v1564
  %v1605 = vpop.permute.xlu0 %1604
  %v1607 = vmul.f32 %v1573, %v1605
  %v1608 = vmul.f32 %v1577, %v1605
  %v1609 = vmul.f32 %v1581, %v1605
  %v1610 = vmul.f32 %v1585, %v1605
  %v1611 = vmul.f32 %v1589, %v1605
  %v1612 = vmul.f32 %v1593, %v1605
  %v1613 = vmul.f32 %v1597, %v1605
  %v1614 = vmul.f32 %v1601, %v1605
  %v1615 = vlaneseq
  %v1616 = vshrl.u32 %v1615, 7
  %v1617 = vsub.s32 1, %v1616
  %v1618 = vrot.slane %v1510, %v1617
  %v1619 = vlaneseq
  %v1620 = vshrl.u32 %v1619, 7
  %v1621 = vsub.s32 1, %v1620
  %v1622 = vrot.slane %v1511, %v1621
  %v1623 = vlaneseq
  %v1624 = vshrl.u32 %v1623, 7
  %v1625 = vsub.s32 1, %v1624
  %v1626 = vrot.slane %v1512, %v1625
  %v1627 = vlaneseq
  %v1628 = vshrl.u32 %v1627, 7
  %v1629 = vsub.s32 1, %v1628
  %v1630 = vrot.slane %v1513, %v1629
  %v1631 = vlaneseq
  %v1632 = vshrl.u32 %v1631, 7
  %v1633 = vsub.s32 1, %v1632
  %v1634 = vrot.slane %v1514, %v1633
  %v1635 = vlaneseq
  %v1636 = vshrl.u32 %v1635, 7
  %v1637 = vsub.s32 1, %v1636
  %v1638 = vrot.slane %v1515, %v1637
  %v1639 = vlaneseq
  %v1640 = vshrl.u32 %v1639, 7
  %v1641 = vsub.s32 1, %v1640
  %v1642 = vrot.slane %v1516, %v1641
  %v1643 = vlaneseq
  %v1644 = vshrl.u32 %v1643, 7
  %v1645 = vsub.s32 1, %v1644
  %v1646 = vrot.slane %v1517, %v1645
  %1647 = vset.pattern.permute.xlu0 1
  %1648 = vperm.xlu0 %1647, %v1564
  %v1649 = vpop.permute.xlu0 %1648
  %v1651 = vmul.f32 %v1618, %v1649
  %v1652 = vmul.f32 %v1622, %v1649
  %v1653 = vmul.f32 %v1626, %v1649
  %v1654 = vmul.f32 %v1630, %v1649
  %v1655 = vmul.f32 %v1634, %v1649
  %v1656 = vmul.f32 %v1638, %v1649
  %v1657 = vmul.f32 %v1642, %v1649
  %v1658 = vmul.f32 %v1646, %v1649
  %v1659 = vadd.f32 %v1607, %v1651
  %v1660 = vadd.f32 %v1608, %v1652
  %v1661 = vadd.f32 %v1609, %v1653
  %v1662 = vadd.f32 %v1610, %v1654
  %v1663 = vadd.f32 %v1611, %v1655
  %v1664 = vadd.f32 %v1612, %v1656
  %v1665 = vadd.f32 %v1613, %v1657
  %v1666 = vadd.f32 %v1614, %v1658
  %v1667 = vlaneseq
  %v1668 = vshrl.u32 %v1667, 7
  %v1669 = vsub.s32 2, %v1668
  %v1670 = vrot.slane %v1510, %v1669
  %v1671 = vlaneseq
  %v1672 = vshrl.u32 %v1671, 7
  %v1673 = vsub.s32 2, %v1672
  %v1674 = vrot.slane %v1511, %v1673
  %v1675 = vlaneseq
  %v1676 = vshrl.u32 %v1675, 7
  %v1677 = vsub.s32 2, %v1676
  %v1678 = vrot.slane %v1512, %v1677
  %v1679 = vlaneseq
  %v1680 = vshrl.u32 %v1679, 7
  %v1681 = vsub.s32 2, %v1680
  %v1682 = vrot.slane %v1513, %v1681
  %v1683 = vlaneseq
  %v1684 = vshrl.u32 %v1683, 7
  %v1685 = vsub.s32 2, %v1684
  %v1686 = vrot.slane %v1514, %v1685
  %v1687 = vlaneseq
  %v1688 = vshrl.u32 %v1687, 7
  %v1689 = vsub.s32 2, %v1688
  %v1690 = vrot.slane %v1515, %v1689
  %v1691 = vlaneseq
  %v1692 = vshrl.u32 %v1691, 7
  %v1693 = vsub.s32 2, %v1692
  %v1694 = vrot.slane %v1516, %v1693
  %v1695 = vlaneseq
  %v1696 = vshrl.u32 %v1695, 7
  %v1697 = vsub.s32 2, %v1696
  %v1698 = vrot.slane %v1517, %v1697
  %1699 = vset.pattern.permute.xlu0 2
  %1700 = vperm.xlu0 %1699, %v1564
  %v1701 = vpop.permute.xlu0 %1700
  %v1703 = vmul.f32 %v1670, %v1701
  %v1704 = vmul.f32 %v1674, %v1701
  %v1705 = vmul.f32 %v1678, %v1701
  %v1706 = vmul.f32 %v1682, %v1701
  %v1707 = vmul.f32 %v1686, %v1701
  %v1708 = vmul.f32 %v1690, %v1701
  %v1709 = vmul.f32 %v1694, %v1701
  %v1710 = vmul.f32 %v1698, %v1701
  %v1711 = vadd.f32 %v1659, %v1703
  %v1712 = vadd.f32 %v1660, %v1704
  %v1713 = vadd.f32 %v1661, %v1705
  %v1714 = vadd.f32 %v1662, %v1706
  %v1715 = vadd.f32 %v1663, %v1707
  %v1716 = vadd.f32 %v1664, %v1708
  %v1717 = vadd.f32 %v1665, %v1709
  %v1718 = vadd.f32 %v1666, %v1710
  %v1719 = vlaneseq
  %v1720 = vshrl.u32 %v1719, 7
  %v1721 = vsub.s32 3, %v1720
  %v1722 = vrot.slane %v1510, %v1721
  %v1723 = vlaneseq
  %v1724 = vshrl.u32 %v1723, 7
  %v1725 = vsub.s32 3, %v1724
  %v1726 = vrot.slane %v1511, %v1725
  %v1727 = vlaneseq
  %v1728 = vshrl.u32 %v1727, 7
  %v1729 = vsub.s32 3, %v1728
  %v1730 = vrot.slane %v1512, %v1729
  %v1731 = vlaneseq
  %v1732 = vshrl.u32 %v1731, 7
  %v1733 = vsub.s32 3, %v1732
  %v1734 = vrot.slane %v1513, %v1733
  %v1735 = vlaneseq
  %v1736 = vshrl.u32 %v1735, 7
  %v1737 = vsub.s32 3, %v1736
  %v1738 = vrot.slane %v1514, %v1737
  %v1739 = vlaneseq
  %v1740 = vshrl.u32 %v1739, 7
  %v1741 = vsub.s32 3, %v1740
  %v1742 = vrot.slane %v1515, %v1741
  %v1743 = vlaneseq
  %v1744 = vshrl.u32 %v1743, 7
  %v1745 = vsub.s32 3, %v1744
  %v1746 = vrot.slane %v1516, %v1745
  %v1747 = vlaneseq
  %v1748 = vshrl.u32 %v1747, 7
  %v1749 = vsub.s32 3, %v1748
  %v1750 = vrot.slane %v1517, %v1749
  %1751 = vset.pattern.permute.xlu0 3
  %1752 = vperm.xlu0 %1751, %v1564
  %v1753 = vpop.permute.xlu0 %1752
  %v1755 = vmul.f32 %v1722, %v1753
  %v1756 = vmul.f32 %v1726, %v1753
  %v1757 = vmul.f32 %v1730, %v1753
  %v1758 = vmul.f32 %v1734, %v1753
  %v1759 = vmul.f32 %v1738, %v1753
  %v1760 = vmul.f32 %v1742, %v1753
  %v1761 = vmul.f32 %v1746, %v1753
  %v1762 = vmul.f32 %v1750, %v1753
  %v1763 = vadd.f32 %v1711, %v1755
  %v1764 = vadd.f32 %v1712, %v1756
  %v1765 = vadd.f32 %v1713, %v1757
  %v1766 = vadd.f32 %v1714, %v1758
  %v1767 = vadd.f32 %v1715, %v1759
  %v1768 = vadd.f32 %v1716, %v1760
  %v1769 = vadd.f32 %v1717, %v1761
  %v1770 = vadd.f32 %v1718, %v1762
  %v1771 = vlaneseq
  %v1772 = vshrl.u32 %v1771, 7
  %v1773 = vsub.s32 0, %v1772
  %v1774 = vrot.slane %v1533, %v1773
  %v1775 = vlaneseq
  %v1776 = vshrl.u32 %v1775, 7
  %v1777 = vsub.s32 0, %v1776
  %v1778 = vrot.slane %v1534, %v1777
  %v1779 = vlaneseq
  %v1780 = vshrl.u32 %v1779, 7
  %v1781 = vsub.s32 0, %v1780
  %v1782 = vrot.slane %v1535, %v1781
  %v1783 = vlaneseq
  %v1784 = vshrl.u32 %v1783, 7
  %v1785 = vsub.s32 0, %v1784
  %v1786 = vrot.slane %v1536, %v1785
  %v1787 = vlaneseq
  %v1788 = vshrl.u32 %v1787, 7
  %v1789 = vsub.s32 0, %v1788
  %v1790 = vrot.slane %v1537, %v1789
  %v1791 = vlaneseq
  %v1792 = vshrl.u32 %v1791, 7
  %v1793 = vsub.s32 0, %v1792
  %v1794 = vrot.slane %v1538, %v1793
  %v1795 = vlaneseq
  %v1796 = vshrl.u32 %v1795, 7
  %v1797 = vsub.s32 0, %v1796
  %v1798 = vrot.slane %v1539, %v1797
  %v1799 = vlaneseq
  %v1800 = vshrl.u32 %v1799, 7
  %v1801 = vsub.s32 0, %v1800
  %v1802 = vrot.slane %v1540, %v1801
  %1804 = vset.pattern.permute.xlu0 0
  %1805 = vperm.xlu0 %1804, %v1565
  %v1806 = vpop.permute.xlu0 %1805
  %v1808 = vmul.f32 %v1774, %v1806
  %v1809 = vmul.f32 %v1778, %v1806
  %v1810 = vmul.f32 %v1782, %v1806
  %v1811 = vmul.f32 %v1786, %v1806
  %v1812 = vmul.f32 %v1790, %v1806
  %v1813 = vmul.f32 %v1794, %v1806
  %v1814 = vmul.f32 %v1798, %v1806
  %v1815 = vmul.f32 %v1802, %v1806
  %v1816 = vlaneseq
  %v1817 = vshrl.u32 %v1816, 7
  %v1818 = vsub.s32 1, %v1817
  %v1819 = vrot.slane %v1533, %v1818
  %v1820 = vlaneseq
  %v1821 = vshrl.u32 %v1820, 7
  %v1822 = vsub.s32 1, %v1821
  %v1823 = vrot.slane %v1534, %v1822
  %v1824 = vlaneseq
  %v1825 = vshrl.u32 %v1824, 7
  %v1826 = vsub.s32 1, %v1825
  %v1827 = vrot.slane %v1535, %v1826
  %v1828 = vlaneseq
  %v1829 = vshrl.u32 %v1828, 7
  %v1830 = vsub.s32 1, %v1829
  %v1831 = vrot.slane %v1536, %v1830
  %v1832 = vlaneseq
  %v1833 = vshrl.u32 %v1832, 7
  %v1834 = vsub.s32 1, %v1833
  %v1835 = vrot.slane %v1537, %v1834
  %v1836 = vlaneseq
  %v1837 = vshrl.u32 %v1836, 7
  %v1838 = vsub.s32 1, %v1837
  %v1839 = vrot.slane %v1538, %v1838
  %v1840 = vlaneseq
  %v1841 = vshrl.u32 %v1840, 7
  %v1842 = vsub.s32 1, %v1841
  %v1843 = vrot.slane %v1539, %v1842
  %v1844 = vlaneseq
  %v1845 = vshrl.u32 %v1844, 7
  %v1846 = vsub.s32 1, %v1845
  %v1847 = vrot.slane %v1540, %v1846
  %1848 = vset.pattern.permute.xlu0 1
  %1849 = vperm.xlu0 %1848, %v1565
  %v1850 = vpop.permute.xlu0 %1849
  %v1852 = vmul.f32 %v1819, %v1850
  %v1853 = vmul.f32 %v1823, %v1850
  %v1854 = vmul.f32 %v1827, %v1850
  %v1855 = vmul.f32 %v1831, %v1850
  %v1856 = vmul.f32 %v1835, %v1850
  %v1857 = vmul.f32 %v1839, %v1850
  %v1858 = vmul.f32 %v1843, %v1850
  %v1859 = vmul.f32 %v1847, %v1850
  %v1860 = vadd.f32 %v1808, %v1852
  %v1861 = vadd.f32 %v1809, %v1853
  %v1862 = vadd.f32 %v1810, %v1854
  %v1863 = vadd.f32 %v1811, %v1855
  %v1864 = vadd.f32 %v1812, %v1856
  %v1865 = vadd.f32 %v1813, %v1857
  %v1866 = vadd.f32 %v1814, %v1858
  %v1867 = vadd.f32 %v1815, %v1859
  %v1868 = vlaneseq
  %v1869 = vshrl.u32 %v1868, 7
  %v1870 = vsub.s32 2, %v1869
  %v1871 = vrot.slane %v1533, %v1870
  %v1872 = vlaneseq
  %v1873 = vshrl.u32 %v1872, 7
  %v1874 = vsub.s32 2, %v1873
  %v1875 = vrot.slane %v1534, %v1874
  %v1876 = vlaneseq
  %v1877 = vshrl.u32 %v1876, 7
  %v1878 = vsub.s32 2, %v1877
  %v1879 = vrot.slane %v1535, %v1878
  %v1880 = vlaneseq
  %v1881 = vshrl.u32 %v1880, 7
  %v1882 = vsub.s32 2, %v1881
  %v1883 = vrot.slane %v1536, %v1882
  %v1884 = vlaneseq
  %v1885 = vshrl.u32 %v1884, 7
  %v1886 = vsub.s32 2, %v1885
  %v1887 = vrot.slane %v1537, %v1886
  %v1888 = vlaneseq
  %v1889 = vshrl.u32 %v1888, 7
  %v1890 = vsub.s32 2, %v1889
  %v1891 = vrot.slane %v1538, %v1890
  %v1892 = vlaneseq
  %v1893 = vshrl.u32 %v1892, 7
  %v1894 = vsub.s32 2, %v1893
  %v1895 = vrot.slane %v1539, %v1894
  %v1896 = vlaneseq
  %v1897 = vshrl.u32 %v1896, 7
  %v1898 = vsub.s32 2, %v1897
  %v1899 = vrot.slane %v1540, %v1898
  %1900 = vset.pattern.permute.xlu0 2
  %1901 = vperm.xlu0 %1900, %v1565
  %v1902 = vpop.permute.xlu0 %1901
  %v1904 = vmul.f32 %v1871, %v1902
  %v1905 = vmul.f32 %v1875, %v1902
  %v1906 = vmul.f32 %v1879, %v1902
  %v1907 = vmul.f32 %v1883, %v1902
  %v1908 = vmul.f32 %v1887, %v1902
  %v1909 = vmul.f32 %v1891, %v1902
  %v1910 = vmul.f32 %v1895, %v1902
  %v1911 = vmul.f32 %v1899, %v1902
  %v1912 = vadd.f32 %v1860, %v1904
  %v1913 = vadd.f32 %v1861, %v1905
  %v1914 = vadd.f32 %v1862, %v1906
  %v1915 = vadd.f32 %v1863, %v1907
  %v1916 = vadd.f32 %v1864, %v1908
  %v1917 = vadd.f32 %v1865, %v1909
  %v1918 = vadd.f32 %v1866, %v1910
  %v1919 = vadd.f32 %v1867, %v1911
  %v1920 = vlaneseq
  %v1921 = vshrl.u32 %v1920, 7
  %v1922 = vsub.s32 3, %v1921
  %v1923 = vrot.slane %v1533, %v1922
  %v1924 = vlaneseq
  %v1925 = vshrl.u32 %v1924, 7
  %v1926 = vsub.s32 3, %v1925
  %v1927 = vrot.slane %v1534, %v1926
  %v1928 = vlaneseq
  %v1929 = vshrl.u32 %v1928, 7
  %v1930 = vsub.s32 3, %v1929
  %v1931 = vrot.slane %v1535, %v1930
  %v1932 = vlaneseq
  %v1933 = vshrl.u32 %v1932, 7
  %v1934 = vsub.s32 3, %v1933
  %v1935 = vrot.slane %v1536, %v1934
  %v1936 = vlaneseq
  %v1937 = vshrl.u32 %v1936, 7
  %v1938 = vsub.s32 3, %v1937
  %v1939 = vrot.slane %v1537, %v1938
  %v1940 = vlaneseq
  %v1941 = vshrl.u32 %v1940, 7
  %v1942 = vsub.s32 3, %v1941
  %v1943 = vrot.slane %v1538, %v1942
  %v1944 = vlaneseq
  %v1945 = vshrl.u32 %v1944, 7
  %v1946 = vsub.s32 3, %v1945
  %v1947 = vrot.slane %v1539, %v1946
  %v1948 = vlaneseq
  %v1949 = vshrl.u32 %v1948, 7
  %v1950 = vsub.s32 3, %v1949
  %v1951 = vrot.slane %v1540, %v1950
  %1952 = vset.pattern.permute.xlu0 3
  %1953 = vperm.xlu0 %1952, %v1565
  %v1954 = vpop.permute.xlu0 %1953
  %v1956 = vmul.f32 %v1923, %v1954
  %v1957 = vmul.f32 %v1927, %v1954
  %v1958 = vmul.f32 %v1931, %v1954
  %v1959 = vmul.f32 %v1935, %v1954
  %v1960 = vmul.f32 %v1939, %v1954
  %v1961 = vmul.f32 %v1943, %v1954
  %v1962 = vmul.f32 %v1947, %v1954
  %v1963 = vmul.f32 %v1951, %v1954
  %v1964 = vadd.f32 %v1912, %v1956
  %v1965 = vadd.f32 %v1913, %v1957
  %v1966 = vadd.f32 %v1914, %v1958
  %v1967 = vadd.f32 %v1915, %v1959
  %v1968 = vadd.f32 %v1916, %v1960
  %v1969 = vadd.f32 %v1917, %v1961
  %v1970 = vadd.f32 %v1918, %v1962
  %v1971 = vadd.f32 %v1919, %v1963
  %v1972 = vadd.f32 %v1763, %v1964
  %v1973 = vadd.f32 %v1764, %v1965
  %v1974 = vadd.f32 %v1765, %v1966
  %v1975 = vadd.f32 %v1766, %v1967
  %v1976 = vadd.f32 %v1767, %v1968
  %v1977 = vadd.f32 %v1768, %v1969
  %v1978 = vadd.f32 %v1769, %v1970
  %v1979 = vadd.f32 %v1770, %v1971
  %1981 = vset.pattern.permute.xlu0 0
  %1982 = vperm.xlu0 %1981, %v1568
  %v1983 = vpop.permute.xlu0 %1982
  %v1985 = vadd.f32 %v1972, %v1983
  %v1986 = vadd.f32 %v1973, %v1983
  %v1987 = vadd.f32 %v1974, %v1983
  %v1988 = vadd.f32 %v1975, %v1983
  %v1989 = vadd.f32 %v1976, %v1983
  %v1990 = vadd.f32 %v1977, %v1983
  %v1991 = vadd.f32 %v1978, %v1983
  %v1992 = vadd.f32 %v1979, %v1983
  %v1993 = vmax.f32 %v1985, 0.0
  %v1994 = vmax.f32 %v1986, 0.0
  %v1995 = vmax.f32 %v1987, 0.0
  %v1996 = vmax.f32 %v1988, 0.0
  %v1997 = vmax.f32 %v1989, 0.0
  %v1998 = vmax.f32 %v1990, 0.0
  %v1999 = vmax.f32 %v1991, 0.0
  %v2000 = vmax.f32 %v1992, 0.0
  %2001 = vst [vmem:[%s9] sm:$0xf] %v1993
  %2002 = vst [vmem:[%s9 + $0x8] sm:$0xf] %v1994
  %2003 = vst [vmem:[%s9 + $0x10] sm:$0xf] %v1995
  %2004 = vst [vmem:[%s9 + $0x18] sm:$0xf] %v1996
  %2005 = vst [vmem:[%s9 + $0x20] sm:$0xf] %v1997
  %2006 = vst [vmem:[%s9 + $0x28] sm:$0xf] %v1998
  %2007 = vst [vmem:[%s9 + $0x30] sm:$0xf] %v1999
  %2008 = vst [vmem:[%s9 + $0x38] sm:$0xf] %v2000
  %v2009 = vlaneseq
  %v2010 = vshrl.u32 %v2009, 7
  %v2011 = vsub.s32 0, %v2010
  %v2012 = vrot.slane %v1556, %v2011
  %v2013 = vlaneseq
  %v2014 = vshrl.u32 %v2013, 7
  %v2015 = vsub.s32 0, %v2014
  %v2016 = vrot.slane %v1557, %v2015
  %v2017 = vlaneseq
  %v2018 = vshrl.u32 %v2017, 7
  %v2019 = vsub.s32 0, %v2018
  %v2020 = vrot.slane %v1558, %v2019
  %v2021 = vlaneseq
  %v2022 = vshrl.u32 %v2021, 7
  %v2023 = vsub.s32 0, %v2022
  %v2024 = vrot.slane %v1559, %v2023
  %v2025 = vlaneseq
  %v2026 = vshrl.u32 %v2025, 7
  %v2027 = vsub.s32 0, %v2026
  %v2028 = vrot.slane %v1560, %v2027
  %v2029 = vlaneseq
  %v2030 = vshrl.u32 %v2029, 7
  %v2031 = vsub.s32 0, %v2030
  %v2032 = vrot.slane %v1561, %v2031
  %v2033 = vlaneseq
  %v2034 = vshrl.u32 %v2033, 7
  %v2035 = vsub.s32 0, %v2034
  %v2036 = vrot.slane %v1562, %v2035
  %v2037 = vlaneseq
  %v2038 = vshrl.u32 %v2037, 7
  %v2039 = vsub.s32 0, %v2038
  %v2040 = vrot.slane %v1563, %v2039
  %2042 = vset.pattern.permute.xlu0 0
  %2043 = vperm.xlu0 %2042, %v1566
  %v2044 = vpop.permute.xlu0 %2043
  %v2046 = vmul.f32 %v2012, %v2044
  %v2047 = vmul.f32 %v2016, %v2044
  %v2048 = vmul.f32 %v2020, %v2044
  %v2049 = vmul.f32 %v2024, %v2044
  %v2050 = vmul.f32 %v2028, %v2044
  %v2051 = vmul.f32 %v2032, %v2044
  %v2052 = vmul.f32 %v2036, %v2044
  %v2053 = vmul.f32 %v2040, %v2044
  %v2054 = vlaneseq
  %v2055 = vshrl.u32 %v2054, 7
  %v2056 = vsub.s32 1, %v2055
  %v2057 = vrot.slane %v1556, %v2056
  %v2058 = vlaneseq
  %v2059 = vshrl.u32 %v2058, 7
  %v2060 = vsub.s32 1, %v2059
  %v2061 = vrot.slane %v1557, %v2060
  %v2062 = vlaneseq
  %v2063 = vshrl.u32 %v2062, 7
  %v2064 = vsub.s32 1, %v2063
  %v2065 = vrot.slane %v1558, %v2064
  %v2066 = vlaneseq
  %v2067 = vshrl.u32 %v2066, 7
  %v2068 = vsub.s32 1, %v2067
  %v2069 = vrot.slane %v1559, %v2068
  %v2070 = vlaneseq
  %v2071 = vshrl.u32 %v2070, 7
  %v2072 = vsub.s32 1, %v2071
  %v2073 = vrot.slane %v1560, %v2072
  %v2074 = vlaneseq
  %v2075 = vshrl.u32 %v2074, 7
  %v2076 = vsub.s32 1, %v2075
  %v2077 = vrot.slane %v1561, %v2076
  %v2078 = vlaneseq
  %v2079 = vshrl.u32 %v2078, 7
  %v2080 = vsub.s32 1, %v2079
  %v2081 = vrot.slane %v1562, %v2080
  %v2082 = vlaneseq
  %v2083 = vshrl.u32 %v2082, 7
  %v2084 = vsub.s32 1, %v2083
  %v2085 = vrot.slane %v1563, %v2084
  %2086 = vset.pattern.permute.xlu0 1
  %2087 = vperm.xlu0 %2086, %v1566
  %v2088 = vpop.permute.xlu0 %2087
  %v2090 = vmul.f32 %v2057, %v2088
  %v2091 = vmul.f32 %v2061, %v2088
  %v2092 = vmul.f32 %v2065, %v2088
  %v2093 = vmul.f32 %v2069, %v2088
  %v2094 = vmul.f32 %v2073, %v2088
  %v2095 = vmul.f32 %v2077, %v2088
  %v2096 = vmul.f32 %v2081, %v2088
  %v2097 = vmul.f32 %v2085, %v2088
  %v2098 = vadd.f32 %v2046, %v2090
  %v2099 = vadd.f32 %v2047, %v2091
  %v2100 = vadd.f32 %v2048, %v2092
  %v2101 = vadd.f32 %v2049, %v2093
  %v2102 = vadd.f32 %v2050, %v2094
  %v2103 = vadd.f32 %v2051, %v2095
  %v2104 = vadd.f32 %v2052, %v2096
  %v2105 = vadd.f32 %v2053, %v2097
  %v2106 = vlaneseq
  %v2107 = vshrl.u32 %v2106, 7
  %v2108 = vsub.s32 2, %v2107
  %v2109 = vrot.slane %v1556, %v2108
  %v2110 = vlaneseq
  %v2111 = vshrl.u32 %v2110, 7
  %v2112 = vsub.s32 2, %v2111
  %v2113 = vrot.slane %v1557, %v2112
  %v2114 = vlaneseq
  %v2115 = vshrl.u32 %v2114, 7
  %v2116 = vsub.s32 2, %v2115
  %v2117 = vrot.slane %v1558, %v2116
  %v2118 = vlaneseq
  %v2119 = vshrl.u32 %v2118, 7
  %v2120 = vsub.s32 2, %v2119
  %v2121 = vrot.slane %v1559, %v2120
  %v2122 = vlaneseq
  %v2123 = vshrl.u32 %v2122, 7
  %v2124 = vsub.s32 2, %v2123
  %v2125 = vrot.slane %v1560, %v2124
  %v2126 = vlaneseq
  %v2127 = vshrl.u32 %v2126, 7
  %v2128 = vsub.s32 2, %v2127
  %v2129 = vrot.slane %v1561, %v2128
  %v2130 = vlaneseq
  %v2131 = vshrl.u32 %v2130, 7
  %v2132 = vsub.s32 2, %v2131
  %v2133 = vrot.slane %v1562, %v2132
  %v2134 = vlaneseq
  %v2135 = vshrl.u32 %v2134, 7
  %v2136 = vsub.s32 2, %v2135
  %v2137 = vrot.slane %v1563, %v2136
  %2138 = vset.pattern.permute.xlu0 2
  %2139 = vperm.xlu0 %2138, %v1566
  %v2140 = vpop.permute.xlu0 %2139
  %v2142 = vmul.f32 %v2109, %v2140
  %v2143 = vmul.f32 %v2113, %v2140
  %v2144 = vmul.f32 %v2117, %v2140
  %v2145 = vmul.f32 %v2121, %v2140
  %v2146 = vmul.f32 %v2125, %v2140
  %v2147 = vmul.f32 %v2129, %v2140
  %v2148 = vmul.f32 %v2133, %v2140
  %v2149 = vmul.f32 %v2137, %v2140
  %v2150 = vadd.f32 %v2098, %v2142
  %v2151 = vadd.f32 %v2099, %v2143
  %v2152 = vadd.f32 %v2100, %v2144
  %v2153 = vadd.f32 %v2101, %v2145
  %v2154 = vadd.f32 %v2102, %v2146
  %v2155 = vadd.f32 %v2103, %v2147
  %v2156 = vadd.f32 %v2104, %v2148
  %v2157 = vadd.f32 %v2105, %v2149
  %v2158 = vlaneseq
  %v2159 = vshrl.u32 %v2158, 7
  %v2160 = vsub.s32 3, %v2159
  %v2161 = vrot.slane %v1556, %v2160
  %v2162 = vlaneseq
  %v2163 = vshrl.u32 %v2162, 7
  %v2164 = vsub.s32 3, %v2163
  %v2165 = vrot.slane %v1557, %v2164
  %v2166 = vlaneseq
  %v2167 = vshrl.u32 %v2166, 7
  %v2168 = vsub.s32 3, %v2167
  %v2169 = vrot.slane %v1558, %v2168
  %v2170 = vlaneseq
  %v2171 = vshrl.u32 %v2170, 7
  %v2172 = vsub.s32 3, %v2171
  %v2173 = vrot.slane %v1559, %v2172
  %v2174 = vlaneseq
  %v2175 = vshrl.u32 %v2174, 7
  %v2176 = vsub.s32 3, %v2175
  %v2177 = vrot.slane %v1560, %v2176
  %v2178 = vlaneseq
  %v2179 = vshrl.u32 %v2178, 7
  %v2180 = vsub.s32 3, %v2179
  %v2181 = vrot.slane %v1561, %v2180
  %v2182 = vlaneseq
  %v2183 = vshrl.u32 %v2182, 7
  %v2184 = vsub.s32 3, %v2183
  %v2185 = vrot.slane %v1562, %v2184
  %v2186 = vlaneseq
  %v2187 = vshrl.u32 %v2186, 7
  %v2188 = vsub.s32 3, %v2187
  %v2189 = vrot.slane %v1563, %v2188
  %2190 = vset.pattern.permute.xlu0 3
  %2191 = vperm.xlu0 %2190, %v1566
  %v2192 = vpop.permute.xlu0 %2191
  %v2194 = vmul.f32 %v2161, %v2192
  %v2195 = vmul.f32 %v2165, %v2192
  %v2196 = vmul.f32 %v2169, %v2192
  %v2197 = vmul.f32 %v2173, %v2192
  %v2198 = vmul.f32 %v2177, %v2192
  %v2199 = vmul.f32 %v2181, %v2192
  %v2200 = vmul.f32 %v2185, %v2192
  %v2201 = vmul.f32 %v2189, %v2192
  %v2202 = vadd.f32 %v2150, %v2194
  %v2203 = vadd.f32 %v2151, %v2195
  %v2204 = vadd.f32 %v2152, %v2196
  %v2205 = vadd.f32 %v2153, %v2197
  %v2206 = vadd.f32 %v2154, %v2198
  %v2207 = vadd.f32 %v2155, %v2199
  %v2208 = vadd.f32 %v2156, %v2200
  %v2209 = vadd.f32 %v2157, %v2201
  %2210 = vst [vmem:[%s10] sm:$0xf] %v2202
  %2211 = vst [vmem:[%s10 + $0x8] sm:$0xf] %v2203
  %2212 = vst [vmem:[%s10 + $0x10] sm:$0xf] %v2204
  %2213 = vst [vmem:[%s10 + $0x18] sm:$0xf] %v2205
  %2214 = vst [vmem:[%s10 + $0x20] sm:$0xf] %v2206
  %2215 = vst [vmem:[%s10 + $0x28] sm:$0xf] %v2207
  %2216 = vst [vmem:[%s10 + $0x30] sm:$0xf] %v2208
  %2217 = vst [vmem:[%s10 + $0x38] sm:$0xf] %v2209
  %v2218 = vlaneseq
  %v2219 = vshrl.u32 %v2218, 7
  %v2220 = vsub.s32 0, %v2219
  %v2221 = vrot.slane %v44, %v2220
  %v2222 = vlaneseq
  %v2223 = vshrl.u32 %v2222, 7
  %v2224 = vsub.s32 0, %v2223
  %v2225 = vrot.slane %v45, %v2224
  %v2226 = vlaneseq
  %v2227 = vshrl.u32 %v2226, 7
  %v2228 = vsub.s32 0, %v2227
  %v2229 = vrot.slane %v46, %v2228
  %v2230 = vlaneseq
  %v2231 = vshrl.u32 %v2230, 7
  %v2232 = vsub.s32 0, %v2231
  %v2233 = vrot.slane %v47, %v2232
  %v2234 = vlaneseq
  %v2235 = vshrl.u32 %v2234, 7
  %v2236 = vsub.s32 0, %v2235
  %v2237 = vrot.slane %v48, %v2236
  %v2238 = vlaneseq
  %v2239 = vshrl.u32 %v2238, 7
  %v2240 = vsub.s32 0, %v2239
  %v2241 = vrot.slane %v49, %v2240
  %v2242 = vlaneseq
  %v2243 = vshrl.u32 %v2242, 7
  %v2244 = vsub.s32 0, %v2243
  %v2245 = vrot.slane %v50, %v2244
  %v2246 = vlaneseq
  %v2247 = vshrl.u32 %v2246, 7
  %v2248 = vsub.s32 0, %v2247
  %v2249 = vrot.slane %v51, %v2248
  %v2250 = vlaneseq
  %v2251 = vshrl.u32 %v2250, 7
  %v2252 = vsub.s32 0, %v2251
  %v2253 = vrot.slane %v52, %v2252
  %2255 = vset.pattern.permute.xlu0 0
  %2256 = vperm.xlu0 %2255, %v1567
  %v2257 = vpop.permute.xlu0 %2256
  %v2259 = vmul.f32 %v2221, %v2257
  %v2260 = vmul.f32 %v2225, %v2257
  %v2261 = vmul.f32 %v2229, %v2257
  %v2262 = vmul.f32 %v2233, %v2257
  %v2263 = vmul.f32 %v2237, %v2257
  %v2264 = vmul.f32 %v2241, %v2257
  %v2265 = vmul.f32 %v2245, %v2257
  %v2266 = vmul.f32 %v2249, %v2257
  %v2267 = vmul.f32 %v2253, %v2257
  %v2268 = vlaneseq
  %v2269 = vshrl.u32 %v2268, 7
  %v2270 = vsub.s32 1, %v2269
  %v2271 = vrot.slane %v44, %v2270
  %v2272 = vlaneseq
  %v2273 = vshrl.u32 %v2272, 7
  %v2274 = vsub.s32 1, %v2273
  %v2275 = vrot.slane %v45, %v2274
  %v2276 = vlaneseq
  %v2277 = vshrl.u32 %v2276, 7
  %v2278 = vsub.s32 1, %v2277
  %v2279 = vrot.slane %v46, %v2278
  %v2280 = vlaneseq
  %v2281 = vshrl.u32 %v2280, 7
  %v2282 = vsub.s32 1, %v2281
  %v2283 = vrot.slane %v47, %v2282
  %v2284 = vlaneseq
  %v2285 = vshrl.u32 %v2284, 7
  %v2286 = vsub.s32 1, %v2285
  %v2287 = vrot.slane %v48, %v2286
  %v2288 = vlaneseq
  %v2289 = vshrl.u32 %v2288, 7
  %v2290 = vsub.s32 1, %v2289
  %v2291 = vrot.slane %v49, %v2290
  %v2292 = vlaneseq
  %v2293 = vshrl.u32 %v2292, 7
  %v2294 = vsub.s32 1, %v2293
  %v2295 = vrot.slane %v50, %v2294
  %v2296 = vlaneseq
  %v2297 = vshrl.u32 %v2296, 7
  %v2298 = vsub.s32 1, %v2297
  %v2299 = vrot.slane %v51, %v2298
  %v2300 = vlaneseq
  %v2301 = vshrl.u32 %v2300, 7
  %v2302 = vsub.s32 1, %v2301
  %v2303 = vrot.slane %v52, %v2302
  %2304 = vset.pattern.permute.xlu0 1
  %2305 = vperm.xlu0 %2304, %v1567
  %v2306 = vpop.permute.xlu0 %2305
  %v2308 = vmul.f32 %v2271, %v2306
  %v2309 = vmul.f32 %v2275, %v2306
  %v2310 = vmul.f32 %v2279, %v2306
  %v2311 = vmul.f32 %v2283, %v2306
  %v2312 = vmul.f32 %v2287, %v2306
  %v2313 = vmul.f32 %v2291, %v2306
  %v2314 = vmul.f32 %v2295, %v2306
  %v2315 = vmul.f32 %v2299, %v2306
  %v2316 = vmul.f32 %v2303, %v2306
  %v2317 = vadd.f32 %v2259, %v2308
  %v2318 = vadd.f32 %v2260, %v2309
  %v2319 = vadd.f32 %v2261, %v2310
  %v2320 = vadd.f32 %v2262, %v2311
  %v2321 = vadd.f32 %v2263, %v2312
  %v2322 = vadd.f32 %v2264, %v2313
  %v2323 = vadd.f32 %v2265, %v2314
  %v2324 = vadd.f32 %v2266, %v2315
  %v2325 = vadd.f32 %v2267, %v2316
  %v2326 = vlaneseq
  %v2327 = vshrl.u32 %v2326, 7
  %v2328 = vsub.s32 2, %v2327
  %v2329 = vrot.slane %v44, %v2328
  %v2330 = vlaneseq
  %v2331 = vshrl.u32 %v2330, 7
  %v2332 = vsub.s32 2, %v2331
  %v2333 = vrot.slane %v45, %v2332
  %v2334 = vlaneseq
  %v2335 = vshrl.u32 %v2334, 7
  %v2336 = vsub.s32 2, %v2335
  %v2337 = vrot.slane %v46, %v2336
  %v2338 = vlaneseq
  %v2339 = vshrl.u32 %v2338, 7
  %v2340 = vsub.s32 2, %v2339
  %v2341 = vrot.slane %v47, %v2340
  %v2342 = vlaneseq
  %v2343 = vshrl.u32 %v2342, 7
  %v2344 = vsub.s32 2, %v2343
  %v2345 = vrot.slane %v48, %v2344
  %v2346 = vlaneseq
  %v2347 = vshrl.u32 %v2346, 7
  %v2348 = vsub.s32 2, %v2347
  %v2349 = vrot.slane %v49, %v2348
  %v2350 = vlaneseq
  %v2351 = vshrl.u32 %v2350, 7
  %v2352 = vsub.s32 2, %v2351
  %v2353 = vrot.slane %v50, %v2352
  %v2354 = vlaneseq
  %v2355 = vshrl.u32 %v2354, 7
  %v2356 = vsub.s32 2, %v2355
  %v2357 = vrot.slane %v51, %v2356
  %v2358 = vlaneseq
  %v2359 = vshrl.u32 %v2358, 7
  %v2360 = vsub.s32 2, %v2359
  %v2361 = vrot.slane %v52, %v2360
  %2362 = vset.pattern.permute.xlu0 2
  %2363 = vperm.xlu0 %2362, %v1567
  %v2364 = vpop.permute.xlu0 %2363
  %v2366 = vmul.f32 %v2329, %v2364
  %v2367 = vmul.f32 %v2333, %v2364
  %v2368 = vmul.f32 %v2337, %v2364
  %v2369 = vmul.f32 %v2341, %v2364
  %v2370 = vmul.f32 %v2345, %v2364
  %v2371 = vmul.f32 %v2349, %v2364
  %v2372 = vmul.f32 %v2353, %v2364
  %v2373 = vmul.f32 %v2357, %v2364
  %v2374 = vmul.f32 %v2361, %v2364
  %v2375 = vadd.f32 %v2317, %v2366
  %v2376 = vadd.f32 %v2318, %v2367
  %v2377 = vadd.f32 %v2319, %v2368
  %v2378 = vadd.f32 %v2320, %v2369
  %v2379 = vadd.f32 %v2321, %v2370
  %v2380 = vadd.f32 %v2322, %v2371
  %v2381 = vadd.f32 %v2323, %v2372
  %v2382 = vadd.f32 %v2324, %v2373
  %v2383 = vadd.f32 %v2325, %v2374
  %v2384 = vlaneseq
  %v2385 = vshrl.u32 %v2384, 7
  %v2386 = vsub.s32 3, %v2385
  %v2387 = vrot.slane %v44, %v2386
  %v2388 = vlaneseq
  %v2389 = vshrl.u32 %v2388, 7
  %v2390 = vsub.s32 3, %v2389
  %v2391 = vrot.slane %v45, %v2390
  %v2392 = vlaneseq
  %v2393 = vshrl.u32 %v2392, 7
  %v2394 = vsub.s32 3, %v2393
  %v2395 = vrot.slane %v46, %v2394
  %v2396 = vlaneseq
  %v2397 = vshrl.u32 %v2396, 7
  %v2398 = vsub.s32 3, %v2397
  %v2399 = vrot.slane %v47, %v2398
  %v2400 = vlaneseq
  %v2401 = vshrl.u32 %v2400, 7
  %v2402 = vsub.s32 3, %v2401
  %v2403 = vrot.slane %v48, %v2402
  %v2404 = vlaneseq
  %v2405 = vshrl.u32 %v2404, 7
  %v2406 = vsub.s32 3, %v2405
  %v2407 = vrot.slane %v49, %v2406
  %v2408 = vlaneseq
  %v2409 = vshrl.u32 %v2408, 7
  %v2410 = vsub.s32 3, %v2409
  %v2411 = vrot.slane %v50, %v2410
  %v2412 = vlaneseq
  %v2413 = vshrl.u32 %v2412, 7
  %v2414 = vsub.s32 3, %v2413
  %v2415 = vrot.slane %v51, %v2414
  %v2416 = vlaneseq
  %v2417 = vshrl.u32 %v2416, 7
  %v2418 = vsub.s32 3, %v2417
  %v2419 = vrot.slane %v52, %v2418
  %2420 = vset.pattern.permute.xlu0 3
  %2421 = vperm.xlu0 %2420, %v1567
  %v2422 = vpop.permute.xlu0 %2421
  %v2424 = vmul.f32 %v2387, %v2422
  %v2425 = vmul.f32 %v2391, %v2422
  %v2426 = vmul.f32 %v2395, %v2422
  %v2427 = vmul.f32 %v2399, %v2422
  %v2428 = vmul.f32 %v2403, %v2422
  %v2429 = vmul.f32 %v2407, %v2422
  %v2430 = vmul.f32 %v2411, %v2422
  %v2431 = vmul.f32 %v2415, %v2422
  %v2432 = vmul.f32 %v2419, %v2422
  %v2433 = vadd.f32 %v2375, %v2424
  %v2434 = vadd.f32 %v2376, %v2425
  %v2435 = vadd.f32 %v2377, %v2426
  %v2436 = vadd.f32 %v2378, %v2427
  %v2437 = vadd.f32 %v2379, %v2428
  %v2438 = vadd.f32 %v2380, %v2429
  %v2439 = vadd.f32 %v2381, %v2430
  %v2440 = vadd.f32 %v2382, %v2431
  %v2441 = vadd.f32 %v2383, %v2432
  %2443 = vset.pattern.permute.xlu0 0
  %2444 = vperm.xlu0 %2443, %v1569
  %v2445 = vpop.permute.xlu0 %2444
  %v2447 = vadd.f32 %v2433, %v2445
  %v2448 = vadd.f32 %v2434, %v2445
  %v2449 = vadd.f32 %v2435, %v2445
  %v2450 = vadd.f32 %v2436, %v2445
  %v2451 = vadd.f32 %v2437, %v2445
  %v2452 = vadd.f32 %v2438, %v2445
  %v2453 = vadd.f32 %v2439, %v2445
  %v2454 = vadd.f32 %v2440, %v2445
  %v2455 = vadd.f32 %v2441, %v2445
  %v2456 = vmax.f32 %v2447, 0.0
  %v2457 = vmax.f32 %v2448, 0.0
  %v2458 = vmax.f32 %v2449, 0.0
  %v2459 = vmax.f32 %v2450, 0.0
  %v2460 = vmax.f32 %v2451, 0.0
  %v2461 = vmax.f32 %v2452, 0.0
  %v2462 = vmax.f32 %v2453, 0.0
  %v2463 = vmax.f32 %v2454, 0.0
  %v2464 = vmax.f32 %v2455, 0.0
  %v2474 = vcombine.low %v2456, %v2457
  %v2475 = vcombine.low %v2458, %v2459
  %v2476 = vcombine.low %v2460, %v2461
  %v2477 = vcombine.low %v2462, %v2463
  %2478 = vrot.lane.b32.xlu0 %v2474, 95
  %v2479 = vpop.permute.xlu0 %2478
  %2480 = vrot.lane.b32.xlu0 %v2475, 95
  %v2481 = vpop.permute.xlu0 %2480
  %2482 = vrot.lane.b32.xlu0 %v2476, 95
  %v2483 = vpop.permute.xlu0 %2482
  %2484 = vrot.lane.b32.xlu0 %v2477, 95
  %v2485 = vpop.permute.xlu0 %2484
  %2486 = vrot.lane.b32.xlu0 %v2464, 95
  %v2487 = vpop.permute.xlu0 %2486
  %v2488 = vrot.slane %v2479, 4
  %v2489 = vrot.slane %v2481, 4
  %v2490 = vrot.slane %v2483, 4
  %v2491 = vrot.slane %v2485, 4
  %v2492 = vrot.slane %v2487, 4
  %vm2493 = vcmask 1043456
  %v2494 = vsel %vm2493, %v2488, %v2489
  %v2495 = vsel %vm741, %v2479, %v2494
  %v2496 = vsel %vm2493, %v2489, %v2490
  %v2497 = vsel %vm741, %v2481, %v2496
  %v2498 = vsel %vm2493, %v2490, %v2491
  %v2499 = vsel %vm741, %v2483, %v2498
  %v2500 = vsel %vm2493, %v2491, %v2492
  %v2501 = vsel %vm741, %v2485, %v2500
  %2506 = vst [vmem:[%s11] sm:$0x33] %v2495
  %2507 = vst [vmem:[%s11 + $0x8] sm:$0x33] %v2497
  %2508 = vst [vmem:[%s11 + $0x10] sm:$0x33] %v2499
  %2509 = vst [vmem:[%s11 + $0x18] sm:$0x33] %v2501
  %v2510 = vlaneseq
  %v2511 = vshrl.u32 %v2510, 7
  %v2512 = vsub.s32 4, %v2511
  %v2513 = vrot.slane %v1510, %v2512
  %v2514 = vlaneseq
  %v2515 = vshrl.u32 %v2514, 7
  %v2516 = vsub.s32 4, %v2515
  %v2517 = vrot.slane %v1511, %v2516
  %v2518 = vlaneseq
  %v2519 = vshrl.u32 %v2518, 7
  %v2520 = vsub.s32 4, %v2519
  %v2521 = vrot.slane %v1512, %v2520
  %v2522 = vlaneseq
  %v2523 = vshrl.u32 %v2522, 7
  %v2524 = vsub.s32 4, %v2523
  %v2525 = vrot.slane %v1513, %v2524
  %v2526 = vlaneseq
  %v2527 = vshrl.u32 %v2526, 7
  %v2528 = vsub.s32 4, %v2527
  %v2529 = vrot.slane %v1514, %v2528
  %v2530 = vlaneseq
  %v2531 = vshrl.u32 %v2530, 7
  %v2532 = vsub.s32 4, %v2531
  %v2533 = vrot.slane %v1515, %v2532
  %v2534 = vlaneseq
  %v2535 = vshrl.u32 %v2534, 7
  %v2536 = vsub.s32 4, %v2535
  %v2537 = vrot.slane %v1516, %v2536
  %v2538 = vlaneseq
  %v2539 = vshrl.u32 %v2538, 7
  %v2540 = vsub.s32 4, %v2539
  %v2541 = vrot.slane %v1517, %v2540
  %v2542 = vmul.f32 %v2513, %v1605
  %v2543 = vmul.f32 %v2517, %v1605
  %v2544 = vmul.f32 %v2521, %v1605
  %v2545 = vmul.f32 %v2525, %v1605
  %v2546 = vmul.f32 %v2529, %v1605
  %v2547 = vmul.f32 %v2533, %v1605
  %v2548 = vmul.f32 %v2537, %v1605
  %v2549 = vmul.f32 %v2541, %v1605
  %v2550 = vlaneseq
  %v2551 = vshrl.u32 %v2550, 7
  %v2552 = vsub.s32 5, %v2551
  %v2553 = vrot.slane %v1510, %v2552
  %v2554 = vlaneseq
  %v2555 = vshrl.u32 %v2554, 7
  %v2556 = vsub.s32 5, %v2555
  %v2557 = vrot.slane %v1511, %v2556
  %v2558 = vlaneseq
  %v2559 = vshrl.u32 %v2558, 7
  %v2560 = vsub.s32 5, %v2559
  %v2561 = vrot.slane %v1512, %v2560
  %v2562 = vlaneseq
  %v2563 = vshrl.u32 %v2562, 7
  %v2564 = vsub.s32 5, %v2563
  %v2565 = vrot.slane %v1513, %v2564
  %v2566 = vlaneseq
  %v2567 = vshrl.u32 %v2566, 7
  %v2568 = vsub.s32 5, %v2567
  %v2569 = vrot.slane %v1514, %v2568
  %v2570 = vlaneseq
  %v2571 = vshrl.u32 %v2570, 7
  %v2572 = vsub.s32 5, %v2571
  %v2573 = vrot.slane %v1515, %v2572
  %v2574 = vlaneseq
  %v2575 = vshrl.u32 %v2574, 7
  %v2576 = vsub.s32 5, %v2575
  %v2577 = vrot.slane %v1516, %v2576
  %v2578 = vlaneseq
  %v2579 = vshrl.u32 %v2578, 7
  %v2580 = vsub.s32 5, %v2579
  %v2581 = vrot.slane %v1517, %v2580
  %v2582 = vmul.f32 %v2553, %v1649
  %v2583 = vmul.f32 %v2557, %v1649
  %v2584 = vmul.f32 %v2561, %v1649
  %v2585 = vmul.f32 %v2565, %v1649
  %v2586 = vmul.f32 %v2569, %v1649
  %v2587 = vmul.f32 %v2573, %v1649
  %v2588 = vmul.f32 %v2577, %v1649
  %v2589 = vmul.f32 %v2581, %v1649
  %v2590 = vadd.f32 %v2542, %v2582
  %v2591 = vadd.f32 %v2543, %v2583
  %v2592 = vadd.f32 %v2544, %v2584
  %v2593 = vadd.f32 %v2545, %v2585
  %v2594 = vadd.f32 %v2546, %v2586
  %v2595 = vadd.f32 %v2547, %v2587
  %v2596 = vadd.f32 %v2548, %v2588
  %v2597 = vadd.f32 %v2549, %v2589
  %v2598 = vlaneseq
  %v2599 = vshrl.u32 %v2598, 7
  %v2600 = vsub.s32 6, %v2599
  %v2601 = vrot.slane %v1510, %v2600
  %v2602 = vlaneseq
  %v2603 = vshrl.u32 %v2602, 7
  %v2604 = vsub.s32 6, %v2603
  %v2605 = vrot.slane %v1511, %v2604
  %v2606 = vlaneseq
  %v2607 = vshrl.u32 %v2606, 7
  %v2608 = vsub.s32 6, %v2607
  %v2609 = vrot.slane %v1512, %v2608
  %v2610 = vlaneseq
  %v2611 = vshrl.u32 %v2610, 7
  %v2612 = vsub.s32 6, %v2611
  %v2613 = vrot.slane %v1513, %v2612
  %v2614 = vlaneseq
  %v2615 = vshrl.u32 %v2614, 7
  %v2616 = vsub.s32 6, %v2615
  %v2617 = vrot.slane %v1514, %v2616
  %v2618 = vlaneseq
  %v2619 = vshrl.u32 %v2618, 7
  %v2620 = vsub.s32 6, %v2619
  %v2621 = vrot.slane %v1515, %v2620
  %v2622 = vlaneseq
  %v2623 = vshrl.u32 %v2622, 7
  %v2624 = vsub.s32 6, %v2623
  %v2625 = vrot.slane %v1516, %v2624
  %v2626 = vlaneseq
  %v2627 = vshrl.u32 %v2626, 7
  %v2628 = vsub.s32 6, %v2627
  %v2629 = vrot.slane %v1517, %v2628
  %v2630 = vmul.f32 %v2601, %v1701
  %v2631 = vmul.f32 %v2605, %v1701
  %v2632 = vmul.f32 %v2609, %v1701
  %v2633 = vmul.f32 %v2613, %v1701
  %v2634 = vmul.f32 %v2617, %v1701
  %v2635 = vmul.f32 %v2621, %v1701
  %v2636 = vmul.f32 %v2625, %v1701
  %v2637 = vmul.f32 %v2629, %v1701
  %v2638 = vadd.f32 %v2590, %v2630
  %v2639 = vadd.f32 %v2591, %v2631
  %v2640 = vadd.f32 %v2592, %v2632
  %v2641 = vadd.f32 %v2593, %v2633
  %v2642 = vadd.f32 %v2594, %v2634
  %v2643 = vadd.f32 %v2595, %v2635
  %v2644 = vadd.f32 %v2596, %v2636
  %v2645 = vadd.f32 %v2597, %v2637
  %v2646 = vlaneseq
  %v2647 = vshrl.u32 %v2646, 7
  %v2648 = vsub.s32 7, %v2647
  %v2649 = vrot.slane %v1510, %v2648
  %v2650 = vlaneseq
  %v2651 = vshrl.u32 %v2650, 7
  %v2652 = vsub.s32 7, %v2651
  %v2653 = vrot.slane %v1511, %v2652
  %v2654 = vlaneseq
  %v2655 = vshrl.u32 %v2654, 7
  %v2656 = vsub.s32 7, %v2655
  %v2657 = vrot.slane %v1512, %v2656
  %v2658 = vlaneseq
  %v2659 = vshrl.u32 %v2658, 7
  %v2660 = vsub.s32 7, %v2659
  %v2661 = vrot.slane %v1513, %v2660
  %v2662 = vlaneseq
  %v2663 = vshrl.u32 %v2662, 7
  %v2664 = vsub.s32 7, %v2663
  %v2665 = vrot.slane %v1514, %v2664
  %v2666 = vlaneseq
  %v2667 = vshrl.u32 %v2666, 7
  %v2668 = vsub.s32 7, %v2667
  %v2669 = vrot.slane %v1515, %v2668
  %v2670 = vlaneseq
  %v2671 = vshrl.u32 %v2670, 7
  %v2672 = vsub.s32 7, %v2671
  %v2673 = vrot.slane %v1516, %v2672
  %v2674 = vlaneseq
  %v2675 = vshrl.u32 %v2674, 7
  %v2676 = vsub.s32 7, %v2675
  %v2677 = vrot.slane %v1517, %v2676
  %v2678 = vmul.f32 %v2649, %v1753
  %v2679 = vmul.f32 %v2653, %v1753
  %v2680 = vmul.f32 %v2657, %v1753
  %v2681 = vmul.f32 %v2661, %v1753
  %v2682 = vmul.f32 %v2665, %v1753
  %v2683 = vmul.f32 %v2669, %v1753
  %v2684 = vmul.f32 %v2673, %v1753
  %v2685 = vmul.f32 %v2677, %v1753
  %v2686 = vadd.f32 %v2638, %v2678
  %v2687 = vadd.f32 %v2639, %v2679
  %v2688 = vadd.f32 %v2640, %v2680
  %v2689 = vadd.f32 %v2641, %v2681
  %v2690 = vadd.f32 %v2642, %v2682
  %v2691 = vadd.f32 %v2643, %v2683
  %v2692 = vadd.f32 %v2644, %v2684
  %v2693 = vadd.f32 %v2645, %v2685
  %v2694 = vlaneseq
  %v2695 = vshrl.u32 %v2694, 7
  %v2696 = vsub.s32 4, %v2695
  %v2697 = vrot.slane %v1533, %v2696
  %v2698 = vlaneseq
  %v2699 = vshrl.u32 %v2698, 7
  %v2700 = vsub.s32 4, %v2699
  %v2701 = vrot.slane %v1534, %v2700
  %v2702 = vlaneseq
  %v2703 = vshrl.u32 %v2702, 7
  %v2704 = vsub.s32 4, %v2703
  %v2705 = vrot.slane %v1535, %v2704
  %v2706 = vlaneseq
  %v2707 = vshrl.u32 %v2706, 7
  %v2708 = vsub.s32 4, %v2707
  %v2709 = vrot.slane %v1536, %v2708
  %v2710 = vlaneseq
  %v2711 = vshrl.u32 %v2710, 7
  %v2712 = vsub.s32 4, %v2711
  %v2713 = vrot.slane %v1537, %v2712
  %v2714 = vlaneseq
  %v2715 = vshrl.u32 %v2714, 7
  %v2716 = vsub.s32 4, %v2715
  %v2717 = vrot.slane %v1538, %v2716
  %v2718 = vlaneseq
  %v2719 = vshrl.u32 %v2718, 7
  %v2720 = vsub.s32 4, %v2719
  %v2721 = vrot.slane %v1539, %v2720
  %v2722 = vlaneseq
  %v2723 = vshrl.u32 %v2722, 7
  %v2724 = vsub.s32 4, %v2723
  %v2725 = vrot.slane %v1540, %v2724
  %v2726 = vmul.f32 %v2697, %v1806
  %v2727 = vmul.f32 %v2701, %v1806
  %v2728 = vmul.f32 %v2705, %v1806
  %v2729 = vmul.f32 %v2709, %v1806
  %v2730 = vmul.f32 %v2713, %v1806
  %v2731 = vmul.f32 %v2717, %v1806
  %v2732 = vmul.f32 %v2721, %v1806
  %v2733 = vmul.f32 %v2725, %v1806
  %v2734 = vlaneseq
  %v2735 = vshrl.u32 %v2734, 7
  %v2736 = vsub.s32 5, %v2735
  %v2737 = vrot.slane %v1533, %v2736
  %v2738 = vlaneseq
  %v2739 = vshrl.u32 %v2738, 7
  %v2740 = vsub.s32 5, %v2739
  %v2741 = vrot.slane %v1534, %v2740
  %v2742 = vlaneseq
  %v2743 = vshrl.u32 %v2742, 7
  %v2744 = vsub.s32 5, %v2743
  %v2745 = vrot.slane %v1535, %v2744
  %v2746 = vlaneseq
  %v2747 = vshrl.u32 %v2746, 7
  %v2748 = vsub.s32 5, %v2747
  %v2749 = vrot.slane %v1536, %v2748
  %v2750 = vlaneseq
  %v2751 = vshrl.u32 %v2750, 7
  %v2752 = vsub.s32 5, %v2751
  %v2753 = vrot.slane %v1537, %v2752
  %v2754 = vlaneseq
  %v2755 = vshrl.u32 %v2754, 7
  %v2756 = vsub.s32 5, %v2755
  %v2757 = vrot.slane %v1538, %v2756
  %v2758 = vlaneseq
  %v2759 = vshrl.u32 %v2758, 7
  %v2760 = vsub.s32 5, %v2759
  %v2761 = vrot.slane %v1539, %v2760
  %v2762 = vlaneseq
  %v2763 = vshrl.u32 %v2762, 7
  %v2764 = vsub.s32 5, %v2763
  %v2765 = vrot.slane %v1540, %v2764
  %v2766 = vmul.f32 %v2737, %v1850
  %v2767 = vmul.f32 %v2741, %v1850
  %v2768 = vmul.f32 %v2745, %v1850
  %v2769 = vmul.f32 %v2749, %v1850
  %v2770 = vmul.f32 %v2753, %v1850
  %v2771 = vmul.f32 %v2757, %v1850
  %v2772 = vmul.f32 %v2761, %v1850
  %v2773 = vmul.f32 %v2765, %v1850
  %v2774 = vadd.f32 %v2726, %v2766
  %v2775 = vadd.f32 %v2727, %v2767
  %v2776 = vadd.f32 %v2728, %v2768
  %v2777 = vadd.f32 %v2729, %v2769
  %v2778 = vadd.f32 %v2730, %v2770
  %v2779 = vadd.f32 %v2731, %v2771
  %v2780 = vadd.f32 %v2732, %v2772
  %v2781 = vadd.f32 %v2733, %v2773
  %v2782 = vlaneseq
  %v2783 = vshrl.u32 %v2782, 7
  %v2784 = vsub.s32 6, %v2783
  %v2785 = vrot.slane %v1533, %v2784
  %v2786 = vlaneseq
  %v2787 = vshrl.u32 %v2786, 7
  %v2788 = vsub.s32 6, %v2787
  %v2789 = vrot.slane %v1534, %v2788
  %v2790 = vlaneseq
  %v2791 = vshrl.u32 %v2790, 7
  %v2792 = vsub.s32 6, %v2791
  %v2793 = vrot.slane %v1535, %v2792
  %v2794 = vlaneseq
  %v2795 = vshrl.u32 %v2794, 7
  %v2796 = vsub.s32 6, %v2795
  %v2797 = vrot.slane %v1536, %v2796
  %v2798 = vlaneseq
  %v2799 = vshrl.u32 %v2798, 7
  %v2800 = vsub.s32 6, %v2799
  %v2801 = vrot.slane %v1537, %v2800
  %v2802 = vlaneseq
  %v2803 = vshrl.u32 %v2802, 7
  %v2804 = vsub.s32 6, %v2803
  %v2805 = vrot.slane %v1538, %v2804
  %v2806 = vlaneseq
  %v2807 = vshrl.u32 %v2806, 7
  %v2808 = vsub.s32 6, %v2807
  %v2809 = vrot.slane %v1539, %v2808
  %v2810 = vlaneseq
  %v2811 = vshrl.u32 %v2810, 7
  %v2812 = vsub.s32 6, %v2811
  %v2813 = vrot.slane %v1540, %v2812
  %v2814 = vmul.f32 %v2785, %v1902
  %v2815 = vmul.f32 %v2789, %v1902
  %v2816 = vmul.f32 %v2793, %v1902
  %v2817 = vmul.f32 %v2797, %v1902
  %v2818 = vmul.f32 %v2801, %v1902
  %v2819 = vmul.f32 %v2805, %v1902
  %v2820 = vmul.f32 %v2809, %v1902
  %v2821 = vmul.f32 %v2813, %v1902
  %v2822 = vadd.f32 %v2774, %v2814
  %v2823 = vadd.f32 %v2775, %v2815
  %v2824 = vadd.f32 %v2776, %v2816
  %v2825 = vadd.f32 %v2777, %v2817
  %v2826 = vadd.f32 %v2778, %v2818
  %v2827 = vadd.f32 %v2779, %v2819
  %v2828 = vadd.f32 %v2780, %v2820
  %v2829 = vadd.f32 %v2781, %v2821
  %v2830 = vlaneseq
  %v2831 = vshrl.u32 %v2830, 7
  %v2832 = vsub.s32 7, %v2831
  %v2833 = vrot.slane %v1533, %v2832
  %v2834 = vlaneseq
  %v2835 = vshrl.u32 %v2834, 7
  %v2836 = vsub.s32 7, %v2835
  %v2837 = vrot.slane %v1534, %v2836
  %v2838 = vlaneseq
  %v2839 = vshrl.u32 %v2838, 7
  %v2840 = vsub.s32 7, %v2839
  %v2841 = vrot.slane %v1535, %v2840
  %v2842 = vlaneseq
  %v2843 = vshrl.u32 %v2842, 7
  %v2844 = vsub.s32 7, %v2843
  %v2845 = vrot.slane %v1536, %v2844
  %v2846 = vlaneseq
  %v2847 = vshrl.u32 %v2846, 7
  %v2848 = vsub.s32 7, %v2847
  %v2849 = vrot.slane %v1537, %v2848
  %v2850 = vlaneseq
  %v2851 = vshrl.u32 %v2850, 7
  %v2852 = vsub.s32 7, %v2851
  %v2853 = vrot.slane %v1538, %v2852
  %v2854 = vlaneseq
  %v2855 = vshrl.u32 %v2854, 7
  %v2856 = vsub.s32 7, %v2855
  %v2857 = vrot.slane %v1539, %v2856
  %v2858 = vlaneseq
  %v2859 = vshrl.u32 %v2858, 7
  %v2860 = vsub.s32 7, %v2859
  %v2861 = vrot.slane %v1540, %v2860
  %v2862 = vmul.f32 %v2833, %v1954
  %v2863 = vmul.f32 %v2837, %v1954
  %v2864 = vmul.f32 %v2841, %v1954
  %v2865 = vmul.f32 %v2845, %v1954
  %v2866 = vmul.f32 %v2849, %v1954
  %v2867 = vmul.f32 %v2853, %v1954
  %v2868 = vmul.f32 %v2857, %v1954
  %v2869 = vmul.f32 %v2861, %v1954
  %v2870 = vadd.f32 %v2822, %v2862
  %v2871 = vadd.f32 %v2823, %v2863
  %v2872 = vadd.f32 %v2824, %v2864
  %v2873 = vadd.f32 %v2825, %v2865
  %v2874 = vadd.f32 %v2826, %v2866
  %v2875 = vadd.f32 %v2827, %v2867
  %v2876 = vadd.f32 %v2828, %v2868
  %v2877 = vadd.f32 %v2829, %v2869
  %v2878 = vadd.f32 %v2686, %v2870
  %v2879 = vadd.f32 %v2687, %v2871
  %v2880 = vadd.f32 %v2688, %v2872
  %v2881 = vadd.f32 %v2689, %v2873
  %v2882 = vadd.f32 %v2690, %v2874
  %v2883 = vadd.f32 %v2691, %v2875
  %v2884 = vadd.f32 %v2692, %v2876
  %v2885 = vadd.f32 %v2693, %v2877
  %v2886 = vadd.f32 %v2878, %v1983
  %v2887 = vadd.f32 %v2879, %v1983
  %v2888 = vadd.f32 %v2880, %v1983
  %v2889 = vadd.f32 %v2881, %v1983
  %v2890 = vadd.f32 %v2882, %v1983
  %v2891 = vadd.f32 %v2883, %v1983
  %v2892 = vadd.f32 %v2884, %v1983
  %v2893 = vadd.f32 %v2885, %v1983
  %v2894 = vmax.f32 %v2886, 0.0
  %v2895 = vmax.f32 %v2887, 0.0
  %v2896 = vmax.f32 %v2888, 0.0
  %v2897 = vmax.f32 %v2889, 0.0
  %v2898 = vmax.f32 %v2890, 0.0
  %v2899 = vmax.f32 %v2891, 0.0
  %v2900 = vmax.f32 %v2892, 0.0
  %v2901 = vmax.f32 %v2893, 0.0
  %v2910 = vrot.slane %v2894, 4
  %v2911 = vrot.slane %v2895, 4
  %v2912 = vrot.slane %v2896, 4
  %v2913 = vrot.slane %v2897, 4
  %v2914 = vrot.slane %v2898, 4
  %v2915 = vrot.slane %v2899, 4
  %v2916 = vrot.slane %v2900, 4
  %v2917 = vrot.slane %v2901, 4
  %2926 = vst [vmem:[%s9] sm:$0xf0] %v2910
  %2927 = vst [vmem:[%s9 + $0x8] sm:$0xf0] %v2911
  %2928 = vst [vmem:[%s9 + $0x10] sm:$0xf0] %v2912
  %2929 = vst [vmem:[%s9 + $0x18] sm:$0xf0] %v2913
  %2930 = vst [vmem:[%s9 + $0x20] sm:$0xf0] %v2914
  %2931 = vst [vmem:[%s9 + $0x28] sm:$0xf0] %v2915
  %2932 = vst [vmem:[%s9 + $0x30] sm:$0xf0] %v2916
  %2933 = vst [vmem:[%s9 + $0x38] sm:$0xf0] %v2917
  %v2934 = vlaneseq
  %v2935 = vshrl.u32 %v2934, 7
  %v2936 = vsub.s32 4, %v2935
  %v2937 = vrot.slane %v1556, %v2936
  %v2938 = vlaneseq
  %v2939 = vshrl.u32 %v2938, 7
  %v2940 = vsub.s32 4, %v2939
  %v2941 = vrot.slane %v1557, %v2940
  %v2942 = vlaneseq
  %v2943 = vshrl.u32 %v2942, 7
  %v2944 = vsub.s32 4, %v2943
  %v2945 = vrot.slane %v1558, %v2944
  %v2946 = vlaneseq
  %v2947 = vshrl.u32 %v2946, 7
  %v2948 = vsub.s32 4, %v2947
  %v2949 = vrot.slane %v1559, %v2948
  %v2950 = vlaneseq
  %v2951 = vshrl.u32 %v2950, 7
  %v2952 = vsub.s32 4, %v2951
  %v2953 = vrot.slane %v1560, %v2952
  %v2954 = vlaneseq
  %v2955 = vshrl.u32 %v2954, 7
  %v2956 = vsub.s32 4, %v2955
  %v2957 = vrot.slane %v1561, %v2956
  %v2958 = vlaneseq
  %v2959 = vshrl.u32 %v2958, 7
  %v2960 = vsub.s32 4, %v2959
  %v2961 = vrot.slane %v1562, %v2960
  %v2962 = vlaneseq
  %v2963 = vshrl.u32 %v2962, 7
  %v2964 = vsub.s32 4, %v2963
  %v2965 = vrot.slane %v1563, %v2964
  %v2966 = vmul.f32 %v2937, %v2044
  %v2967 = vmul.f32 %v2941, %v2044
  %v2968 = vmul.f32 %v2945, %v2044
  %v2969 = vmul.f32 %v2949, %v2044
  %v2970 = vmul.f32 %v2953, %v2044
  %v2971 = vmul.f32 %v2957, %v2044
  %v2972 = vmul.f32 %v2961, %v2044
  %v2973 = vmul.f32 %v2965, %v2044
  %v2974 = vlaneseq
  %v2975 = vshrl.u32 %v2974, 7
  %v2976 = vsub.s32 5, %v2975
  %v2977 = vrot.slane %v1556, %v2976
  %v2978 = vlaneseq
  %v2979 = vshrl.u32 %v2978, 7
  %v2980 = vsub.s32 5, %v2979
  %v2981 = vrot.slane %v1557, %v2980
  %v2982 = vlaneseq
  %v2983 = vshrl.u32 %v2982, 7
  %v2984 = vsub.s32 5, %v2983
  %v2985 = vrot.slane %v1558, %v2984
  %v2986 = vlaneseq
  %v2987 = vshrl.u32 %v2986, 7
  %v2988 = vsub.s32 5, %v2987
  %v2989 = vrot.slane %v1559, %v2988
  %v2990 = vlaneseq
  %v2991 = vshrl.u32 %v2990, 7
  %v2992 = vsub.s32 5, %v2991
  %v2993 = vrot.slane %v1560, %v2992
  %v2994 = vlaneseq
  %v2995 = vshrl.u32 %v2994, 7
  %v2996 = vsub.s32 5, %v2995
  %v2997 = vrot.slane %v1561, %v2996
  %v2998 = vlaneseq
  %v2999 = vshrl.u32 %v2998, 7
  %v3000 = vsub.s32 5, %v2999
  %v3001 = vrot.slane %v1562, %v3000
  %v3002 = vlaneseq
  %v3003 = vshrl.u32 %v3002, 7
  %v3004 = vsub.s32 5, %v3003
  %v3005 = vrot.slane %v1563, %v3004
  %v3006 = vmul.f32 %v2977, %v2088
  %v3007 = vmul.f32 %v2981, %v2088
  %v3008 = vmul.f32 %v2985, %v2088
  %v3009 = vmul.f32 %v2989, %v2088
  %v3010 = vmul.f32 %v2993, %v2088
  %v3011 = vmul.f32 %v2997, %v2088
  %v3012 = vmul.f32 %v3001, %v2088
  %v3013 = vmul.f32 %v3005, %v2088
  %v3014 = vadd.f32 %v2966, %v3006
  %v3015 = vadd.f32 %v2967, %v3007
  %v3016 = vadd.f32 %v2968, %v3008
  %v3017 = vadd.f32 %v2969, %v3009
  %v3018 = vadd.f32 %v2970, %v3010
  %v3019 = vadd.f32 %v2971, %v3011
  %v3020 = vadd.f32 %v2972, %v3012
  %v3021 = vadd.f32 %v2973, %v3013
  %v3022 = vlaneseq
  %v3023 = vshrl.u32 %v3022, 7
  %v3024 = vsub.s32 6, %v3023
  %v3025 = vrot.slane %v1556, %v3024
  %v3026 = vlaneseq
  %v3027 = vshrl.u32 %v3026, 7
  %v3028 = vsub.s32 6, %v3027
  %v3029 = vrot.slane %v1557, %v3028
  %v3030 = vlaneseq
  %v3031 = vshrl.u32 %v3030, 7
  %v3032 = vsub.s32 6, %v3031
  %v3033 = vrot.slane %v1558, %v3032
  %v3034 = vlaneseq
  %v3035 = vshrl.u32 %v3034, 7
  %v3036 = vsub.s32 6, %v3035
  %v3037 = vrot.slane %v1559, %v3036
  %v3038 = vlaneseq
  %v3039 = vshrl.u32 %v3038, 7
  %v3040 = vsub.s32 6, %v3039
  %v3041 = vrot.slane %v1560, %v3040
  %v3042 = vlaneseq
  %v3043 = vshrl.u32 %v3042, 7
  %v3044 = vsub.s32 6, %v3043
  %v3045 = vrot.slane %v1561, %v3044
  %v3046 = vlaneseq
  %v3047 = vshrl.u32 %v3046, 7
  %v3048 = vsub.s32 6, %v3047
  %v3049 = vrot.slane %v1562, %v3048
  %v3050 = vlaneseq
  %v3051 = vshrl.u32 %v3050, 7
  %v3052 = vsub.s32 6, %v3051
  %v3053 = vrot.slane %v1563, %v3052
  %v3054 = vmul.f32 %v3025, %v2140
  %v3055 = vmul.f32 %v3029, %v2140
  %v3056 = vmul.f32 %v3033, %v2140
  %v3057 = vmul.f32 %v3037, %v2140
  %v3058 = vmul.f32 %v3041, %v2140
  %v3059 = vmul.f32 %v3045, %v2140
  %v3060 = vmul.f32 %v3049, %v2140
  %v3061 = vmul.f32 %v3053, %v2140
  %v3062 = vadd.f32 %v3014, %v3054
  %v3063 = vadd.f32 %v3015, %v3055
  %v3064 = vadd.f32 %v3016, %v3056
  %v3065 = vadd.f32 %v3017, %v3057
  %v3066 = vadd.f32 %v3018, %v3058
  %v3067 = vadd.f32 %v3019, %v3059
  %v3068 = vadd.f32 %v3020, %v3060
  %v3069 = vadd.f32 %v3021, %v3061
  %v3070 = vlaneseq
  %v3071 = vshrl.u32 %v3070, 7
  %v3072 = vsub.s32 7, %v3071
  %v3073 = vrot.slane %v1556, %v3072
  %v3074 = vlaneseq
  %v3075 = vshrl.u32 %v3074, 7
  %v3076 = vsub.s32 7, %v3075
  %v3077 = vrot.slane %v1557, %v3076
  %v3078 = vlaneseq
  %v3079 = vshrl.u32 %v3078, 7
  %v3080 = vsub.s32 7, %v3079
  %v3081 = vrot.slane %v1558, %v3080
  %v3082 = vlaneseq
  %v3083 = vshrl.u32 %v3082, 7
  %v3084 = vsub.s32 7, %v3083
  %v3085 = vrot.slane %v1559, %v3084
  %v3086 = vlaneseq
  %v3087 = vshrl.u32 %v3086, 7
  %v3088 = vsub.s32 7, %v3087
  %v3089 = vrot.slane %v1560, %v3088
  %v3090 = vlaneseq
  %v3091 = vshrl.u32 %v3090, 7
  %v3092 = vsub.s32 7, %v3091
  %v3093 = vrot.slane %v1561, %v3092
  %v3094 = vlaneseq
  %v3095 = vshrl.u32 %v3094, 7
  %v3096 = vsub.s32 7, %v3095
  %v3097 = vrot.slane %v1562, %v3096
  %v3098 = vlaneseq
  %v3099 = vshrl.u32 %v3098, 7
  %v3100 = vsub.s32 7, %v3099
  %v3101 = vrot.slane %v1563, %v3100
  %v3102 = vmul.f32 %v3073, %v2192
  %v3103 = vmul.f32 %v3077, %v2192
  %v3104 = vmul.f32 %v3081, %v2192
  %v3105 = vmul.f32 %v3085, %v2192
  %v3106 = vmul.f32 %v3089, %v2192
  %v3107 = vmul.f32 %v3093, %v2192
  %v3108 = vmul.f32 %v3097, %v2192
  %v3109 = vmul.f32 %v3101, %v2192
  %v3110 = vadd.f32 %v3062, %v3102
  %v3111 = vadd.f32 %v3063, %v3103
  %v3112 = vadd.f32 %v3064, %v3104
  %v3113 = vadd.f32 %v3065, %v3105
  %v3114 = vadd.f32 %v3066, %v3106
  %v3115 = vadd.f32 %v3067, %v3107
  %v3116 = vadd.f32 %v3068, %v3108
  %v3117 = vadd.f32 %v3069, %v3109
  %v3126 = vrot.slane %v3110, 4
  %v3127 = vrot.slane %v3111, 4
  %v3128 = vrot.slane %v3112, 4
  %v3129 = vrot.slane %v3113, 4
  %v3130 = vrot.slane %v3114, 4
  %v3131 = vrot.slane %v3115, 4
  %v3132 = vrot.slane %v3116, 4
  %v3133 = vrot.slane %v3117, 4
  %3142 = vst [vmem:[%s10] sm:$0xf0] %v3126
  %3143 = vst [vmem:[%s10 + $0x8] sm:$0xf0] %v3127
  %3144 = vst [vmem:[%s10 + $0x10] sm:$0xf0] %v3128
  %3145 = vst [vmem:[%s10 + $0x18] sm:$0xf0] %v3129
  %3146 = vst [vmem:[%s10 + $0x20] sm:$0xf0] %v3130
  %3147 = vst [vmem:[%s10 + $0x28] sm:$0xf0] %v3131
  %3148 = vst [vmem:[%s10 + $0x30] sm:$0xf0] %v3132
  %3149 = vst [vmem:[%s10 + $0x38] sm:$0xf0] %v3133
  %v3150 = vlaneseq
  %v3151 = vshrl.u32 %v3150, 7
  %v3152 = vsub.s32 4, %v3151
  %v3153 = vrot.slane %v44, %v3152
  %v3154 = vlaneseq
  %v3155 = vshrl.u32 %v3154, 7
  %v3156 = vsub.s32 4, %v3155
  %v3157 = vrot.slane %v45, %v3156
  %v3158 = vlaneseq
  %v3159 = vshrl.u32 %v3158, 7
  %v3160 = vsub.s32 4, %v3159
  %v3161 = vrot.slane %v46, %v3160
  %v3162 = vlaneseq
  %v3163 = vshrl.u32 %v3162, 7
  %v3164 = vsub.s32 4, %v3163
  %v3165 = vrot.slane %v47, %v3164
  %v3166 = vlaneseq
  %v3167 = vshrl.u32 %v3166, 7
  %v3168 = vsub.s32 4, %v3167
  %v3169 = vrot.slane %v48, %v3168
  %v3170 = vlaneseq
  %v3171 = vshrl.u32 %v3170, 7
  %v3172 = vsub.s32 4, %v3171
  %v3173 = vrot.slane %v49, %v3172
  %v3174 = vlaneseq
  %v3175 = vshrl.u32 %v3174, 7
  %v3176 = vsub.s32 4, %v3175
  %v3177 = vrot.slane %v50, %v3176
  %v3178 = vlaneseq
  %v3179 = vshrl.u32 %v3178, 7
  %v3180 = vsub.s32 4, %v3179
  %v3181 = vrot.slane %v51, %v3180
  %v3182 = vlaneseq
  %v3183 = vshrl.u32 %v3182, 7
  %v3184 = vsub.s32 4, %v3183
  %v3185 = vrot.slane %v52, %v3184
  %v3186 = vmul.f32 %v3153, %v2257
  %v3187 = vmul.f32 %v3157, %v2257
  %v3188 = vmul.f32 %v3161, %v2257
  %v3189 = vmul.f32 %v3165, %v2257
  %v3190 = vmul.f32 %v3169, %v2257
  %v3191 = vmul.f32 %v3173, %v2257
  %v3192 = vmul.f32 %v3177, %v2257
  %v3193 = vmul.f32 %v3181, %v2257
  %v3194 = vmul.f32 %v3185, %v2257
  %v3195 = vlaneseq
  %v3196 = vshrl.u32 %v3195, 7
  %v3197 = vsub.s32 5, %v3196
  %v3198 = vrot.slane %v44, %v3197
  %v3199 = vlaneseq
  %v3200 = vshrl.u32 %v3199, 7
  %v3201 = vsub.s32 5, %v3200
  %v3202 = vrot.slane %v45, %v3201
  %v3203 = vlaneseq
  %v3204 = vshrl.u32 %v3203, 7
  %v3205 = vsub.s32 5, %v3204
  %v3206 = vrot.slane %v46, %v3205
  %v3207 = vlaneseq
  %v3208 = vshrl.u32 %v3207, 7
  %v3209 = vsub.s32 5, %v3208
  %v3210 = vrot.slane %v47, %v3209
  %v3211 = vlaneseq
  %v3212 = vshrl.u32 %v3211, 7
  %v3213 = vsub.s32 5, %v3212
  %v3214 = vrot.slane %v48, %v3213
  %v3215 = vlaneseq
  %v3216 = vshrl.u32 %v3215, 7
  %v3217 = vsub.s32 5, %v3216
  %v3218 = vrot.slane %v49, %v3217
  %v3219 = vlaneseq
  %v3220 = vshrl.u32 %v3219, 7
  %v3221 = vsub.s32 5, %v3220
  %v3222 = vrot.slane %v50, %v3221
  %v3223 = vlaneseq
  %v3224 = vshrl.u32 %v3223, 7
  %v3225 = vsub.s32 5, %v3224
  %v3226 = vrot.slane %v51, %v3225
  %v3227 = vlaneseq
  %v3228 = vshrl.u32 %v3227, 7
  %v3229 = vsub.s32 5, %v3228
  %v3230 = vrot.slane %v52, %v3229
  %v3231 = vmul.f32 %v3198, %v2306
  %v3232 = vmul.f32 %v3202, %v2306
  %v3233 = vmul.f32 %v3206, %v2306
  %v3234 = vmul.f32 %v3210, %v2306
  %v3235 = vmul.f32 %v3214, %v2306
  %v3236 = vmul.f32 %v3218, %v2306
  %v3237 = vmul.f32 %v3222, %v2306
  %v3238 = vmul.f32 %v3226, %v2306
  %v3239 = vmul.f32 %v3230, %v2306
  %v3240 = vadd.f32 %v3186, %v3231
  %v3241 = vadd.f32 %v3187, %v3232
  %v3242 = vadd.f32 %v3188, %v3233
  %v3243 = vadd.f32 %v3189, %v3234
  %v3244 = vadd.f32 %v3190, %v3235
  %v3245 = vadd.f32 %v3191, %v3236
  %v3246 = vadd.f32 %v3192, %v3237
  %v3247 = vadd.f32 %v3193, %v3238
  %v3248 = vadd.f32 %v3194, %v3239
  %v3249 = vlaneseq
  %v3250 = vshrl.u32 %v3249, 7
  %v3251 = vsub.s32 6, %v3250
  %v3252 = vrot.slane %v44, %v3251
  %v3253 = vlaneseq
  %v3254 = vshrl.u32 %v3253, 7
  %v3255 = vsub.s32 6, %v3254
  %v3256 = vrot.slane %v45, %v3255
  %v3257 = vlaneseq
  %v3258 = vshrl.u32 %v3257, 7
  %v3259 = vsub.s32 6, %v3258
  %v3260 = vrot.slane %v46, %v3259
  %v3261 = vlaneseq
  %v3262 = vshrl.u32 %v3261, 7
  %v3263 = vsub.s32 6, %v3262
  %v3264 = vrot.slane %v47, %v3263
  %v3265 = vlaneseq
  %v3266 = vshrl.u32 %v3265, 7
  %v3267 = vsub.s32 6, %v3266
  %v3268 = vrot.slane %v48, %v3267
  %v3269 = vlaneseq
  %v3270 = vshrl.u32 %v3269, 7
  %v3271 = vsub.s32 6, %v3270
  %v3272 = vrot.slane %v49, %v3271
  %v3273 = vlaneseq
  %v3274 = vshrl.u32 %v3273, 7
  %v3275 = vsub.s32 6, %v3274
  %v3276 = vrot.slane %v50, %v3275
  %v3277 = vlaneseq
  %v3278 = vshrl.u32 %v3277, 7
  %v3279 = vsub.s32 6, %v3278
  %v3280 = vrot.slane %v51, %v3279
  %v3281 = vlaneseq
  %v3282 = vshrl.u32 %v3281, 7
  %v3283 = vsub.s32 6, %v3282
  %v3284 = vrot.slane %v52, %v3283
  %v3285 = vmul.f32 %v3252, %v2364
  %v3286 = vmul.f32 %v3256, %v2364
  %v3287 = vmul.f32 %v3260, %v2364
  %v3288 = vmul.f32 %v3264, %v2364
  %v3289 = vmul.f32 %v3268, %v2364
  %v3290 = vmul.f32 %v3272, %v2364
  %v3291 = vmul.f32 %v3276, %v2364
  %v3292 = vmul.f32 %v3280, %v2364
  %v3293 = vmul.f32 %v3284, %v2364
  %v3294 = vadd.f32 %v3240, %v3285
  %v3295 = vadd.f32 %v3241, %v3286
  %v3296 = vadd.f32 %v3242, %v3287
  %v3297 = vadd.f32 %v3243, %v3288
  %v3298 = vadd.f32 %v3244, %v3289
  %v3299 = vadd.f32 %v3245, %v3290
  %v3300 = vadd.f32 %v3246, %v3291
  %v3301 = vadd.f32 %v3247, %v3292
  %v3302 = vadd.f32 %v3248, %v3293
  %v3303 = vlaneseq
  %v3304 = vshrl.u32 %v3303, 7
  %v3305 = vsub.s32 7, %v3304
  %v3306 = vrot.slane %v44, %v3305
  %v3307 = vlaneseq
  %v3308 = vshrl.u32 %v3307, 7
  %v3309 = vsub.s32 7, %v3308
  %v3310 = vrot.slane %v45, %v3309
  %v3311 = vlaneseq
  %v3312 = vshrl.u32 %v3311, 7
  %v3313 = vsub.s32 7, %v3312
  %v3314 = vrot.slane %v46, %v3313
  %v3315 = vlaneseq
  %v3316 = vshrl.u32 %v3315, 7
  %v3317 = vsub.s32 7, %v3316
  %v3318 = vrot.slane %v47, %v3317
  %v3319 = vlaneseq
  %v3320 = vshrl.u32 %v3319, 7
  %v3321 = vsub.s32 7, %v3320
  %v3322 = vrot.slane %v48, %v3321
  %v3323 = vlaneseq
  %v3324 = vshrl.u32 %v3323, 7
  %v3325 = vsub.s32 7, %v3324
  %v3326 = vrot.slane %v49, %v3325
  %v3327 = vlaneseq
  %v3328 = vshrl.u32 %v3327, 7
  %v3329 = vsub.s32 7, %v3328
  %v3330 = vrot.slane %v50, %v3329
  %v3331 = vlaneseq
  %v3332 = vshrl.u32 %v3331, 7
  %v3333 = vsub.s32 7, %v3332
  %v3334 = vrot.slane %v51, %v3333
  %v3335 = vlaneseq
  %v3336 = vshrl.u32 %v3335, 7
  %v3337 = vsub.s32 7, %v3336
  %v3338 = vrot.slane %v52, %v3337
  %v3339 = vmul.f32 %v3306, %v2422
  %v3340 = vmul.f32 %v3310, %v2422
  %v3341 = vmul.f32 %v3314, %v2422
  %v3342 = vmul.f32 %v3318, %v2422
  %v3343 = vmul.f32 %v3322, %v2422
  %v3344 = vmul.f32 %v3326, %v2422
  %v3345 = vmul.f32 %v3330, %v2422
  %v3346 = vmul.f32 %v3334, %v2422
  %v3347 = vmul.f32 %v3338, %v2422
  %v3348 = vadd.f32 %v3294, %v3339
  %v3349 = vadd.f32 %v3295, %v3340
  %v3350 = vadd.f32 %v3296, %v3341
  %v3351 = vadd.f32 %v3297, %v3342
  %v3352 = vadd.f32 %v3298, %v3343
  %v3353 = vadd.f32 %v3299, %v3344
  %v3354 = vadd.f32 %v3300, %v3345
  %v3355 = vadd.f32 %v3301, %v3346
  %v3356 = vadd.f32 %v3302, %v3347
  %v3357 = vadd.f32 %v3348, %v2445
  %v3358 = vadd.f32 %v3349, %v2445
  %v3359 = vadd.f32 %v3350, %v2445
  %v3360 = vadd.f32 %v3351, %v2445
  %v3361 = vadd.f32 %v3352, %v2445
  %v3362 = vadd.f32 %v3353, %v2445
  %v3363 = vadd.f32 %v3354, %v2445
  %v3364 = vadd.f32 %v3355, %v2445
  %v3365 = vadd.f32 %v3356, %v2445
  %v3366 = vmax.f32 %v3357, 0.0
  %v3367 = vmax.f32 %v3358, 0.0
  %v3368 = vmax.f32 %v3359, 0.0
  %v3369 = vmax.f32 %v3360, 0.0
  %v3370 = vmax.f32 %v3361, 0.0
  %v3371 = vmax.f32 %v3362, 0.0
  %v3372 = vmax.f32 %v3363, 0.0
  %v3373 = vmax.f32 %v3364, 0.0
  %v3374 = vmax.f32 %v3365, 0.0
  %v3384 = vcombine.low %v3366, %v3367
  %v3385 = vcombine.low %v3368, %v3369
  %v3386 = vcombine.low %v3370, %v3371
  %v3387 = vcombine.low %v3372, %v3373
  %v3388 = vrot.slane %v3384, 6
  %v3389 = vrot.slane %v3385, 6
  %v3390 = vrot.slane %v3386, 6
  %v3391 = vrot.slane %v3387, 6
  %v3392 = vrot.slane %v3374, 6
  %3393 = vrot.lane.b32.xlu0 %v3388, 95
  %v3394 = vpop.permute.xlu0 %3393
  %3395 = vrot.lane.b32.xlu0 %v3389, 95
  %v3396 = vpop.permute.xlu0 %3395
  %3397 = vrot.lane.b32.xlu0 %v3390, 95
  %v3398 = vpop.permute.xlu0 %3397
  %3399 = vrot.lane.b32.xlu0 %v3391, 95
  %v3400 = vpop.permute.xlu0 %3399
  %3401 = vrot.lane.b32.xlu0 %v3392, 95
  %v3402 = vpop.permute.xlu0 %3401
  %v3403 = vrot.slane %v3394, 4
  %v3404 = vrot.slane %v3396, 4
  %v3405 = vrot.slane %v3398, 4
  %v3406 = vrot.slane %v3400, 4
  %v3407 = vrot.slane %v3402, 4
  %v3408 = vsel %vm2493, %v3403, %v3404
  %v3409 = vsel %vm741, %v3394, %v3408
  %v3410 = vsel %vm2493, %v3404, %v3405
  %v3411 = vsel %vm741, %v3396, %v3410
  %v3412 = vsel %vm2493, %v3405, %v3406
  %v3413 = vsel %vm741, %v3398, %v3412
  %v3414 = vsel %vm2493, %v3406, %v3407
  %v3415 = vsel %vm741, %v3400, %v3414
  %3420 = vst [vmem:[%s11] sm:$0xcc] %v3409
  %3421 = vst [vmem:[%s11 + $0x8] sm:$0xcc] %v3411
  %3422 = vst [vmem:[%s11 + $0x10] sm:$0xcc] %v3413
  %3423 = vst [vmem:[%s11 + $0x18] sm:$0xcc] %v3415
  // Predicated region
  $region38: #{ffc_resnet_block1.6} parent=0 // pred_check
    _
  $region39: #{ffc_resnet_block1.6} parent=0 // pred_check_branch
    %3425 = sbr.rel (0) target = $region41
  $region40: #{ffc_resnet_block1.6} parent=0 // pred_region
    _
  $region41: #{ffc_resnet_block1.6} parent=0 // pred_fallthru
    _
  // Predicated region
  $region42: #{ffc_resnet_block1.6} parent=0 // pred_check
    _
  $region43: #{ffc_resnet_block1.6} parent=0 // pred_check_branch
    %3427 = sbr.rel (0) target = $region45
  $region44: #{ffc_resnet_block1.6} parent=0 // pred_region
    _
  $region45: #{ffc_resnet_block1.6} parent=0 // pred_fallthru
    _
  // Predicated region
  $region46: #{ffc_resnet_block1.6} parent=0 // pred_check
    _
  $region47: #{ffc_resnet_block1.6} parent=0 // pred_check_branch
    %3429 = sbr.rel (0) target = $region49
  $region48: #{ffc_resnet_block1.6} parent=0 // pred_region
    _
  $region49: #{ffc_resnet_block1.6} parent=0 // pred_fallthru
    _
  // Predicated region
  $region50: #{ffc_resnet_block1.6} parent=0 // pred_check
    _
  $region51: #{ffc_resnet_block1.6} parent=0 // pred_check_branch
    %3431 = sbr.rel (0) target = $region53
  $region52: #{ffc_resnet_block1.6} parent=0 // pred_region
    _
  $region53: #{ffc_resnet_block1.6} parent=0 // pred_fallthru
    _
  // Predicated region
  $region54: #{ffc_resnet_block1.6} parent=0 // pred_check
    _
  $region55: #{ffc_resnet_block1.6} parent=0 // pred_check_branch
    %3433 = sbr.rel (0) target = $region57
  $region56: #{ffc_resnet_block1.6} parent=0 // pred_region
    _
  $region57: #{ffc_resnet_block1.6} parent=0 // pred_fallthru
    _
  // Predicated region
  $region58: #{ffc_resnet_block1.6} parent=0 // pred_check
    _
  $region59: #{ffc_resnet_block1.6} parent=0 // pred_check_branch
    %3435 = sbr.rel (0) target = $region61
  $region60: #{ffc_resnet_block1.6} parent=0 // pred_region
    _
  $region61: #{ffc_resnet_block1.6} parent=0 // pred_fallthru
    _

// kernel: ffc_resnet_block1.7
$region0: #{ffc_resnet_block1.7}
  #allocation0 [shape = 'u32[]', space=smem, size = 0x4, offset = 0x4, fixed_abs, tag = 'smem constant byte address 0x4 - core index']
  #allocation1 [shape = 'u32[144,128]{1,0:T(1,128)}', space=vmem, size = 0x12000, scoped, tag = 'internal scratch']
  %s0 = inlined_call_operand.vmem [shape: f32[8,612], index: 0, kind: input, shape index: {}]
  %s1 = inlined_call_operand.vmem [shape: f32[4,4], index: 1, kind: input, shape index: {}]
  %s2 = inlined_call_operand.vmem [shape: f32[4,1], index: 2, kind: input, shape index: {}]
  %s3 = inlined_call_operand.vmem [shape: f32[8,612], index: 3, kind: output, shape index: {}]
  %s4 = sld [smem:[#allocation0]]
  $region22: #{ffc_resnet_block1.7} parent=0
    _
  %s6 = ssub.s32 1, %s4
  %s7 = scalar_select 0, %s6, %s4
  // Predicated region
  $region2: #{ffc_resnet_block1.7} parent=0 // pred_check
    _
  $region3: #{ffc_resnet_block1.7} parent=0 // pred_check_branch
    %9 = sbr.rel (0) target = $region5
  $region4: #{ffc_resnet_block1.7} parent=0 // pred_region
    _
  $region5: #{ffc_resnet_block1.7} parent=0 // pred_fallthru
    _
  // Predicated region
  $region6: #{ffc_resnet_block1.7} parent=0 // pred_check
    _
  $region7: #{ffc_resnet_block1.7} parent=0 // pred_check_branch
    %11 = sbr.rel (0) target = $region9
  $region8: #{ffc_resnet_block1.7} parent=0 // pred_region
    _
  $region9: #{ffc_resnet_block1.7} parent=0 // pred_fallthru
    _
  // Predicated region
  $region10: #{ffc_resnet_block1.7} parent=0 // pred_check
    _
  $region11: #{ffc_resnet_block1.7} parent=0 // pred_check_branch
    %13 = sbr.rel (0) target = $region13
  $region12: #{ffc_resnet_block1.7} parent=0 // pred_region
    _
  $region13: #{ffc_resnet_block1.7} parent=0 // pred_fallthru
    _
  %v14 = vld [vmem:[%s0] sm:$0xff]
  %v15 = vld [vmem:[%s0 + $0x8] sm:$0xff]
  %v16 = vld [vmem:[%s0 + $0x10] sm:$0xff]
  %v17 = vld [vmem:[%s0 + $0x18] sm:$0xff]
  %v18 = vld [vmem:[%s0 + $0x20] sm:$0xff]
  %v19 = vld [vmem:[%s1] sm:$0xf]
  %v20 = vld [vmem:[%s2] sm:$0xf]
  %v21 = vlaneseq
  %v22 = vshrl.u32 %v21, 7
  %v23 = vsub.s32 0, %v22
  %v24 = vrot.slane %v14, %v23
  %v25 = vlaneseq
  %v26 = vshrl.u32 %v25, 7
  %v27 = vsub.s32 0, %v26
  %v28 = vrot.slane %v15, %v27
  %v29 = vlaneseq
  %v30 = vshrl.u32 %v29, 7
  %v31 = vsub.s32 0, %v30
  %v32 = vrot.slane %v16, %v31
  %v33 = vlaneseq
  %v34 = vshrl.u32 %v33, 7
  %v35 = vsub.s32 0, %v34
  %v36 = vrot.slane %v17, %v35
  %v37 = vlaneseq
  %v38 = vshrl.u32 %v37, 7
  %v39 = vsub.s32 0, %v38
  %v40 = vrot.slane %v18, %v39
  %42 = vset.pattern.permute.xlu0 0
  %43 = vperm.xlu0 %42, %v19
  %v44 = vpop.permute.xlu0 %43
  %v46 = vmul.f32 %v24, %v44
  %v47 = vmul.f32 %v28, %v44
  %v48 = vmul.f32 %v32, %v44
  %v49 = vmul.f32 %v36, %v44
  %v50 = vmul.f32 %v40, %v44
  %v51 = vlaneseq
  %v52 = vshrl.u32 %v51, 7
  %v53 = vsub.s32 1, %v52
  %v54 = vrot.slane %v14, %v53
  %v55 = vlaneseq
  %v56 = vshrl.u32 %v55, 7
  %v57 = vsub.s32 1, %v56
  %v58 = vrot.slane %v15, %v57
  %v59 = vlaneseq
  %v60 = vshrl.u32 %v59, 7
  %v61 = vsub.s32 1, %v60
  %v62 = vrot.slane %v16, %v61
  %v63 = vlaneseq
  %v64 = vshrl.u32 %v63, 7
  %v65 = vsub.s32 1, %v64
  %v66 = vrot.slane %v17, %v65
  %v67 = vlaneseq
  %v68 = vshrl.u32 %v67, 7
  %v69 = vsub.s32 1, %v68
  %v70 = vrot.slane %v18, %v69
  %71 = vset.pattern.permute.xlu0 1
  %72 = vperm.xlu0 %71, %v19
  %v73 = vpop.permute.xlu0 %72
  %v75 = vmul.f32 %v54, %v73
  %v76 = vmul.f32 %v58, %v73
  %v77 = vmul.f32 %v62, %v73
  %v78 = vmul.f32 %v66, %v73
  %v79 = vmul.f32 %v70, %v73
  %v80 = vadd.f32 %v46, %v75
  %v81 = vadd.f32 %v47, %v76
  %v82 = vadd.f32 %v48, %v77
  %v83 = vadd.f32 %v49, %v78
  %v84 = vadd.f32 %v50, %v79
  %v85 = vlaneseq
  %v86 = vshrl.u32 %v85, 7
  %v87 = vsub.s32 2, %v86
  %v88 = vrot.slane %v14, %v87
  %v89 = vlaneseq
  %v90 = vshrl.u32 %v89, 7
  %v91 = vsub.s32 2, %v90
  %v92 = vrot.slane %v15, %v91
  %v93 = vlaneseq
  %v94 = vshrl.u32 %v93, 7
  %v95 = vsub.s32 2, %v94
  %v96 = vrot.slane %v16, %v95
  %v97 = vlaneseq
  %v98 = vshrl.u32 %v97, 7
  %v99 = vsub.s32 2, %v98
  %v100 = vrot.slane %v17, %v99
  %v101 = vlaneseq
  %v102 = vshrl.u32 %v101, 7
  %v103 = vsub.s32 2, %v102
  %v104 = vrot.slane %v18, %v103
  %105 = vset.pattern.permute.xlu0 2
  %106 = vperm.xlu0 %105, %v19
  %v107 = vpop.permute.xlu0 %106
  %v109 = vmul.f32 %v88, %v107
  %v110 = vmul.f32 %v92, %v107
  %v111 = vmul.f32 %v96, %v107
  %v112 = vmul.f32 %v100, %v107
  %v113 = vmul.f32 %v104, %v107
  %v114 = vadd.f32 %v80, %v109
  %v115 = vadd.f32 %v81, %v110
  %v116 = vadd.f32 %v82, %v111
  %v117 = vadd.f32 %v83, %v112
  %v118 = vadd.f32 %v84, %v113
  %v119 = vlaneseq
  %v120 = vshrl.u32 %v119, 7
  %v121 = vsub.s32 3, %v120
  %v122 = vrot.slane %v14, %v121
  %v123 = vlaneseq
  %v124 = vshrl.u32 %v123, 7
  %v125 = vsub.s32 3, %v124
  %v126 = vrot.slane %v15, %v125
  %v127 = vlaneseq
  %v128 = vshrl.u32 %v127, 7
  %v129 = vsub.s32 3, %v128
  %v130 = vrot.slane %v16, %v129
  %v131 = vlaneseq
  %v132 = vshrl.u32 %v131, 7
  %v133 = vsub.s32 3, %v132
  %v134 = vrot.slane %v17, %v133
  %v135 = vlaneseq
  %v136 = vshrl.u32 %v135, 7
  %v137 = vsub.s32 3, %v136
  %v138 = vrot.slane %v18, %v137
  %139 = vset.pattern.permute.xlu0 3
  %140 = vperm.xlu0 %139, %v19
  %v141 = vpop.permute.xlu0 %140
  %v143 = vmul.f32 %v122, %v141
  %v144 = vmul.f32 %v126, %v141
  %v145 = vmul.f32 %v130, %v141
  %v146 = vmul.f32 %v134, %v141
  %v147 = vmul.f32 %v138, %v141
  %v148 = vadd.f32 %v114, %v143
  %v149 = vadd.f32 %v115, %v144
  %v150 = vadd.f32 %v116, %v145
  %v151 = vadd.f32 %v117, %v146
  %v152 = vadd.f32 %v118, %v147
  %154 = vset.pattern.permute.xlu0 0
  %155 = vperm.xlu0 %154, %v20
  %v156 = vpop.permute.xlu0 %155
  %v158 = vadd.f32 %v148, %v156
  %v159 = vadd.f32 %v149, %v156
  %v160 = vadd.f32 %v150, %v156
  %v161 = vadd.f32 %v151, %v156
  %v162 = vadd.f32 %v152, %v156
  %v163 = vmax.f32 %v158, 0.0
  %v164 = vmax.f32 %v159, 0.0
  %v165 = vmax.f32 %v160, 0.0
  %v166 = vmax.f32 %v161, 0.0
  %v167 = vmax.f32 %v162, 0.0
  %168 = vst [vmem:[%s3] sm:$0xf] %v163
  %169 = vst [vmem:[%s3 + $0x8] sm:$0xf] %v164
  %170 = vst [vmem:[%s3 + $0x10] sm:$0xf] %v165
  %171 = vst [vmem:[%s3 + $0x18] sm:$0xf] %v166
  %vm172 = vcmask 814080
  %173 = vst.msk [vmem:[%s3 + $0x20] sm:$0xf] %vm172, %v167
  %v174 = vlaneseq
  %v175 = vshrl.u32 %v174, 7
  %v176 = vsub.s32 4, %v175
  %v177 = vrot.slane %v14, %v176
  %v178 = vlaneseq
  %v179 = vshrl.u32 %v178, 7
  %v180 = vsub.s32 4, %v179
  %v181 = vrot.slane %v15, %v180
  %v182 = vlaneseq
  %v183 = vshrl.u32 %v182, 7
  %v184 = vsub.s32 4, %v183
  %v185 = vrot.slane %v16, %v184
  %v186 = vlaneseq
  %v187 = vshrl.u32 %v186, 7
  %v188 = vsub.s32 4, %v187
  %v189 = vrot.slane %v17, %v188
  %v190 = vlaneseq
  %v191 = vshrl.u32 %v190, 7
  %v192 = vsub.s32 4, %v191
  %v193 = vrot.slane %v18, %v192
  %v194 = vmul.f32 %v177, %v44
  %v195 = vmul.f32 %v181, %v44
  %v196 = vmul.f32 %v185, %v44
  %v197 = vmul.f32 %v189, %v44
  %v198 = vmul.f32 %v193, %v44
  %v199 = vlaneseq
  %v200 = vshrl.u32 %v199, 7
  %v201 = vsub.s32 5, %v200
  %v202 = vrot.slane %v14, %v201
  %v203 = vlaneseq
  %v204 = vshrl.u32 %v203, 7
  %v205 = vsub.s32 5, %v204
  %v206 = vrot.slane %v15, %v205
  %v207 = vlaneseq
  %v208 = vshrl.u32 %v207, 7
  %v209 = vsub.s32 5, %v208
  %v210 = vrot.slane %v16, %v209
  %v211 = vlaneseq
  %v212 = vshrl.u32 %v211, 7
  %v213 = vsub.s32 5, %v212
  %v214 = vrot.slane %v17, %v213
  %v215 = vlaneseq
  %v216 = vshrl.u32 %v215, 7
  %v217 = vsub.s32 5, %v216
  %v218 = vrot.slane %v18, %v217
  %v219 = vmul.f32 %v202, %v73
  %v220 = vmul.f32 %v206, %v73
  %v221 = vmul.f32 %v210, %v73
  %v222 = vmul.f32 %v214, %v73
  %v223 = vmul.f32 %v218, %v73
  %v224 = vadd.f32 %v194, %v219
  %v225 = vadd.f32 %v195, %v220
  %v226 = vadd.f32 %v196, %v221
  %v227 = vadd.f32 %v197, %v222
  %v228 = vadd.f32 %v198, %v223
  %v229 = vlaneseq
  %v230 = vshrl.u32 %v229, 7
  %v231 = vsub.s32 6, %v230
  %v232 = vrot.slane %v14, %v231
  %v233 = vlaneseq
  %v234 = vshrl.u32 %v233, 7
  %v235 = vsub.s32 6, %v234
  %v236 = vrot.slane %v15, %v235
  %v237 = vlaneseq
  %v238 = vshrl.u32 %v237, 7
  %v239 = vsub.s32 6, %v238
  %v240 = vrot.slane %v16, %v239
  %v241 = vlaneseq
  %v242 = vshrl.u32 %v241, 7
  %v243 = vsub.s32 6, %v242
  %v244 = vrot.slane %v17, %v243
  %v245 = vlaneseq
  %v246 = vshrl.u32 %v245, 7
  %v247 = vsub.s32 6, %v246
  %v248 = vrot.slane %v18, %v247
  %v249 = vmul.f32 %v232, %v107
  %v250 = vmul.f32 %v236, %v107
  %v251 = vmul.f32 %v240, %v107
  %v252 = vmul.f32 %v244, %v107
  %v253 = vmul.f32 %v248, %v107
  %v254 = vadd.f32 %v224, %v249
  %v255 = vadd.f32 %v225, %v250
  %v256 = vadd.f32 %v226, %v251
  %v257 = vadd.f32 %v227, %v252
  %v258 = vadd.f32 %v228, %v253
  %v259 = vlaneseq
  %v260 = vshrl.u32 %v259, 7
  %v261 = vsub.s32 7, %v260
  %v262 = vrot.slane %v14, %v261
  %v263 = vlaneseq
  %v264 = vshrl.u32 %v263, 7
  %v265 = vsub.s32 7, %v264
  %v266 = vrot.slane %v15, %v265
  %v267 = vlaneseq
  %v268 = vshrl.u32 %v267, 7
  %v269 = vsub.s32 7, %v268
  %v270 = vrot.slane %v16, %v269
  %v271 = vlaneseq
  %v272 = vshrl.u32 %v271, 7
  %v273 = vsub.s32 7, %v272
  %v274 = vrot.slane %v17, %v273
  %v275 = vlaneseq
  %v276 = vshrl.u32 %v275, 7
  %v277 = vsub.s32 7, %v276
  %v278 = vrot.slane %v18, %v277
  %v279 = vmul.f32 %v262, %v141
  %v280 = vmul.f32 %v266, %v141
  %v281 = vmul.f32 %v270, %v141
  %v282 = vmul.f32 %v274, %v141
  %v283 = vmul.f32 %v278, %v141
  %v284 = vadd.f32 %v254, %v279
  %v285 = vadd.f32 %v255, %v280
  %v286 = vadd.f32 %v256, %v281
  %v287 = vadd.f32 %v257, %v282
  %v288 = vadd.f32 %v258, %v283
  %v289 = vadd.f32 %v284, %v156
  %v290 = vadd.f32 %v285, %v156
  %v291 = vadd.f32 %v286, %v156
  %v292 = vadd.f32 %v287, %v156
  %v293 = vadd.f32 %v288, %v156
  %v294 = vmax.f32 %v289, 0.0
  %v295 = vmax.f32 %v290, 0.0
  %v296 = vmax.f32 %v291, 0.0
  %v297 = vmax.f32 %v292, 0.0
  %v298 = vmax.f32 %v293, 0.0
  %v304 = vrot.slane %v294, 4
  %v305 = vrot.slane %v295, 4
  %v306 = vrot.slane %v296, 4
  %v307 = vrot.slane %v297, 4
  %v308 = vrot.slane %v298, 4
  %314 = vst [vmem:[%s3] sm:$0xf0] %v304
  %315 = vst [vmem:[%s3 + $0x8] sm:$0xf0] %v305
  %316 = vst [vmem:[%s3 + $0x10] sm:$0xf0] %v306
  %317 = vst [vmem:[%s3 + $0x18] sm:$0xf0] %v307
  %vm318 = vcmask 818180
  %319 = vst.msk [vmem:[%s3 + $0x20] sm:$0xf0] %vm318, %v308
  // Predicated region
  $region14: #{ffc_resnet_block1.7} parent=0 // pred_check
    _
  $region15: #{ffc_resnet_block1.7} parent=0 // pred_check_branch
    %321 = sbr.rel (0) target = $region17
  $region16: #{ffc_resnet_block1.7} parent=0 // pred_region
    _
  $region17: #{ffc_resnet_block1.7} parent=0 // pred_fallthru
    _
  // Predicated region
  $region18: #{ffc_resnet_block1.7} parent=0 // pred_check
    _
  $region19: #{ffc_resnet_block1.7} parent=0 // pred_check_branch
    %323 = sbr.rel (0) target = $region21
  $region20: #{ffc_resnet_block1.7} parent=0 // pred_region
    _
  $region21: #{ffc_resnet_block1.7} parent=0 // pred_fallthru
    _

// kernel: reverse.5
$region0: #{reverse.5}
  %s0 = inlined_call_operand.vmem [shape: f32[2,2,34,16], index: 0, kind: input, shape index: {}]
  %s1 = inlined_call_operand.vmem [shape: f32[2,2,34,16], index: 1, kind: output, shape index: {}]
  $region1: #{reverse.5} parent=0
    #allocation0 [shape = 'u8[32768]{0}', space=vmem, size = 0x8000, scoped, tag = 'operand span for operand 0']
    #allocation1 [shape = 'u8[32768]{0}', space=vmem, size = 0x8000, scoped, tag = 'operand span for operand 1']
    // Predicated region
    $region2: #{reverse.5} parent=1 // pred_check
      _
    $region3: #{reverse.5} parent=1 // pred_check_branch
      %3 = sbr.rel (0) target = $region5
    $region4: #{reverse.5} parent=1 // pred_region
      // Predicated region
      $region6: #{reverse.5} parent=4 // pred_check
        _
      $region7: #{reverse.5} parent=4 // pred_check_branch
        %5 = sbr.rel (0) target = $region9
      $region8: #{reverse.5} parent=4 // pred_region
        // Predicated region
        $region21: #{reverse.5} parent=8 // pred_check
          _
        $region22: #{reverse.5} parent=8 // pred_check_branch
          %34 = sbr.rel (0) target = $region24
        $region23: #{reverse.5} parent=8 // pred_region
          loop: start=0, step=1, limit=1
          $region25: #{reverse.5} parent=23 // loop_pre_header
            _
          $region26: #{reverse.5} parent=23 // loop_header
            %s36 = sphi 0, %s40
            %p37 = scmp.ge.s32.totalorder %s36, 1
            %s41 = sphi %s0, %s0
            %s42 = sphi [#allocation0], [#allocation0]
          $region27: #{reverse.5} parent=23 // loop_header_branch
            %39 = sbr.rel (%p37) target = $region31
          $region28: #{reverse.5} parent=23 // loop_body
            %v43 = vld [vmem:[%s41] sm:$0xff]
            %44 = vst [vmem:[%s42] sm:$0xff] %v43
            %v45 = vld [vmem:[%s41 + $0x8] sm:$0xff]
            %46 = vst [vmem:[%s42 + $0x8] sm:$0xff] %v45
            %v47 = vld [vmem:[%s41 + $0x10] sm:$0xff]
            %48 = vst [vmem:[%s42 + $0x10] sm:$0xff] %v47
            %v49 = vld [vmem:[%s41 + $0x18] sm:$0xff]
            %50 = vst [vmem:[%s42 + $0x18] sm:$0xff] %v49
            %v51 = vld [vmem:[%s41 + $0x20] sm:$0xff]
            %52 = vst [vmem:[%s42 + $0x20] sm:$0xff] %v51
            %v53 = vld [vmem:[%s41 + $0x28] sm:$0xff]
            %54 = vst [vmem:[%s42 + $0x28] sm:$0xff] %v53
            %v55 = vld [vmem:[%s41 + $0x30] sm:$0xff]
            %56 = vst [vmem:[%s42 + $0x30] sm:$0xff] %v55
            %v57 = vld [vmem:[%s41 + $0x38] sm:$0xff]
            %58 = vst [vmem:[%s42 + $0x38] sm:$0xff] %v57
          $region29: #{reverse.5} parent=23 // loop_footer
            %s40 = sadd.s32 1, %s36
          $region30: #{reverse.5} parent=23 // loop_footer_branch
            %35 = sbr.rel target = $region26
          $region31: #{reverse.5} parent=23 // loop_exit
            _
        $region24: #{reverse.5} parent=8 // pred_fallthru
          _
        // Predicated region
        $region32: #{reverse.5} parent=8 // pred_check
          _
        $region33: #{reverse.5} parent=8 // pred_check_branch
          %60 = sbr.rel target = $region35
        $region34: #{reverse.5} parent=8 // pred_region
          _
        $region35: #{reverse.5} parent=8 // pred_fallthru
          _
      $region9: #{reverse.5} parent=4 // pred_fallthru
        _
      // Predicated region
      $region10: #{reverse.5} parent=4 // pred_check
        _
      $region11: #{reverse.5} parent=4 // pred_check_branch
        %7 = sbr.rel target = $region13
      $region12: #{reverse.5} parent=4 // pred_region
        loop: start=0, step=1, limit=1
        $region14: #{reverse.5} parent=12 // loop_pre_header
          _
        $region15: #{reverse.5} parent=12 // loop_header
          %s10 = sphi 0, %s14
          %p11 = scmp.ge.s32.totalorder %s10, 1
          %s15 = sphi %s0, %s0
          %s16 = sphi [#allocation0], [#allocation0]
        $region16: #{reverse.5} parent=12 // loop_header_branch
          %13 = sbr.rel (%p11) target = $region20
        $region17: #{reverse.5} parent=12 // loop_body
          %v17 = vld [vmem:[%s15] sm:$0xff]
          %18 = vst [vmem:[%s16] sm:$0xff] %v17
          %v19 = vld [vmem:[%s15 + $0x8] sm:$0xff]
          %20 = vst [vmem:[%s16 + $0x8] sm:$0xff] %v19
          %v21 = vld [vmem:[%s15 + $0x10] sm:$0xff]
          %22 = vst [vmem:[%s16 + $0x10] sm:$0xff] %v21
          %v23 = vld [vmem:[%s15 + $0x18] sm:$0xff]
          %24 = vst [vmem:[%s16 + $0x18] sm:$0xff] %v23
          %v25 = vld [vmem:[%s15 + $0x20] sm:$0xff]
          %26 = vst [vmem:[%s16 + $0x20] sm:$0xff] %v25
          %v27 = vld [vmem:[%s15 + $0x28] sm:$0xff]
          %28 = vst [vmem:[%s16 + $0x28] sm:$0xff] %v27
          %v29 = vld [vmem:[%s15 + $0x30] sm:$0xff]
          %30 = vst [vmem:[%s16 + $0x30] sm:$0xff] %v29
          %v31 = vld [vmem:[%s15 + $0x38] sm:$0xff]
          %32 = vst [vmem:[%s16 + $0x38] sm:$0xff] %v31
        $region18: #{reverse.5} parent=12 // loop_footer
          %s14 = sadd.s32 1, %s10
        $region19: #{reverse.5} parent=12 // loop_footer_branch
          %9 = sbr.rel target = $region15
        $region20: #{reverse.5} parent=12 // loop_exit
          _
      $region13: #{reverse.5} parent=4 // pred_fallthru
        _
    $region5: #{reverse.5} parent=1 // pred_fallthru
      _
    %61 = vnop
    %s62 = scalar_lea.vmem [#allocation0], 8
    %s63 = scalar_lea.vmem %s62, 7 [#allocation0]
    %v64 = vld [vmem:[%s63] ss:$-1 sm:$0xff]
    %65 = vst [vmem:[#allocation1] sm:$0xff] %v64
    %s66 = scalar_lea.vmem [#allocation1], 8
    %s67 = scalar_lea.vmem [#allocation0], 7
    %v68 = vld [vmem:[%s67] ss:$-1 sm:$0xff]
    %69 = vst [vmem:[%s66] sm:$0xff] %v68
    %s70 = scalar_lea.vmem [#allocation1], 16
    %s71 = scalar_lea.vmem [#allocation0], 16
    %s72 = scalar_lea.vmem %s71, 8 [#allocation0]
    %s73 = scalar_lea.vmem %s72, 7 [#allocation0]
    %v74 = vld [vmem:[%s73] ss:$-1 sm:$0xff]
    %75 = vst [vmem:[%s70] sm:$0xff] %v74
    %s76 = scalar_lea.vmem %s70, 8 [#allocation1]
    %s77 = scalar_lea.vmem %s71, 7 [#allocation0]
    %v78 = vld [vmem:[%s77] ss:$-1 sm:$0xff]
    %79 = vst [vmem:[%s76] sm:$0xff] %v78
    %s80 = scalar_lea.vmem [#allocation1], 32
    %s81 = scalar_lea.vmem [#allocation0], 32
    %s82 = scalar_lea.vmem %s81, 8 [#allocation0]
    %s83 = scalar_lea.vmem %s82, 7 [#allocation0]
    %v84 = vld [vmem:[%s83] ss:$-1 sm:$0xff]
    %85 = vst [vmem:[%s80] sm:$0xff] %v84
    %s86 = scalar_lea.vmem %s80, 8 [#allocation1]
    %s87 = scalar_lea.vmem %s81, 7 [#allocation0]
    %v88 = vld [vmem:[%s87] ss:$-1 sm:$0xff]
    %89 = vst [vmem:[%s86] sm:$0xff] %v88
    %s90 = scalar_lea.vmem [#allocation1], 48
    %s91 = scalar_lea.vmem [#allocation0], 48
    %s92 = scalar_lea.vmem %s91, 8 [#allocation0]
    %s93 = scalar_lea.vmem %s92, 7 [#allocation0]
    %v94 = vld [vmem:[%s93] ss:$-1 sm:$0xff]
    %95 = vst [vmem:[%s90] sm:$0xff] %v94
    %s96 = scalar_lea.vmem %s90, 8 [#allocation1]
    %s97 = scalar_lea.vmem %s91, 7 [#allocation0]
    %v98 = vld [vmem:[%s97] ss:$-1 sm:$0xff]
    %99 = vst [vmem:[%s96] sm:$0xff] %v98
    // Predicated region
    $region36: #{reverse.5} parent=1 // pred_check
      _
    $region37: #{reverse.5} parent=1 // pred_check_branch
      %101 = sbr.rel (0) target = $region39
    $region38: #{reverse.5} parent=1 // pred_region
      // Predicated region
      $region40: #{reverse.5} parent=38 // pred_check
        _
      $region41: #{reverse.5} parent=38 // pred_check_branch
        %103 = sbr.rel (0) target = $region43
      $region42: #{reverse.5} parent=38 // pred_region
        // Predicated region
        $region55: #{reverse.5} parent=42 // pred_check
          _
        $region56: #{reverse.5} parent=42 // pred_check_branch
          %132 = sbr.rel (0) target = $region58
        $region57: #{reverse.5} parent=42 // pred_region
          loop: start=0, step=1, limit=1
          $region59: #{reverse.5} parent=57 // loop_pre_header
            _
          $region60: #{reverse.5} parent=57 // loop_header
            %s134 = sphi 0, %s138
            %p135 = scmp.ge.s32.totalorder %s134, 1
            %s139 = sphi [#allocation1], [#allocation1]
            %s140 = sphi %s1, %s1
          $region61: #{reverse.5} parent=57 // loop_header_branch
            %137 = sbr.rel (%p135) target = $region65
          $region62: #{reverse.5} parent=57 // loop_body
            %v141 = vld [vmem:[%s139] sm:$0xff]
            %142 = vst [vmem:[%s140] sm:$0xff] %v141
            %v143 = vld [vmem:[%s139 + $0x8] sm:$0xff]
            %144 = vst [vmem:[%s140 + $0x8] sm:$0xff] %v143
            %v145 = vld [vmem:[%s139 + $0x10] sm:$0xff]
            %146 = vst [vmem:[%s140 + $0x10] sm:$0xff] %v145
            %v147 = vld [vmem:[%s139 + $0x18] sm:$0xff]
            %148 = vst [vmem:[%s140 + $0x18] sm:$0xff] %v147
            %v149 = vld [vmem:[%s139 + $0x20] sm:$0xff]
            %150 = vst [vmem:[%s140 + $0x20] sm:$0xff] %v149
            %v151 = vld [vmem:[%s139 + $0x28] sm:$0xff]
            %152 = vst [vmem:[%s140 + $0x28] sm:$0xff] %v151
            %v153 = vld [vmem:[%s139 + $0x30] sm:$0xff]
            %154 = vst [vmem:[%s140 + $0x30] sm:$0xff] %v153
            %v155 = vld [vmem:[%s139 + $0x38] sm:$0xff]
            %156 = vst [vmem:[%s140 + $0x38] sm:$0xff] %v155
          $region63: #{reverse.5} parent=57 // loop_footer
            %s138 = sadd.s32 1, %s134
          $region64: #{reverse.5} parent=57 // loop_footer_branch
            %133 = sbr.rel target = $region60
          $region65: #{reverse.5} parent=57 // loop_exit
            _
        $region58: #{reverse.5} parent=42 // pred_fallthru
          _
        // Predicated region
        $region66: #{reverse.5} parent=42 // pred_check
          _
        $region67: #{reverse.5} parent=42 // pred_check_branch
          %158 = sbr.rel target = $region69
        $region68: #{reverse.5} parent=42 // pred_region
          _
        $region69: #{reverse.5} parent=42 // pred_fallthru
          _
      $region43: #{reverse.5} parent=38 // pred_fallthru
        _
      // Predicated region
      $region44: #{reverse.5} parent=38 // pred_check
        _
      $region45: #{reverse.5} parent=38 // pred_check_branch
        %105 = sbr.rel target = $region47
      $region46: #{reverse.5} parent=38 // pred_region
        loop: start=0, step=1, limit=1
        $region48: #{reverse.5} parent=46 // loop_pre_header
          _
        $region49: #{reverse.5} parent=46 // loop_header
          %s108 = sphi 0, %s112
          %p109 = scmp.ge.s32.totalorder %s108, 1
          %s113 = sphi [#allocation1], [#allocation1]
          %s114 = sphi %s1, %s1
        $region50: #{reverse.5} parent=46 // loop_header_branch
          %111 = sbr.rel (%p109) target = $region54
        $region51: #{reverse.5} parent=46 // loop_body
          %v115 = vld [vmem:[%s113] sm:$0xff]
          %116 = vst [vmem:[%s114] sm:$0xff] %v115
          %v117 = vld [vmem:[%s113 + $0x8] sm:$0xff]
          %118 = vst [vmem:[%s114 + $0x8] sm:$0xff] %v117
          %v119 = vld [vmem:[%s113 + $0x10] sm:$0xff]
          %120 = vst [vmem:[%s114 + $0x10] sm:$0xff] %v119
          %v121 = vld [vmem:[%s113 + $0x18] sm:$0xff]
          %122 = vst [vmem:[%s114 + $0x18] sm:$0xff] %v121
          %v123 = vld [vmem:[%s113 + $0x20] sm:$0xff]
          %124 = vst [vmem:[%s114 + $0x20] sm:$0xff] %v123
          %v125 = vld [vmem:[%s113 + $0x28] sm:$0xff]
          %126 = vst [vmem:[%s114 + $0x28] sm:$0xff] %v125
          %v127 = vld [vmem:[%s113 + $0x30] sm:$0xff]
          %128 = vst [vmem:[%s114 + $0x30] sm:$0xff] %v127
          %v129 = vld [vmem:[%s113 + $0x38] sm:$0xff]
          %130 = vst [vmem:[%s114 + $0x38] sm:$0xff] %v129
        $region52: #{reverse.5} parent=46 // loop_footer
          %s112 = sadd.s32 1, %s108
        $region53: #{reverse.5} parent=46 // loop_footer_branch
          %107 = sbr.rel target = $region49
        $region54: #{reverse.5} parent=46 // loop_exit
          _
      $region47: #{reverse.5} parent=38 // pred_fallthru
        _
    $region39: #{reverse.5} parent=1 // pred_fallthru
      _
    %159 = vnop

// kernel: custom-call
$region0: #{custom-call}
  %s0 = inlined_call_operand.vmem [shape: f32[2,8,32,32], index: 0, kind: output, shape index: {}]

// kernel: ffc_resnet_block1.8
$region0: #{ffc_resnet_block1.8}
  #allocation0 [shape = 'u32[]', space=smem, size = 0x4, offset = 0x4, fixed_abs, tag = 'smem constant byte address 0x4 - core index']
  #allocation1 [shape = 'u32[144,128]{1,0:T(1,128)}', space=vmem, size = 0x12000, scoped, tag = 'internal scratch']
  %s0 = inlined_call_operand.vmem [shape: f32[4,1024], index: 0, kind: input, shape index: {}]
  %s1 = inlined_call_operand.vmem [shape: f32[8,1024], index: 1, kind: input, shape index: {}]
  %s2 = inlined_call_operand.vmem [shape: f32[4,2], index: 2, kind: input, shape index: {}]
  %s3 = inlined_call_operand.vmem [shape: f32[4,1], index: 3, kind: input, shape index: {}]
  %s4 = inlined_call_operand.vmem [shape: f32[8,1024], index: 4, kind: output, shape index: {}]
  %s5 = sld [smem:[#allocation0]]
  $region26: #{ffc_resnet_block1.8} parent=0
    _
  %s7 = ssub.s32 1, %s5
  %s8 = scalar_select 0, %s7, %s5
  // Predicated region
  $region2: #{ffc_resnet_block1.8} parent=0 // pred_check
    _
  $region3: #{ffc_resnet_block1.8} parent=0 // pred_check_branch
    %10 = sbr.rel (0) target = $region5
  $region4: #{ffc_resnet_block1.8} parent=0 // pred_region
    _
  $region5: #{ffc_resnet_block1.8} parent=0 // pred_fallthru
    _
  // Predicated region
  $region6: #{ffc_resnet_block1.8} parent=0 // pred_check
    _
  $region7: #{ffc_resnet_block1.8} parent=0 // pred_check_branch
    %12 = sbr.rel (0) target = $region9
  $region8: #{ffc_resnet_block1.8} parent=0 // pred_region
    _
  $region9: #{ffc_resnet_block1.8} parent=0 // pred_fallthru
    _
  // Predicated region
  $region10: #{ffc_resnet_block1.8} parent=0 // pred_check
    _
  $region11: #{ffc_resnet_block1.8} parent=0 // pred_check_branch
    %14 = sbr.rel (0) target = $region13
  $region12: #{ffc_resnet_block1.8} parent=0 // pred_region
    _
  $region13: #{ffc_resnet_block1.8} parent=0 // pred_fallthru
    _
  // Predicated region
  $region14: #{ffc_resnet_block1.8} parent=0 // pred_check
    _
  $region15: #{ffc_resnet_block1.8} parent=0 // pred_check_branch
    %16 = sbr.rel (0) target = $region17
  $region16: #{ffc_resnet_block1.8} parent=0 // pred_region
    _
  $region17: #{ffc_resnet_block1.8} parent=0 // pred_fallthru
    _
  %v17 = vld [vmem:[%s0] sm:$0xff]
  %v18 = vld [vmem:[%s0 + $0x8] sm:$0xff]
  %v19 = vld [vmem:[%s0 + $0x10] sm:$0xff]
  %v20 = vld [vmem:[%s0 + $0x18] sm:$0xff]
  %v21 = vld [vmem:[%s1] sm:$0xff]
  %v22 = vld [vmem:[%s1 + $0x8] sm:$0xff]
  %v23 = vld [vmem:[%s1 + $0x10] sm:$0xff]
  %v24 = vld [vmem:[%s1 + $0x18] sm:$0xff]
  %v25 = vld [vmem:[%s1 + $0x20] sm:$0xff]
  %v26 = vld [vmem:[%s1 + $0x28] sm:$0xff]
  %v27 = vld [vmem:[%s1 + $0x30] sm:$0xff]
  %v28 = vld [vmem:[%s1 + $0x38] sm:$0xff]
  %v29 = vld [vmem:[%s2] sm:$0xf]
  %v30 = vld [vmem:[%s3] sm:$0xf]
  %v35 = vlaneseq
  %v36 = vshrl.u32 %v35, 7
  %v37 = vsub.s32 0, %v36
  %v38 = vrot.slane %v17, %v37
  %v39 = vlaneseq
  %v40 = vshrl.u32 %v39, 7
  %v41 = vsub.s32 4, %v40
  %v42 = vrot.slane %v17, %v41
  %v43 = vlaneseq
  %v44 = vshrl.u32 %v43, 7
  %v45 = vsub.s32 0, %v44
  %v46 = vrot.slane %v18, %v45
  %v47 = vlaneseq
  %v48 = vshrl.u32 %v47, 7
  %v49 = vsub.s32 4, %v48
  %v50 = vrot.slane %v18, %v49
  %v51 = vlaneseq
  %v52 = vshrl.u32 %v51, 7
  %v53 = vsub.s32 0, %v52
  %v54 = vrot.slane %v19, %v53
  %v55 = vlaneseq
  %v56 = vshrl.u32 %v55, 7
  %v57 = vsub.s32 4, %v56
  %v58 = vrot.slane %v19, %v57
  %v59 = vlaneseq
  %v60 = vshrl.u32 %v59, 7
  %v61 = vsub.s32 0, %v60
  %v62 = vrot.slane %v20, %v61
  %v63 = vlaneseq
  %v64 = vshrl.u32 %v63, 7
  %v65 = vsub.s32 4, %v64
  %v66 = vrot.slane %v20, %v65
  %v75 = vlaneseq
  %v76 = vshrl.u32 %v75, 7
  %v77 = vsub.s32 0, %v76
  %v78 = vrot.slane %v38, %v77
  %v79 = vlaneseq
  %v80 = vshrl.u32 %v79, 7
  %v81 = vsub.s32 0, %v80
  %v82 = vrot.slane %v42, %v81
  %v83 = vlaneseq
  %v84 = vshrl.u32 %v83, 7
  %v85 = vsub.s32 0, %v84
  %v86 = vrot.slane %v46, %v85
  %v87 = vlaneseq
  %v88 = vshrl.u32 %v87, 7
  %v89 = vsub.s32 0, %v88
  %v90 = vrot.slane %v50, %v89
  %v91 = vlaneseq
  %v92 = vshrl.u32 %v91, 7
  %v93 = vsub.s32 0, %v92
  %v94 = vrot.slane %v54, %v93
  %v95 = vlaneseq
  %v96 = vshrl.u32 %v95, 7
  %v97 = vsub.s32 0, %v96
  %v98 = vrot.slane %v58, %v97
  %v99 = vlaneseq
  %v100 = vshrl.u32 %v99, 7
  %v101 = vsub.s32 0, %v100
  %v102 = vrot.slane %v62, %v101
  %v103 = vlaneseq
  %v104 = vshrl.u32 %v103, 7
  %v105 = vsub.s32 0, %v104
  %v106 = vrot.slane %v66, %v105
  %108 = vset.pattern.permute.xlu0 0
  %109 = vperm.xlu0 %108, %v29
  %v110 = vpop.permute.xlu0 %109
  %v112 = vmul.f32 %v78, %v110
  %v113 = vmul.f32 %v82, %v110
  %v114 = vmul.f32 %v86, %v110
  %v115 = vmul.f32 %v90, %v110
  %v116 = vmul.f32 %v94, %v110
  %v117 = vmul.f32 %v98, %v110
  %v118 = vmul.f32 %v102, %v110
  %v119 = vmul.f32 %v106, %v110
  %v120 = vlaneseq
  %v121 = vshrl.u32 %v120, 7
  %v122 = vsub.s32 1, %v121
  %v123 = vrot.slane %v17, %v122
  %v124 = vlaneseq
  %v125 = vshrl.u32 %v124, 7
  %v126 = vsub.s32 5, %v125
  %v127 = vrot.slane %v17, %v126
  %v128 = vlaneseq
  %v129 = vshrl.u32 %v128, 7
  %v130 = vsub.s32 1, %v129
  %v131 = vrot.slane %v18, %v130
  %v132 = vlaneseq
  %v133 = vshrl.u32 %v132, 7
  %v134 = vsub.s32 5, %v133
  %v135 = vrot.slane %v18, %v134
  %v136 = vlaneseq
  %v137 = vshrl.u32 %v136, 7
  %v138 = vsub.s32 1, %v137
  %v139 = vrot.slane %v19, %v138
  %v140 = vlaneseq
  %v141 = vshrl.u32 %v140, 7
  %v142 = vsub.s32 5, %v141
  %v143 = vrot.slane %v19, %v142
  %v144 = vlaneseq
  %v145 = vshrl.u32 %v144, 7
  %v146 = vsub.s32 1, %v145
  %v147 = vrot.slane %v20, %v146
  %v148 = vlaneseq
  %v149 = vshrl.u32 %v148, 7
  %v150 = vsub.s32 5, %v149
  %v151 = vrot.slane %v20, %v150
  %v160 = vlaneseq
  %v161 = vshrl.u32 %v160, 7
  %v162 = vsub.s32 1, %v161
  %v163 = vrot.slane %v123, %v162
  %v164 = vlaneseq
  %v165 = vshrl.u32 %v164, 7
  %v166 = vsub.s32 1, %v165
  %v167 = vrot.slane %v127, %v166
  %v168 = vlaneseq
  %v169 = vshrl.u32 %v168, 7
  %v170 = vsub.s32 1, %v169
  %v171 = vrot.slane %v131, %v170
  %v172 = vlaneseq
  %v173 = vshrl.u32 %v172, 7
  %v174 = vsub.s32 1, %v173
  %v175 = vrot.slane %v135, %v174
  %v176 = vlaneseq
  %v177 = vshrl.u32 %v176, 7
  %v178 = vsub.s32 1, %v177
  %v179 = vrot.slane %v139, %v178
  %v180 = vlaneseq
  %v181 = vshrl.u32 %v180, 7
  %v182 = vsub.s32 1, %v181
  %v183 = vrot.slane %v143, %v182
  %v184 = vlaneseq
  %v185 = vshrl.u32 %v184, 7
  %v186 = vsub.s32 1, %v185
  %v187 = vrot.slane %v147, %v186
  %v188 = vlaneseq
  %v189 = vshrl.u32 %v188, 7
  %v190 = vsub.s32 1, %v189
  %v191 = vrot.slane %v151, %v190
  %192 = vset.pattern.permute.xlu0 1
  %193 = vperm.xlu0 %192, %v29
  %v194 = vpop.permute.xlu0 %193
  %v196 = vmul.f32 %v163, %v194
  %v197 = vmul.f32 %v167, %v194
  %v198 = vmul.f32 %v171, %v194
  %v199 = vmul.f32 %v175, %v194
  %v200 = vmul.f32 %v179, %v194
  %v201 = vmul.f32 %v183, %v194
  %v202 = vmul.f32 %v187, %v194
  %v203 = vmul.f32 %v191, %v194
  %v204 = vadd.f32 %v112, %v196
  %v205 = vadd.f32 %v113, %v197
  %v206 = vadd.f32 %v114, %v198
  %v207 = vadd.f32 %v115, %v199
  %v208 = vadd.f32 %v116, %v200
  %v209 = vadd.f32 %v117, %v201
  %v210 = vadd.f32 %v118, %v202
  %v211 = vadd.f32 %v119, %v203
  %v212 = vadd.f32 %v204, %v21
  %v213 = vadd.f32 %v205, %v22
  %v214 = vadd.f32 %v206, %v23
  %v215 = vadd.f32 %v207, %v24
  %v216 = vadd.f32 %v208, %v25
  %v217 = vadd.f32 %v209, %v26
  %v218 = vadd.f32 %v210, %v27
  %v219 = vadd.f32 %v211, %v28
  %221 = vset.pattern.permute.xlu0 0
  %222 = vperm.xlu0 %221, %v30
  %v223 = vpop.permute.xlu0 %222
  %v225 = vadd.f32 %v212, %v223
  %v226 = vadd.f32 %v213, %v223
  %v227 = vadd.f32 %v214, %v223
  %v228 = vadd.f32 %v215, %v223
  %v229 = vadd.f32 %v216, %v223
  %v230 = vadd.f32 %v217, %v223
  %v231 = vadd.f32 %v218, %v223
  %v232 = vadd.f32 %v219, %v223
  %v233 = vmax.f32 %v225, 0.0
  %v234 = vmax.f32 %v226, 0.0
  %v235 = vmax.f32 %v227, 0.0
  %v236 = vmax.f32 %v228, 0.0
  %v237 = vmax.f32 %v229, 0.0
  %v238 = vmax.f32 %v230, 0.0
  %v239 = vmax.f32 %v231, 0.0
  %v240 = vmax.f32 %v232, 0.0
  %241 = vst [vmem:[%s4] sm:$0xf] %v233
  %242 = vst [vmem:[%s4 + $0x8] sm:$0xf] %v234
  %243 = vst [vmem:[%s4 + $0x10] sm:$0xf] %v235
  %244 = vst [vmem:[%s4 + $0x18] sm:$0xf] %v236
  %245 = vst [vmem:[%s4 + $0x20] sm:$0xf] %v237
  %246 = vst [vmem:[%s4 + $0x28] sm:$0xf] %v238
  %247 = vst [vmem:[%s4 + $0x30] sm:$0xf] %v239
  %248 = vst [vmem:[%s4 + $0x38] sm:$0xf] %v240
  %v249 = vlaneseq
  %v250 = vshrl.u32 %v249, 7
  %v251 = vsub.s32 2, %v250
  %v252 = vrot.slane %v17, %v251
  %v253 = vlaneseq
  %v254 = vshrl.u32 %v253, 7
  %v255 = vsub.s32 6, %v254
  %v256 = vrot.slane %v17, %v255
  %v257 = vlaneseq
  %v258 = vshrl.u32 %v257, 7
  %v259 = vsub.s32 2, %v258
  %v260 = vrot.slane %v18, %v259
  %v261 = vlaneseq
  %v262 = vshrl.u32 %v261, 7
  %v263 = vsub.s32 6, %v262
  %v264 = vrot.slane %v18, %v263
  %v265 = vlaneseq
  %v266 = vshrl.u32 %v265, 7
  %v267 = vsub.s32 2, %v266
  %v268 = vrot.slane %v19, %v267
  %v269 = vlaneseq
  %v270 = vshrl.u32 %v269, 7
  %v271 = vsub.s32 6, %v270
  %v272 = vrot.slane %v19, %v271
  %v273 = vlaneseq
  %v274 = vshrl.u32 %v273, 7
  %v275 = vsub.s32 2, %v274
  %v276 = vrot.slane %v20, %v275
  %v277 = vlaneseq
  %v278 = vshrl.u32 %v277, 7
  %v279 = vsub.s32 6, %v278
  %v280 = vrot.slane %v20, %v279
  %v289 = vlaneseq
  %v290 = vshrl.u32 %v289, 7
  %v291 = vsub.s32 2, %v290
  %v292 = vrot.slane %v252, %v291
  %v293 = vlaneseq
  %v294 = vshrl.u32 %v293, 7
  %v295 = vsub.s32 2, %v294
  %v296 = vrot.slane %v256, %v295
  %v297 = vlaneseq
  %v298 = vshrl.u32 %v297, 7
  %v299 = vsub.s32 2, %v298
  %v300 = vrot.slane %v260, %v299
  %v301 = vlaneseq
  %v302 = vshrl.u32 %v301, 7
  %v303 = vsub.s32 2, %v302
  %v304 = vrot.slane %v264, %v303
  %v305 = vlaneseq
  %v306 = vshrl.u32 %v305, 7
  %v307 = vsub.s32 2, %v306
  %v308 = vrot.slane %v268, %v307
  %v309 = vlaneseq
  %v310 = vshrl.u32 %v309, 7
  %v311 = vsub.s32 2, %v310
  %v312 = vrot.slane %v272, %v311
  %v313 = vlaneseq
  %v314 = vshrl.u32 %v313, 7
  %v315 = vsub.s32 2, %v314
  %v316 = vrot.slane %v276, %v315
  %v317 = vlaneseq
  %v318 = vshrl.u32 %v317, 7
  %v319 = vsub.s32 2, %v318
  %v320 = vrot.slane %v280, %v319
  %v321 = vmul.f32 %v292, %v110
  %v322 = vmul.f32 %v296, %v110
  %v323 = vmul.f32 %v300, %v110
  %v324 = vmul.f32 %v304, %v110
  %v325 = vmul.f32 %v308, %v110
  %v326 = vmul.f32 %v312, %v110
  %v327 = vmul.f32 %v316, %v110
  %v328 = vmul.f32 %v320, %v110
  %v329 = vlaneseq
  %v330 = vshrl.u32 %v329, 7
  %v331 = vsub.s32 3, %v330
  %v332 = vrot.slane %v17, %v331
  %v333 = vlaneseq
  %v334 = vshrl.u32 %v333, 7
  %v335 = vsub.s32 7, %v334
  %v336 = vrot.slane %v17, %v335
  %v337 = vlaneseq
  %v338 = vshrl.u32 %v337, 7
  %v339 = vsub.s32 3, %v338
  %v340 = vrot.slane %v18, %v339
  %v341 = vlaneseq
  %v342 = vshrl.u32 %v341, 7
  %v343 = vsub.s32 7, %v342
  %v344 = vrot.slane %v18, %v343
  %v345 = vlaneseq
  %v346 = vshrl.u32 %v345, 7
  %v347 = vsub.s32 3, %v346
  %v348 = vrot.slane %v19, %v347
  %v349 = vlaneseq
  %v350 = vshrl.u32 %v349, 7
  %v351 = vsub.s32 7, %v350
  %v352 = vrot.slane %v19, %v351
  %v353 = vlaneseq
  %v354 = vshrl.u32 %v353, 7
  %v355 = vsub.s32 3, %v354
  %v356 = vrot.slane %v20, %v355
  %v357 = vlaneseq
  %v358 = vshrl.u32 %v357, 7
  %v359 = vsub.s32 7, %v358
  %v360 = vrot.slane %v20, %v359
  %v369 = vlaneseq
  %v370 = vshrl.u32 %v369, 7
  %v371 = vsub.s32 3, %v370
  %v372 = vrot.slane %v332, %v371
  %v373 = vlaneseq
  %v374 = vshrl.u32 %v373, 7
  %v375 = vsub.s32 3, %v374
  %v376 = vrot.slane %v336, %v375
  %v377 = vlaneseq
  %v378 = vshrl.u32 %v377, 7
  %v379 = vsub.s32 3, %v378
  %v380 = vrot.slane %v340, %v379
  %v381 = vlaneseq
  %v382 = vshrl.u32 %v381, 7
  %v383 = vsub.s32 3, %v382
  %v384 = vrot.slane %v344, %v383
  %v385 = vlaneseq
  %v386 = vshrl.u32 %v385, 7
  %v387 = vsub.s32 3, %v386
  %v388 = vrot.slane %v348, %v387
  %v389 = vlaneseq
  %v390 = vshrl.u32 %v389, 7
  %v391 = vsub.s32 3, %v390
  %v392 = vrot.slane %v352, %v391
  %v393 = vlaneseq
  %v394 = vshrl.u32 %v393, 7
  %v395 = vsub.s32 3, %v394
  %v396 = vrot.slane %v356, %v395
  %v397 = vlaneseq
  %v398 = vshrl.u32 %v397, 7
  %v399 = vsub.s32 3, %v398
  %v400 = vrot.slane %v360, %v399
  %v401 = vmul.f32 %v372, %v194
  %v402 = vmul.f32 %v376, %v194
  %v403 = vmul.f32 %v380, %v194
  %v404 = vmul.f32 %v384, %v194
  %v405 = vmul.f32 %v388, %v194
  %v406 = vmul.f32 %v392, %v194
  %v407 = vmul.f32 %v396, %v194
  %v408 = vmul.f32 %v400, %v194
  %v409 = vadd.f32 %v321, %v401
  %v410 = vadd.f32 %v322, %v402
  %v411 = vadd.f32 %v323, %v403
  %v412 = vadd.f32 %v324, %v404
  %v413 = vadd.f32 %v325, %v405
  %v414 = vadd.f32 %v326, %v406
  %v415 = vadd.f32 %v327, %v407
  %v416 = vadd.f32 %v328, %v408
  %v425 = vrot.slane %v21, 4
  %v426 = vrot.slane %v22, 4
  %v427 = vrot.slane %v23, 4
  %v428 = vrot.slane %v24, 4
  %v429 = vrot.slane %v25, 4
  %v430 = vrot.slane %v26, 4
  %v431 = vrot.slane %v27, 4
  %v432 = vrot.slane %v28, 4
  %v441 = vadd.f32 %v409, %v425
  %v442 = vadd.f32 %v410, %v426
  %v443 = vadd.f32 %v411, %v427
  %v444 = vadd.f32 %v412, %v428
  %v445 = vadd.f32 %v413, %v429
  %v446 = vadd.f32 %v414, %v430
  %v447 = vadd.f32 %v415, %v431
  %v448 = vadd.f32 %v416, %v432
  %v449 = vadd.f32 %v441, %v223
  %v450 = vadd.f32 %v442, %v223
  %v451 = vadd.f32 %v443, %v223
  %v452 = vadd.f32 %v444, %v223
  %v453 = vadd.f32 %v445, %v223
  %v454 = vadd.f32 %v446, %v223
  %v455 = vadd.f32 %v447, %v223
  %v456 = vadd.f32 %v448, %v223
  %v457 = vmax.f32 %v449, 0.0
  %v458 = vmax.f32 %v450, 0.0
  %v459 = vmax.f32 %v451, 0.0
  %v460 = vmax.f32 %v452, 0.0
  %v461 = vmax.f32 %v453, 0.0
  %v462 = vmax.f32 %v454, 0.0
  %v463 = vmax.f32 %v455, 0.0
  %v464 = vmax.f32 %v456, 0.0
  %v473 = vrot.slane %v457, 4
  %v474 = vrot.slane %v458, 4
  %v475 = vrot.slane %v459, 4
  %v476 = vrot.slane %v460, 4
  %v477 = vrot.slane %v461, 4
  %v478 = vrot.slane %v462, 4
  %v479 = vrot.slane %v463, 4
  %v480 = vrot.slane %v464, 4
  %489 = vst [vmem:[%s4] sm:$0xf0] %v473
  %490 = vst [vmem:[%s4 + $0x8] sm:$0xf0] %v474
  %491 = vst [vmem:[%s4 + $0x10] sm:$0xf0] %v475
  %492 = vst [vmem:[%s4 + $0x18] sm:$0xf0] %v476
  %493 = vst [vmem:[%s4 + $0x20] sm:$0xf0] %v477
  %494 = vst [vmem:[%s4 + $0x28] sm:$0xf0] %v478
  %495 = vst [vmem:[%s4 + $0x30] sm:$0xf0] %v479
  %496 = vst [vmem:[%s4 + $0x38] sm:$0xf0] %v480
  // Predicated region
  $region18: #{ffc_resnet_block1.8} parent=0 // pred_check
    _
  $region19: #{ffc_resnet_block1.8} parent=0 // pred_check_branch
    %498 = sbr.rel (0) target = $region21
  $region20: #{ffc_resnet_block1.8} parent=0 // pred_region
    _
  $region21: #{ffc_resnet_block1.8} parent=0 // pred_fallthru
    _
  // Predicated region
  $region22: #{ffc_resnet_block1.8} parent=0 // pred_check
    _
  $region23: #{ffc_resnet_block1.8} parent=0 // pred_check_branch
    %500 = sbr.rel (0) target = $region25
  $region24: #{ffc_resnet_block1.8} parent=0 // pred_region
    _
  $region25: #{ffc_resnet_block1.8} parent=0 // pred_fallthru
    _

</llo_original>
